<compile_context>
chip_gen: v7x
topology: tpu7x:2x2x1
jax: 0.10.0
libtpu: 0.0.40
codegen_flags: <defaults>
</compile_context>

<pallas_src>
import functools
import math

import jax
import jax.numpy as jnp
from jax.experimental import pallas as pl
from jax.experimental.pallas import tpu as pltpu


# --------------------------------------------------------------------------
# Kernel 1: fused QKV projection -> chunked multi-head attention ->
#           output projection -> residual add -> LayerNorm.
#           One grid step per batch element.
# --------------------------------------------------------------------------
def _attn_block_kernel(xq_ref, xkv_ref, w_ref, b_ref, wo_ref, bo_ref,
                       g_ref, beta_ref, o_ref, *,
                       h, q_dim, v_dim, n_chunk, chunk_size,
                       causal, fuse_qkv, scale, eps):
    x = xq_ref[0]                       # (K, D) f32 -- also the residual
    C = chunk_size
    hq = h * q_dim

    # ---- fused projections (bf16 operands on the MXU, f32 accumulation) ----
    if fuse_qkv:
        # self-attention: one matmul against the concatenated [Wq|Wk|Wv]
        qkv = jnp.dot(x.astype(jnp.bfloat16), w_ref[...],
                      preferred_element_type=jnp.float32) + b_ref[...]
        q = qkv[:, :hq]
        k = qkv[:, hq:2 * hq]
        v = qkv[:, 2 * hq:]
    else:
        # cross-attention: Q from decoder state, fused [Wk|Wv] from memory
        xkv = xkv_ref[0]
        q = jnp.dot(x.astype(jnp.bfloat16), w_ref[:, :hq],
                    preferred_element_type=jnp.float32) + b_ref[:, :hq]
        kv = jnp.dot(xkv.astype(jnp.bfloat16), w_ref[:, hq:],
                     preferred_element_type=jnp.float32) + b_ref[:, hq:]
        k = kv[:, :hq]
        v = kv[:, hq:]

    # Fold the 1/sqrt(chunk_size) scale (MultiHeadAttentionChunk convention)
    # into the small Q tensor instead of the (C, C) score matrix.
    q = q * scale

    # Per-chunk causal mask generated in-kernel (no mask operand / DMA).
    # Large finite negative instead of -inf so a fully-masked row can't NaN.
    if causal:
        row = jax.lax.broadcasted_iota(jnp.int32, (C, C), 0)
        col = jax.lax.broadcasted_iota(jnp.int32, (C, C), 1)
        neg = jnp.where(col > row, -1e30, 0.0).astype(jnp.float32)
    else:
        neg = None

    # ---- chunked attention: statically unrolled over heads, each einsum
    #      batches all n_chunk problems of that head (one batch dim) ----------
    head_outs = []
    for hh in range(h):
        qh = q[:, hh * q_dim:(hh + 1) * q_dim].reshape(n_chunk, C, q_dim)
        kh = k[:, hh * q_dim:(hh + 1) * q_dim].reshape(n_chunk, C, q_dim)
        vh = v[:, hh * v_dim:(hh + 1) * v_dim].reshape(n_chunk, C, v_dim)

        s = jnp.einsum('ncd,nkd->nck',
                       qh.astype(jnp.bfloat16), kh.astype(jnp.bfloat16),
                       preferred_element_type=jnp.float32)
        if neg is not None:
            s = s + neg[None, :, :]
        s = s - jnp.max(s, axis=-1, keepdims=True)
        p = jnp.exp(s)
        p = p * pl.reciprocal(jnp.sum(p, axis=-1, keepdims=True), approx=True)

        ctx = jnp.einsum('nck,nkv->ncv',
                         p.astype(jnp.bfloat16), vh.astype(jnp.bfloat16),
                         preferred_element_type=jnp.float32)
        # rows nc*C + c == sequence position; matches torch chunk/cat ordering
        head_outs.append(ctx.reshape(n_chunk * C, v_dim))

    attn = jnp.concatenate(head_outs, axis=-1)        # (K, h*v_dim)

    # ---- output projection + residual add + LayerNorm epilogue (f32) -------
    y = jnp.dot(attn.astype(jnp.bfloat16), wo_ref[...],
                preferred_element_type=jnp.float32) + bo_ref[...]
    hres = y + x
    mu = jnp.mean(hres, axis=-1, keepdims=True)
    cen = hres - mu
    var = jnp.mean(cen * cen, axis=-1, keepdims=True)
    o_ref[0] = cen * jax.lax.rsqrt(var + eps) * g_ref[...] + beta_ref[...]


# --------------------------------------------------------------------------
# Kernel 2: fused position-wise FFN -> residual add -> LayerNorm,
#           row-tiled over (B*K) with W1/W2 resident in VMEM.
# --------------------------------------------------------------------------
def _ffn_ln_kernel(x_ref, w1_ref, b1_ref, w2_ref, b2_ref, g_ref, beta_ref,
                   o_ref, *, eps):
    x = x_ref[...]                                     # (tile_m, D), residual
    h1 = jnp.dot(x.astype(jnp.bfloat16), w1_ref[...],
                 preferred_element_type=jnp.float32) + b1_ref[...]
    h1 = jnp.maximum(h1, 0.0)                          # ReLU
    y = jnp.dot(h1.astype(jnp.bfloat16), w2_ref[...],
                preferred_element_type=jnp.float32) + b2_ref[...]
    hres = y + x
    mu = jnp.mean(hres, axis=-1, keepdims=True)
    cen = hres - mu
    var = jnp.mean(cen * cen, axis=-1, keepdims=True)
    o_ref[...] = cen * jax.lax.rsqrt(var + eps) * g_ref[...] + beta_ref[...]


# ------------------------------ wrappers -----------------------------------

def attention_block(xq, xkv, p, gamma, beta, *, h, q_dim, v_dim, chunk_size,
                    self_attention, eps=1e-5):
    """MultiHeadAttentionChunk + residual + LayerNorm, fused in one kernel."""
    B, K, D = xq.shape
    # TODO(synk): MultiHeadAttentionChunk derives n_chunk from the query length
    # and chunks K/V with it too; we require memory seq-len == query seq-len.
    assert xkv.shape[1] == K, "chunked cross-attention needs matching seq len"
    assert K % chunk_size == 0
    n_chunk = K // chunk_size
    hq, hv = h * q_dim, h * v_dim

    # Fused projection weight [Wq|Wk|Wv] (one DMA, lane-dense output), bf16.
    w_all = jnp.concatenate([p["Wq"], p["Wk"], p["Wv"]], axis=1).astype(jnp.bfloat16)
    b_all = jnp.concatenate([p["bq"], p["bk"], p["bv"]]).reshape(1, 2 * hq + hv)
    wo = p["Wo"].astype(jnp.bfloat16)
    bo = p["bo"].reshape(1, D)

    kernel = functools.partial(
        _attn_block_kernel, h=h, q_dim=q_dim, v_dim=v_dim, n_chunk=n_chunk,
        chunk_size=chunk_size, causal=self_attention, fuse_qkv=self_attention,
        scale=1.0 / math.sqrt(chunk_size), eps=eps)

    return pl.pallas_call(
        kernel,
        grid=(B,),
        out_shape=jax.ShapeDtypeStruct((B, K, D), jnp.float32),
        in_specs=[
            pl.BlockSpec((1, K, D), lambda b: (b, 0, 0)),          # x (query/residual)
            pl.BlockSpec((1, K, D), lambda b: (b, 0, 0)),          # kv source
            pl.BlockSpec((D, 2 * hq + hv), lambda b: (0, 0)),      # [Wq|Wk|Wv] bf16
            pl.BlockSpec((1, 2 * hq + hv), lambda b: (0, 0)),      # [bq|bk|bv]
            pl.BlockSpec((hv, D), lambda b: (0, 0)),               # Wo bf16
            pl.BlockSpec((1, D), lambda b: (0, 0)),                # bo
            pl.BlockSpec((1, D), lambda b: (0, 0)),                # LN gamma
            pl.BlockSpec((1, D), lambda b: (0, 0)),                # LN beta
        ],
        out_specs=pl.BlockSpec((1, K, D), lambda b: (b, 0, 0)),
        compiler_params=pltpu.CompilerParams(dimension_semantics=("parallel",)),
    )(xq, xkv, w_all, b_all, wo, bo, gamma.reshape(1, D), beta.reshape(1, D))


def _row_tile(M, target=256):
    """Largest row tile <= target that divides M and is a multiple of 8
    (falls back to the whole M)."""
    if M <= target or M % 8 != 0:
        return M
    t = target - target % 8
    while t >= 8 and M % t != 0:
        t -= 8
    return t if t >= 8 else M


def feed_forward_block(x, p, gamma, beta, *, tile_m=None, eps=1e-5):
    """PositionwiseFeedForward + residual + LayerNorm, row-tiled."""
    B, K, D = x.shape
    M = B * K
    d_ff = p["W1"].shape[1]
    if tile_m is None:
        # NOTE: on v7x (64 MiB VMEM) a smaller target than on v5e/v6e is safer.
        tile_m = _row_tile(M, target=256)
    assert M % tile_m == 0

    w1 = p["W1"].astype(jnp.bfloat16)
    w2 = p["W2"].astype(jnp.bfloat16)
    out = pl.pallas_call(
        functools.partial(_ffn_ln_kernel, eps=eps),
        grid=(M // tile_m,),
        out_shape=jax.ShapeDtypeStruct((M, D), jnp.float32),
        in_specs=[
            pl.BlockSpec((tile_m, D), lambda i: (i, 0)),           # x / residual
            pl.BlockSpec((D, d_ff), lambda i: (0, 0)),             # W1 bf16 (resident)
            pl.BlockSpec((1, d_ff), lambda i: (0, 0)),             # b1
            pl.BlockSpec((d_ff, D), lambda i: (0, 0)),             # W2 bf16 (resident)
            pl.BlockSpec((1, D), lambda i: (0, 0)),                # b2
            pl.BlockSpec((1, D), lambda i: (0, 0)),                # LN gamma
            pl.BlockSpec((1, D), lambda i: (0, 0)),                # LN beta
        ],
        out_specs=pl.BlockSpec((tile_m, D), lambda i: (i, 0)),
        compiler_params=pltpu.CompilerParams(dimension_semantics=("parallel",)),
    )(x.reshape(M, D), w1, p["b1"].reshape(1, d_ff), w2, p["b2"].reshape(1, D),
      gamma.reshape(1, D), beta.reshape(1, D))
    return out.reshape(B, K, D)


def decoder_forward(x, memory, params, *, h, q_dim, v_dim, chunk_size,
                    ffn_tile_m=None):
    # self-attention ('subsequent' mask) -> dropout(identity) -> add & LN1
    x = attention_block(x, x, params["self_attn"],
                        params["ln1_g"], params["ln1_b"],
                        h=h, q_dim=q_dim, v_dim=v_dim, chunk_size=chunk_size,
                        self_attention=True)
    # encoder-decoder attention -> dropout(identity) -> add & LN2
    x = attention_block(x, memory, params["cross_attn"],
                        params["ln2_g"], params["ln2_b"],
                        h=h, q_dim=q_dim, v_dim=v_dim, chunk_size=chunk_size,
                        self_attention=False)
    # position-wise FFN -> dropout(identity) -> add & LN3
    x = feed_forward_block(x, params["ffn"], params["ln3_g"], params["ln3_b"],
                           tile_m=ffn_tile_m)
    return x


# ------------------------------ param init ----------------------------------

def init_params(key, d_model, q, v, h, d_ff):
    def lin(k, din, dout):
        kw, kb = jax.random.split(k)
        w = jax.random.normal(kw, (din, dout), jnp.float32) / math.sqrt(din)
        b = 0.01 * jax.random.normal(kb, (dout,), jnp.float32)
        return w, b

    ks = jax.random.split(key, 10)

    def mha_params(k4):
        k1, k2, k3, k4_ = jax.random.split(k4, 4)
        Wq, bq = lin(k1, d_model, q * h)
        Wk, bk = lin(k2, d_model, q * h)
        Wv, bv = lin(k3, d_model, v * h)
        Wo, bo = lin(k4_, h * v, d_model)
        return dict(Wq=Wq, bq=bq, Wk=Wk, bk=bk, Wv=Wv, bv=bv, Wo=Wo, bo=bo)

    W1, b1 = lin(ks[2], d_model, d_ff)
    W2, b2 = lin(ks[3], d_ff, d_model)

    ones = jnp.ones((d_model,), jnp.float32)
    zeros = jnp.zeros((d_model,), jnp.float32)
    return dict(
        self_attn=mha_params(ks[0]),
        cross_attn=mha_params(ks[1]),
        ffn=dict(W1=W1, b1=b1, W2=W2, b2=b2),
        ln1_g=ones, ln1_b=zeros,
        ln2_g=ones, ln2_b=zeros,
        ln3_g=ones, ln3_b=zeros,
    )


# -------------------------------- main ---------------------------------------

if __name__ == "__main__":
    # Small, self-consistent shapes. chunk_size in the PyTorch module defaults
    # to 168 (requiring K % 168 == 0); we keep the same chunked semantics with
    # chunk_size=4 so K=8 gives n_chunk=2 and actually exercises chunking.
    B, K, d_model = 2, 8, 32
    q_dim, v_dim, h = 8, 8, 4
    chunk_size = 4
    d_ff = 2048                      # PositionwiseFeedForward default

    key = jax.random.PRNGKey(0)
    kx, km, kp = jax.random.split(key, 3)
    x = jax.random.normal(kx, (B, K, d_model), jnp.float32)
    memory = jax.random.normal(km, (B, K, d_model), jnp.float32)
    params = init_params(kp, d_model, q_dim, v_dim, h, d_ff)

    fwd = jax.jit(functools.partial(
        decoder_forward, h=h, q_dim=q_dim, v_dim=v_dim,
        chunk_size=chunk_size, ffn_tile_m=8))   # ffn_tile_m=8 -> exercises row tiling
    out = fwd(x, memory, params)
    jax.block_until_ready(out)
    assert out.shape == (B, K, d_model) and out.dtype == jnp.float32
    assert bool(jnp.all(jnp.isfinite(out)))
    print("KERNEL_OK")
</pallas_src>

<mosaic_0001>
module attributes {stable_mosaic.version = 11 : i64} {
  func.func @_attn_block_kernel(%arg0: i32, %arg1: memref<1x8x32xf32, #tpu.memory_space<vmem>>, %arg2: memref<1x8x32xf32, #tpu.memory_space<vmem>>, %arg3: memref<32x96xbf16, #tpu.memory_space<vmem>>, %arg4: memref<1x96xf32, #tpu.memory_space<vmem>>, %arg5: memref<32x32xbf16, #tpu.memory_space<vmem>>, %arg6: memref<1x32xf32, #tpu.memory_space<vmem>>, %arg7: memref<1x32xf32, #tpu.memory_space<vmem>>, %arg8: memref<1x32xf32, #tpu.memory_space<vmem>>, %arg9: memref<1x8x32xf32, #tpu.memory_space<vmem>>) attributes {dimension_semantics = [#tpu.dimension_semantics<parallel>], iteration_bounds = array<i64: 2>, scalar_prefetch = 0 : i64, scratch_operands = 0 : i64, tpu.core_type = #tpu.core_type<tc>, window_params = [{transform_indices = @transform_0, window_bounds = array<i64: 1, 8, 32>}, {transform_indices = @transform_1, window_bounds = array<i64: 1, 8, 32>}, {pipeline_mode = #tpu.pipeline_mode<synchronous>, transform_indices = @transform_2, window_bounds = array<i64: 32, 96>}, {pipeline_mode = #tpu.pipeline_mode<synchronous>, transform_indices = @transform_3, window_bounds = array<i64: 1, 96>}, {pipeline_mode = #tpu.pipeline_mode<synchronous>, transform_indices = @transform_4, window_bounds = array<i64: 32, 32>}, {pipeline_mode = #tpu.pipeline_mode<synchronous>, transform_indices = @transform_5, window_bounds = array<i64: 1, 32>}, {pipeline_mode = #tpu.pipeline_mode<synchronous>, transform_indices = @transform_6, window_bounds = array<i64: 1, 32>}, {pipeline_mode = #tpu.pipeline_mode<synchronous>, transform_indices = @transform_7, window_bounds = array<i64: 1, 32>}, {transform_indices = @transform_8, window_bounds = array<i64: 1, 8, 32>}]} {
    %c0 = arith.constant 0 : index
    %c0_0 = arith.constant 0 : index
    %c0_1 = arith.constant 0 : index
    %0 = vector.load %arg1[%c0, %c0_0, %c0_1] : memref<1x8x32xf32, #tpu.memory_space<vmem>>, vector<1x8x32xf32>
    %1 = vector.shape_cast %0 : vector<1x8x32xf32> to vector<8x32xf32>
    %2 = arith.truncf %1 : vector<8x32xf32> to vector<8x32xbf16>
    %c0_2 = arith.constant 0 : index
    %c0_3 = arith.constant 0 : index
    %3 = vector.load %arg3[%c0_2, %c0_3] : memref<32x96xbf16, #tpu.memory_space<vmem>>, vector<32x96xbf16>
    %cst = arith.constant dense<0.000000e+00> : vector<8x96xf32>
    %4 = tpu.matmul %2, %3, %cst {dimension_numbers = #tpu.dot_dimension_numbers<[1], [0], [0], [1], [0, 0, 1, 1], [], []>} : vector<8x32xbf16>, vector<32x96xbf16>, vector<8x96xf32> -> vector<8x96xf32>
    %c0_4 = arith.constant 0 : index
    %c0_5 = arith.constant 0 : index
    %5 = vector.load %arg4[%c0_4, %c0_5] : memref<1x96xf32, #tpu.memory_space<vmem>>, vector<1x96xf32>
    %6 = vector.broadcast %5 : vector<1x96xf32> to vector<8x96xf32>
    %7 = arith.addf %4, %6 : vector<8x96xf32>
    %8 = vector.extract_strided_slice %7 {offsets = [0, 0], sizes = [8, 32], strides = [1, 1]} : vector<8x96xf32> to vector<8x32xf32>
    %9 = vector.extract_strided_slice %7 {offsets = [0, 32], sizes = [8, 32], strides = [1, 1]} : vector<8x96xf32> to vector<8x32xf32>
    %10 = vector.extract_strided_slice %7 {offsets = [0, 64], sizes = [8, 32], strides = [1, 1]} : vector<8x96xf32> to vector<8x32xf32>
    %cst_6 = arith.constant 5.000000e-01 : f32
    %11 = vector.broadcast %cst_6 : f32 to vector<8x32xf32>
    %12 = arith.mulf %8, %11 : vector<8x32xf32>
    %13 = tpu.iota {dimensions = array<i32: 0>} : vector<4x4xi32>
    %14 = tpu.iota {dimensions = array<i32: 1>} : vector<4x4xi32>
    %15 = arith.cmpi sgt, %14, %13 : vector<4x4xi32>
    %cst_7 = arith.constant -1.000000e+30 : f32
    %cst_8 = arith.constant 0.000000e+00 : f32
    %16 = vector.broadcast %cst_7 : f32 to vector<4x4xf32>
    %17 = vector.broadcast %cst_8 : f32 to vector<4x4xf32>
    %18 = arith.select %15, %16, %17 : vector<4x4xi1>, vector<4x4xf32>
    %19 = vector.extract_strided_slice %12 {offsets = [0, 0], sizes = [8, 8], strides = [1, 1]} : vector<8x32xf32> to vector<8x8xf32>
    %20 = vector.shape_cast %19 : vector<8x8xf32> to vector<2x4x8xf32>
    %21 = vector.extract_strided_slice %9 {offsets = [0, 0], sizes = [8, 8], strides = [1, 1]} : vector<8x32xf32> to vector<8x8xf32>
    %22 = vector.shape_cast %21 : vector<8x8xf32> to vector<2x4x8xf32>
    %23 = vector.extract_strided_slice %10 {offsets = [0, 0], sizes = [8, 8], strides = [1, 1]} : vector<8x32xf32> to vector<8x8xf32>
    %24 = vector.shape_cast %23 : vector<8x8xf32> to vector<2x4x8xf32>
    %25 = arith.truncf %20 : vector<2x4x8xf32> to vector<2x4x8xbf16>
    %26 = arith.truncf %22 : vector<2x4x8xf32> to vector<2x4x8xbf16>
    "tpu.trace_start"() <{level = 10 : i32, message = "ncd,nkd->nck"}> : () -> ()
    %cst_9 = arith.constant dense<0.000000e+00> : vector<2x4x4xf32>
    %27 = tpu.matmul %25, %26, %cst_9 {dimension_numbers = #tpu.dot_dimension_numbers<[2], [2], [1], [1], [0, 0, 0, 1, 1, 1], [0], [0]>} : vector<2x4x8xbf16>, vector<2x4x8xbf16>, vector<2x4x4xf32> -> vector<2x4x4xf32>
    "tpu.trace_stop"() : () -> ()
    %28 = vector.shape_cast %18 : vector<4x4xf32> to vector<1x4x4xf32>
    %29 = vector.broadcast %28 : vector<1x4x4xf32> to vector<2x4x4xf32>
    %30 = arith.addf %27, %29 : vector<2x4x4xf32>
    %cst_10 = arith.constant dense<0xFF800000> : vector<2x4xf32>
    %31 = vector.multi_reduction <maximumf>, %30, %cst_10 [2] : vector<2x4x4xf32> to vector<2x4xf32>
    %32 = vector.shape_cast %31 : vector<2x4xf32> to vector<2x4x1xf32>
    %33 = vector.broadcast %32 : vector<2x4x1xf32> to vector<2x4x4xf32>
    %34 = arith.subf %30, %33 : vector<2x4x4xf32>
    %35 = math.exp %34 : vector<2x4x4xf32>
    %cst_11 = arith.constant dense<0.000000e+00> : vector<2x4xf32>
    %36 = vector.multi_reduction <add>, %35, %cst_11 [2] : vector<2x4x4xf32> to vector<2x4xf32>
    %37 = vector.shape_cast %36 : vector<2x4xf32> to vector<2x4x1xf32>
    %38 = tpu.reciprocal %37 {approx = true} : vector<2x4x1xf32> -> vector<2x4x1xf32>
    %39 = vector.broadcast %38 : vector<2x4x1xf32> to vector<2x4x4xf32>
    %40 = arith.mulf %35, %39 : vector<2x4x4xf32>
    %41 = arith.truncf %40 : vector<2x4x4xf32> to vector<2x4x4xbf16>
    %42 = arith.truncf %24 : vector<2x4x8xf32> to vector<2x4x8xbf16>
    "tpu.trace_start"() <{level = 10 : i32, message = "nck,nkv->ncv"}> : () -> ()
    %cst_12 = arith.constant dense<0.000000e+00> : vector<2x4x8xf32>
    %43 = tpu.matmul %41, %42, %cst_12 {dimension_numbers = #tpu.dot_dimension_numbers<[2], [1], [1], [2], [0, 0, 0, 1, 1, 2], [0], [0]>} : vector<2x4x4xbf16>, vector<2x4x8xbf16>, vector<2x4x8xf32> -> vector<2x4x8xf32>
    "tpu.trace_stop"() : () -> ()
    %44 = vector.shape_cast %43 : vector<2x4x8xf32> to vector<8x8xf32>
    %45 = vector.extract_strided_slice %12 {offsets = [0, 8], sizes = [8, 8], strides = [1, 1]} : vector<8x32xf32> to vector<8x8xf32>
    %46 = vector.shape_cast %45 : vector<8x8xf32> to vector<2x4x8xf32>
    %47 = vector.extract_strided_slice %9 {offsets = [0, 8], sizes = [8, 8], strides = [1, 1]} : vector<8x32xf32> to vector<8x8xf32>
    %48 = vector.shape_cast %47 : vector<8x8xf32> to vector<2x4x8xf32>
    %49 = vector.extract_strided_slice %10 {offsets = [0, 8], sizes = [8, 8], strides = [1, 1]} : vector<8x32xf32> to vector<8x8xf32>
    %50 = vector.shape_cast %49 : vector<8x8xf32> to vector<2x4x8xf32>
    %51 = arith.truncf %46 : vector<2x4x8xf32> to vector<2x4x8xbf16>
    %52 = arith.truncf %48 : vector<2x4x8xf32> to vector<2x4x8xbf16>
    "tpu.trace_start"() <{level = 10 : i32, message = "ncd,nkd->nck"}> : () -> ()
    %cst_13 = arith.constant dense<0.000000e+00> : vector<2x4x4xf32>
    %53 = tpu.matmul %51, %52, %cst_13 {dimension_numbers = #tpu.dot_dimension_numbers<[2], [2], [1], [1], [0, 0, 0, 1, 1, 1], [0], [0]>} : vector<2x4x8xbf16>, vector<2x4x8xbf16>, vector<2x4x4xf32> -> vector<2x4x4xf32>
    "tpu.trace_stop"() : () -> ()
    %54 = vector.shape_cast %18 : vector<4x4xf32> to vector<1x4x4xf32>
    %55 = vector.broadcast %54 : vector<1x4x4xf32> to vector<2x4x4xf32>
    %56 = arith.addf %53, %55 : vector<2x4x4xf32>
    %cst_14 = arith.constant dense<0xFF800000> : vector<2x4xf32>
    %57 = vector.multi_reduction <maximumf>, %56, %cst_14 [2] : vector<2x4x4xf32> to vector<2x4xf32>
    %58 = vector.shape_cast %57 : vector<2x4xf32> to vector<2x4x1xf32>
    %59 = vector.broadcast %58 : vector<2x4x1xf32> to vector<2x4x4xf32>
    %60 = arith.subf %56, %59 : vector<2x4x4xf32>
    %61 = math.exp %60 : vector<2x4x4xf32>
    %cst_15 = arith.constant dense<0.000000e+00> : vector<2x4xf32>
    %62 = vector.multi_reduction <add>, %61, %cst_15 [2] : vector<2x4x4xf32> to vector<2x4xf32>
    %63 = vector.shape_cast %62 : vector<2x4xf32> to vector<2x4x1xf32>
    %64 = tpu.reciprocal %63 {approx = true} : vector<2x4x1xf32> -> vector<2x4x1xf32>
    %65 = vector.broadcast %64 : vector<2x4x1xf32> to vector<2x4x4xf32>
    %66 = arith.mulf %61, %65 : vector<2x4x4xf32>
    %67 = arith.truncf %66 : vector<2x4x4xf32> to vector<2x4x4xbf16>
    %68 = arith.truncf %50 : vector<2x4x8xf32> to vector<2x4x8xbf16>
    "tpu.trace_start"() <{level = 10 : i32, message = "nck,nkv->ncv"}> : () -> ()
    %cst_16 = arith.constant dense<0.000000e+00> : vector<2x4x8xf32>
    %69 = tpu.matmul %67, %68, %cst_16 {dimension_numbers = #tpu.dot_dimension_numbers<[2], [1], [1], [2], [0, 0, 0, 1, 1, 2], [0], [0]>} : vector<2x4x4xbf16>, vector<2x4x8xbf16>, vector<2x4x8xf32> -> vector<2x4x8xf32>
    "tpu.trace_stop"() : () -> ()
    %70 = vector.shape_cast %69 : vector<2x4x8xf32> to vector<8x8xf32>
    %71 = vector.extract_strided_slice %12 {offsets = [0, 16], sizes = [8, 8], strides = [1, 1]} : vector<8x32xf32> to vector<8x8xf32>
    %72 = vector.shape_cast %71 : vector<8x8xf32> to vector<2x4x8xf32>
    %73 = vector.extract_strided_slice %9 {offsets = [0, 16], sizes = [8, 8], strides = [1, 1]} : vector<8x32xf32> to vector<8x8xf32>
    %74 = vector.shape_cast %73 : vector<8x8xf32> to vector<2x4x8xf32>
    %75 = vector.extract_strided_slice %10 {offsets = [0, 16], sizes = [8, 8], strides = [1, 1]} : vector<8x32xf32> to vector<8x8xf32>
    %76 = vector.shape_cast %75 : vector<8x8xf32> to vector<2x4x8xf32>
    %77 = arith.truncf %72 : vector<2x4x8xf32> to vector<2x4x8xbf16>
    %78 = arith.truncf %74 : vector<2x4x8xf32> to vector<2x4x8xbf16>
    "tpu.trace_start"() <{level = 10 : i32, message = "ncd,nkd->nck"}> : () -> ()
    %cst_17 = arith.constant dense<0.000000e+00> : vector<2x4x4xf32>
    %79 = tpu.matmul %77, %78, %cst_17 {dimension_numbers = #tpu.dot_dimension_numbers<[2], [2], [1], [1], [0, 0, 0, 1, 1, 1], [0], [0]>} : vector<2x4x8xbf16>, vector<2x4x8xbf16>, vector<2x4x4xf32> -> vector<2x4x4xf32>
    "tpu.trace_stop"() : () -> ()
    %80 = vector.shape_cast %18 : vector<4x4xf32> to vector<1x4x4xf32>
    %81 = vector.broadcast %80 : vector<1x4x4xf32> to vector<2x4x4xf32>
    %82 = arith.addf %79, %81 : vector<2x4x4xf32>
    %cst_18 = arith.constant dense<0xFF800000> : vector<2x4xf32>
    %83 = vector.multi_reduction <maximumf>, %82, %cst_18 [2] : vector<2x4x4xf32> to vector<2x4xf32>
    %84 = vector.shape_cast %83 : vector<2x4xf32> to vector<2x4x1xf32>
    %85 = vector.broadcast %84 : vector<2x4x1xf32> to vector<2x4x4xf32>
    %86 = arith.subf %82, %85 : vector<2x4x4xf32>
    %87 = math.exp %86 : vector<2x4x4xf32>
    %cst_19 = arith.constant dense<0.000000e+00> : vector<2x4xf32>
    %88 = vector.multi_reduction <add>, %87, %cst_19 [2] : vector<2x4x4xf32> to vector<2x4xf32>
    %89 = vector.shape_cast %88 : vector<2x4xf32> to vector<2x4x1xf32>
    %90 = tpu.reciprocal %89 {approx = true} : vector<2x4x1xf32> -> vector<2x4x1xf32>
    %91 = vector.broadcast %90 : vector<2x4x1xf32> to vector<2x4x4xf32>
    %92 = arith.mulf %87, %91 : vector<2x4x4xf32>
    %93 = arith.truncf %92 : vector<2x4x4xf32> to vector<2x4x4xbf16>
    %94 = arith.truncf %76 : vector<2x4x8xf32> to vector<2x4x8xbf16>
    "tpu.trace_start"() <{level = 10 : i32, message = "nck,nkv->ncv"}> : () -> ()
    %cst_20 = arith.constant dense<0.000000e+00> : vector<2x4x8xf32>
    %95 = tpu.matmul %93, %94, %cst_20 {dimension_numbers = #tpu.dot_dimension_numbers<[2], [1], [1], [2], [0, 0, 0, 1, 1, 2], [0], [0]>} : vector<2x4x4xbf16>, vector<2x4x8xbf16>, vector<2x4x8xf32> -> vector<2x4x8xf32>
    "tpu.trace_stop"() : () -> ()
    %96 = vector.shape_cast %95 : vector<2x4x8xf32> to vector<8x8xf32>
    %97 = vector.extract_strided_slice %12 {offsets = [0, 24], sizes = [8, 8], strides = [1, 1]} : vector<8x32xf32> to vector<8x8xf32>
    %98 = vector.shape_cast %97 : vector<8x8xf32> to vector<2x4x8xf32>
    %99 = vector.extract_strided_slice %9 {offsets = [0, 24], sizes = [8, 8], strides = [1, 1]} : vector<8x32xf32> to vector<8x8xf32>
    %100 = vector.shape_cast %99 : vector<8x8xf32> to vector<2x4x8xf32>
    %101 = vector.extract_strided_slice %10 {offsets = [0, 24], sizes = [8, 8], strides = [1, 1]} : vector<8x32xf32> to vector<8x8xf32>
    %102 = vector.shape_cast %101 : vector<8x8xf32> to vector<2x4x8xf32>
    %103 = arith.truncf %98 : vector<2x4x8xf32> to vector<2x4x8xbf16>
    %104 = arith.truncf %100 : vector<2x4x8xf32> to vector<2x4x8xbf16>
    "tpu.trace_start"() <{level = 10 : i32, message = "ncd,nkd->nck"}> : () -> ()
    %cst_21 = arith.constant dense<0.000000e+00> : vector<2x4x4xf32>
    %105 = tpu.matmul %103, %104, %cst_21 {dimension_numbers = #tpu.dot_dimension_numbers<[2], [2], [1], [1], [0, 0, 0, 1, 1, 1], [0], [0]>} : vector<2x4x8xbf16>, vector<2x4x8xbf16>, vector<2x4x4xf32> -> vector<2x4x4xf32>
    "tpu.trace_stop"() : () -> ()
    %106 = vector.shape_cast %18 : vector<4x4xf32> to vector<1x4x4xf32>
    %107 = vector.broadcast %106 : vector<1x4x4xf32> to vector<2x4x4xf32>
    %108 = arith.addf %105, %107 : vector<2x4x4xf32>
    %cst_22 = arith.constant dense<0xFF800000> : vector<2x4xf32>
    %109 = vector.multi_reduction <maximumf>, %108, %cst_22 [2] : vector<2x4x4xf32> to vector<2x4xf32>
    %110 = vector.shape_cast %109 : vector<2x4xf32> to vector<2x4x1xf32>
    %111 = vector.broadcast %110 : vector<2x4x1xf32> to vector<2x4x4xf32>
    %112 = arith.subf %108, %111 : vector<2x4x4xf32>
    %113 = math.exp %112 : vector<2x4x4xf32>
    %cst_23 = arith.constant dense<0.000000e+00> : vector<2x4xf32>
    %114 = vector.multi_reduction <add>, %113, %cst_23 [2] : vector<2x4x4xf32> to vector<2x4xf32>
    %115 = vector.shape_cast %114 : vector<2x4xf32> to vector<2x4x1xf32>
    %116 = tpu.reciprocal %115 {approx = true} : vector<2x4x1xf32> -> vector<2x4x1xf32>
    %117 = vector.broadcast %116 : vector<2x4x1xf32> to vector<2x4x4xf32>
    %118 = arith.mulf %113, %117 : vector<2x4x4xf32>
    %119 = arith.truncf %118 : vector<2x4x4xf32> to vector<2x4x4xbf16>
    %120 = arith.truncf %102 : vector<2x4x8xf32> to vector<2x4x8xbf16>
    "tpu.trace_start"() <{level = 10 : i32, message = "nck,nkv->ncv"}> : () -> ()
    %cst_24 = arith.constant dense<0.000000e+00> : vector<2x4x8xf32>
    %121 = tpu.matmul %119, %120, %cst_24 {dimension_numbers = #tpu.dot_dimension_numbers<[2], [1], [1], [2], [0, 0, 0, 1, 1, 2], [0], [0]>} : vector<2x4x4xbf16>, vector<2x4x8xbf16>, vector<2x4x8xf32> -> vector<2x4x8xf32>
    "tpu.trace_stop"() : () -> ()
    %122 = vector.shape_cast %121 : vector<2x4x8xf32> to vector<8x8xf32>
    %123 = tpu.concatenate %44, %70, %96, %122 in 1 : vector<8x8xf32>, vector<8x8xf32>, vector<8x8xf32>, vector<8x8xf32> -> vector<8x32xf32>
    %124 = arith.truncf %123 : vector<8x32xf32> to vector<8x32xbf16>
    %c0_25 = arith.constant 0 : index
    %c0_26 = arith.constant 0 : index
    %125 = vector.load %arg5[%c0_25, %c0_26] : memref<32x32xbf16, #tpu.memory_space<vmem>>, vector<32x32xbf16>
    %cst_27 = arith.constant dense<0.000000e+00> : vector<8x32xf32>
    %126 = tpu.matmul %124, %125, %cst_27 {dimension_numbers = #tpu.dot_dimension_numbers<[1], [0], [0], [1], [0, 0, 1, 1], [], []>} : vector<8x32xbf16>, vector<32x32xbf16>, vector<8x32xf32> -> vector<8x32xf32>
    %c0_28 = arith.constant 0 : index
    %c0_29 = arith.constant 0 : index
    %127 = vector.load %arg6[%c0_28, %c0_29] : memref<1x32xf32, #tpu.memory_space<vmem>>, vector<1x32xf32>
    %128 = vector.broadcast %127 : vector<1x32xf32> to vector<8x32xf32>
    %129 = arith.addf %126, %128 : vector<8x32xf32>
    %130 = arith.addf %129, %1 : vector<8x32xf32>
    %cst_30 = arith.constant dense<0.000000e+00> : vector<8xf32>
    %131 = vector.multi_reduction <add>, %130, %cst_30 [1] : vector<8x32xf32> to vector<8xf32>
    %132 = vector.shape_cast %131 : vector<8xf32> to vector<8x1xf32>
    %cst_31 = arith.constant 3.200000e+01 : f32
    %133 = vector.broadcast %cst_31 : f32 to vector<8x1xf32>
    %134 = arith.divf %132, %133 : vector<8x1xf32>
    %135 = vector.broadcast %134 : vector<8x1xf32> to vector<8x32xf32>
    %136 = arith.subf %130, %135 : vector<8x32xf32>
    %137 = arith.mulf %136, %136 : vector<8x32xf32>
    %cst_32 = arith.constant dense<0.000000e+00> : vector<8xf32>
    %138 = vector.multi_reduction <add>, %137, %cst_32 [1] : vector<8x32xf32> to vector<8xf32>
    %139 = vector.shape_cast %138 : vector<8xf32> to vector<8x1xf32>
    %cst_33 = arith.constant 3.200000e+01 : f32
    %140 = vector.broadcast %cst_33 : f32 to vector<8x1xf32>
    %141 = arith.divf %139, %140 : vector<8x1xf32>
    %cst_34 = arith.constant 9.99999974E-6 : f32
    %142 = vector.broadcast %cst_34 : f32 to vector<8x1xf32>
    %143 = arith.addf %141, %142 : vector<8x1xf32>
    %144 = math.rsqrt %143 : vector<8x1xf32>
    %145 = vector.broadcast %144 : vector<8x1xf32> to vector<8x32xf32>
    %146 = arith.mulf %136, %145 : vector<8x32xf32>
    %c0_35 = arith.constant 0 : index
    %c0_36 = arith.constant 0 : index
    %147 = vector.load %arg7[%c0_35, %c0_36] : memref<1x32xf32, #tpu.memory_space<vmem>>, vector<1x32xf32>
    %148 = vector.broadcast %147 : vector<1x32xf32> to vector<8x32xf32>
    %149 = arith.mulf %146, %148 : vector<8x32xf32>
    %c0_37 = arith.constant 0 : index
    %c0_38 = arith.constant 0 : index
    %150 = vector.load %arg8[%c0_37, %c0_38] : memref<1x32xf32, #tpu.memory_space<vmem>>, vector<1x32xf32>
    %151 = vector.broadcast %150 : vector<1x32xf32> to vector<8x32xf32>
    %152 = arith.addf %149, %151 : vector<8x32xf32>
    %c0_39 = arith.constant 0 : index
    %c0_40 = arith.constant 0 : index
    %c0_41 = arith.constant 0 : index
    %153 = vector.load %arg9[%c0_39, %c0_40, %c0_41] : memref<1x8x32xf32, #tpu.memory_space<vmem>>, vector<1x8x32xf32>
    %154 = vector.shape_cast %153 : vector<1x8x32xf32> to vector<8x32xf32>
    %155 = vector.shape_cast %152 : vector<8x32xf32> to vector<1x8x32xf32>
    tpu.vector_store %arg9[%c0_39, %c0_40, %c0_41], %155 {strides = array<i32>} : memref<1x8x32xf32, #tpu.memory_space<vmem>>, vector<1x8x32xf32>,
    return
  }
  func.func @transform_0(%arg0: i32) -> (i32, i32, i32) {
    %c0_i32 = arith.constant 0 : i32
    %c0_i32_0 = arith.constant 0 : i32
    %c0_i32_1 = arith.constant 0 : i32
    return %arg0, %c0_i32, %c0_i32_0 : i32, i32, i32
  }
  func.func @transform_1(%arg0: i32) -> (i32, i32, i32) {
    %c0_i32 = arith.constant 0 : i32
    %c0_i32_0 = arith.constant 0 : i32
    %c0_i32_1 = arith.constant 0 : i32
    return %arg0, %c0_i32, %c0_i32_0 : i32, i32, i32
  }
  func.func @transform_2(%arg0: i32) -> (i32, i32) {
    %c0_i32 = arith.constant 0 : i32
    %c0_i32_0 = arith.constant 0 : i32
    %c0_i32_1 = arith.constant 0 : i32
    return %c0_i32, %c0_i32_0 : i32, i32
  }
  func.func @transform_3(%arg0: i32) -> (i32, i32) {
    %c0_i32 = arith.constant 0 : i32
    %c0_i32_0 = arith.constant 0 : i32
    %c0_i32_1 = arith.constant 0 : i32
    return %c0_i32, %c0_i32_0 : i32, i32
  }
  func.func @transform_4(%arg0: i32) -> (i32, i32) {
    %c0_i32 = arith.constant 0 : i32
    %c0_i32_0 = arith.constant 0 : i32
    %c0_i32_1 = arith.constant 0 : i32
    return %c0_i32, %c0_i32_0 : i32, i32
  }
  func.func @transform_5(%arg0: i32) -> (i32, i32) {
    %c0_i32 = arith.constant 0 : i32
    %c0_i32_0 = arith.constant 0 : i32
    %c0_i32_1 = arith.constant 0 : i32
    return %c0_i32, %c0_i32_0 : i32, i32
  }
  func.func @transform_6(%arg0: i32) -> (i32, i32) {
    %c0_i32 = arith.constant 0 : i32
    %c0_i32_0 = arith.constant 0 : i32
    %c0_i32_1 = arith.constant 0 : i32
    return %c0_i32, %c0_i32_0 : i32, i32
  }
  func.func @transform_7(%arg0: i32) -> (i32, i32) {
    %c0_i32 = arith.constant 0 : i32
    %c0_i32_0 = arith.constant 0 : i32
    %c0_i32_1 = arith.constant 0 : i32
    return %c0_i32, %c0_i32_0 : i32, i32
  }
  func.func @transform_8(%arg0: i32) -> (i32, i32, i32) {
    %c0_i32 = arith.constant 0 : i32
    %c0_i32_0 = arith.constant 0 : i32
    %c0_i32_1 = arith.constant 0 : i32
    return %arg0, %c0_i32, %c0_i32_0 : i32, i32, i32
  }
}

module attributes {stable_mosaic.version = 11 : i64} {
  func.func @_ffn_ln_kernel(%arg0: i32, %arg1: memref<8x32xf32, #tpu.memory_space<vmem>>, %arg2: memref<32x2048xbf16, #tpu.memory_space<vmem>>, %arg3: memref<1x2048xf32, #tpu.memory_space<vmem>>, %arg4: memref<2048x32xbf16, #tpu.memory_space<vmem>>, %arg5: memref<1x32xf32, #tpu.memory_space<vmem>>, %arg6: memref<1x32xf32, #tpu.memory_space<vmem>>, %arg7: memref<1x32xf32, #tpu.memory_space<vmem>>, %arg8: memref<8x32xf32, #tpu.memory_space<vmem>>) attributes {dimension_semantics = [#tpu.dimension_semantics<parallel>], iteration_bounds = array<i64: 2>, scalar_prefetch = 0 : i64, scratch_operands = 0 : i64, tpu.core_type = #tpu.core_type<tc>, window_params = [{transform_indices = @transform_0, window_bounds = array<i64: 8, 32>}, {pipeline_mode = #tpu.pipeline_mode<synchronous>, transform_indices = @transform_1, window_bounds = array<i64: 32, 2048>}, {pipeline_mode = #tpu.pipeline_mode<synchronous>, transform_indices = @transform_2, window_bounds = array<i64: 1, 2048>}, {pipeline_mode = #tpu.pipeline_mode<synchronous>, transform_indices = @transform_3, window_bounds = array<i64: 2048, 32>}, {pipeline_mode = #tpu.pipeline_mode<synchronous>, transform_indices = @transform_4, window_bounds = array<i64: 1, 32>}, {pipeline_mode = #tpu.pipeline_mode<synchronous>, transform_indices = @transform_5, window_bounds = array<i64: 1, 32>}, {pipeline_mode = #tpu.pipeline_mode<synchronous>, transform_indices = @transform_6, window_bounds = array<i64: 1, 32>}, {transform_indices = @transform_7, window_bounds = array<i64: 8, 32>}]} {
    %c0 = arith.constant 0 : index
    %c0_0 = arith.constant 0 : index
    %0 = vector.load %arg1[%c0, %c0_0] : memref<8x32xf32, #tpu.memory_space<vmem>>, vector<8x32xf32>
    %1 = arith.truncf %0 : vector<8x32xf32> to vector<8x32xbf16>
    %c0_1 = arith.constant 0 : index
    %c0_2 = arith.constant 0 : index
    %2 = vector.load %arg2[%c0_1, %c0_2] : memref<32x2048xbf16, #tpu.memory_space<vmem>>, vector<32x2048xbf16>
    %cst = arith.constant dense<0.000000e+00> : vector<8x2048xf32>
    %3 = tpu.matmul %1, %2, %cst {dimension_numbers = #tpu.dot_dimension_numbers<[1], [0], [0], [1], [0, 0, 1, 1], [], []>} : vector<8x32xbf16>, vector<32x2048xbf16>, vector<8x2048xf32> -> vector<8x2048xf32>
    %c0_3 = arith.constant 0 : index
    %c0_4 = arith.constant 0 : index
    %4 = vector.load %arg3[%c0_3, %c0_4] : memref<1x2048xf32, #tpu.memory_space<vmem>>, vector<1x2048xf32>
    %5 = vector.broadcast %4 : vector<1x2048xf32> to vector<8x2048xf32>
    %6 = arith.addf %3, %5 : vector<8x2048xf32>
    %cst_5 = arith.constant 0.000000e+00 : f32
    %7 = vector.broadcast %cst_5 : f32 to vector<8x2048xf32>
    %8 = arith.maximumf %6, %7 : vector<8x2048xf32>
    %9 = arith.truncf %8 : vector<8x2048xf32> to vector<8x2048xbf16>
    %c0_6 = arith.constant 0 : index
    %c0_7 = arith.constant 0 : index
    %10 = vector.load %arg4[%c0_6, %c0_7] : memref<2048x32xbf16, #tpu.memory_space<vmem>>, vector<2048x32xbf16>
    %cst_8 = arith.constant dense<0.000000e+00> : vector<8x32xf32>
    %11 = tpu.matmul %9, %10, %cst_8 {dimension_numbers = #tpu.dot_dimension_numbers<[1], [0], [0], [1], [0, 0, 1, 1], [], []>} : vector<8x2048xbf16>, vector<2048x32xbf16>, vector<8x32xf32> -> vector<8x32xf32>
    %c0_9 = arith.constant 0 : index
    %c0_10 = arith.constant 0 : index
    %12 = vector.load %arg5[%c0_9, %c0_10] : memref<1x32xf32, #tpu.memory_space<vmem>>, vector<1x32xf32>
    %13 = vector.broadcast %12 : vector<1x32xf32> to vector<8x32xf32>
    %14 = arith.addf %11, %13 : vector<8x32xf32>
    %15 = arith.addf %14, %0 : vector<8x32xf32>
    %cst_11 = arith.constant dense<0.000000e+00> : vector<8xf32>
    %16 = vector.multi_reduction <add>, %15, %cst_11 [1] : vector<8x32xf32> to vector<8xf32>
    %17 = vector.shape_cast %16 : vector<8xf32> to vector<8x1xf32>
    %cst_12 = arith.constant 3.200000e+01 : f32
    %18 = vector.broadcast %cst_12 : f32 to vector<8x1xf32>
    %19 = arith.divf %17, %18 : vector<8x1xf32>
    %20 = vector.broadcast %19 : vector<8x1xf32> to vector<8x32xf32>
    %21 = arith.subf %15, %20 : vector<8x32xf32>
    %22 = arith.mulf %21, %21 : vector<8x32xf32>
    %cst_13 = arith.constant dense<0.000000e+00> : vector<8xf32>
    %23 = vector.multi_reduction <add>, %22, %cst_13 [1] : vector<8x32xf32> to vector<8xf32>
    %24 = vector.shape_cast %23 : vector<8xf32> to vector<8x1xf32>
    %cst_14 = arith.constant 3.200000e+01 : f32
    %25 = vector.broadcast %cst_14 : f32 to vector<8x1xf32>
    %26 = arith.divf %24, %25 : vector<8x1xf32>
    %cst_15 = arith.constant 9.99999974E-6 : f32
    %27 = vector.broadcast %cst_15 : f32 to vector<8x1xf32>
    %28 = arith.addf %26, %27 : vector<8x1xf32>
    %29 = math.rsqrt %28 : vector<8x1xf32>
    %30 = vector.broadcast %29 : vector<8x1xf32> to vector<8x32xf32>
    %31 = arith.mulf %21, %30 : vector<8x32xf32>
    %c0_16 = arith.constant 0 : index
    %c0_17 = arith.constant 0 : index
    %32 = vector.load %arg6[%c0_16, %c0_17] : memref<1x32xf32, #tpu.memory_space<vmem>>, vector<1x32xf32>
    %33 = vector.broadcast %32 : vector<1x32xf32> to vector<8x32xf32>
    %34 = arith.mulf %31, %33 : vector<8x32xf32>
    %c0_18 = arith.constant 0 : index
    %c0_19 = arith.constant 0 : index
    %35 = vector.load %arg7[%c0_18, %c0_19] : memref<1x32xf32, #tpu.memory_space<vmem>>, vector<1x32xf32>
    %36 = vector.broadcast %35 : vector<1x32xf32> to vector<8x32xf32>
    %37 = arith.addf %34, %36 : vector<8x32xf32>
    %c0_20 = arith.constant 0 : index
    %c0_21 = arith.constant 0 : index
    %38 = vector.load %arg8[%c0_20, %c0_21] : memref<8x32xf32, #tpu.memory_space<vmem>>, vector<8x32xf32>
    tpu.vector_store %arg8[%c0_20, %c0_21], %37 {strides = array<i32>} : memref<8x32xf32, #tpu.memory_space<vmem>>, vector<8x32xf32>,
    return
  }
  func.func @transform_0(%arg0: i32) -> (i32, i32) {
    %c0_i32 = arith.constant 0 : i32
    %c0_i32_0 = arith.constant 0 : i32
    return %arg0, %c0_i32 : i32, i32
  }
  func.func @transform_1(%arg0: i32) -> (i32, i32) {
    %c0_i32 = arith.constant 0 : i32
    %c0_i32_0 = arith.constant 0 : i32
    %c0_i32_1 = arith.constant 0 : i32
    return %c0_i32, %c0_i32_0 : i32, i32
  }
  func.func @transform_2(%arg0: i32) -> (i32, i32) {
    %c0_i32 = arith.constant 0 : i32
    %c0_i32_0 = arith.constant 0 : i32
    %c0_i32_1 = arith.constant 0 : i32
    return %c0_i32, %c0_i32_0 : i32, i32
  }
  func.func @transform_3(%arg0: i32) -> (i32, i32) {
    %c0_i32 = arith.constant 0 : i32
    %c0_i32_0 = arith.constant 0 : i32
    %c0_i32_1 = arith.constant 0 : i32
    return %c0_i32, %c0_i32_0 : i32, i32
  }
  func.func @transform_4(%arg0: i32) -> (i32, i32) {
    %c0_i32 = arith.constant 0 : i32
    %c0_i32_0 = arith.constant 0 : i32
    %c0_i32_1 = arith.constant 0 : i32
    return %c0_i32, %c0_i32_0 : i32, i32
  }
  func.func @transform_5(%arg0: i32) -> (i32, i32) {
    %c0_i32 = arith.constant 0 : i32
    %c0_i32_0 = arith.constant 0 : i32
    %c0_i32_1 = arith.constant 0 : i32
    return %c0_i32, %c0_i32_0 : i32, i32
  }
  func.func @transform_6(%arg0: i32) -> (i32, i32) {
    %c0_i32 = arith.constant 0 : i32
    %c0_i32_0 = arith.constant 0 : i32
    %c0_i32_1 = arith.constant 0 : i32
    return %c0_i32, %c0_i32_0 : i32, i32
  }
  func.func @transform_7(%arg0: i32) -> (i32, i32) {
    %c0_i32 = arith.constant 0 : i32
    %c0_i32_0 = arith.constant 0 : i32
    return %arg0, %c0_i32 : i32, i32
  }
}

module attributes {stable_mosaic.version = 11 : i64} {
  func.func @_attn_block_kernel(%arg0: i32, %arg1: memref<1x8x32xf32, #tpu.memory_space<vmem>>, %arg2: memref<1x8x32xf32, #tpu.memory_space<vmem>>, %arg3: memref<32x96xbf16, #tpu.memory_space<vmem>>, %arg4: memref<1x96xf32, #tpu.memory_space<vmem>>, %arg5: memref<32x32xbf16, #tpu.memory_space<vmem>>, %arg6: memref<1x32xf32, #tpu.memory_space<vmem>>, %arg7: memref<1x32xf32, #tpu.memory_space<vmem>>, %arg8: memref<1x32xf32, #tpu.memory_space<vmem>>, %arg9: memref<1x8x32xf32, #tpu.memory_space<vmem>>) attributes {dimension_semantics = [#tpu.dimension_semantics<parallel>], iteration_bounds = array<i64: 2>, scalar_prefetch = 0 : i64, scratch_operands = 0 : i64, tpu.core_type = #tpu.core_type<tc>, window_params = [{transform_indices = @transform_0, window_bounds = array<i64: 1, 8, 32>}, {transform_indices = @transform_1, window_bounds = array<i64: 1, 8, 32>}, {pipeline_mode = #tpu.pipeline_mode<synchronous>, transform_indices = @transform_2, window_bounds = array<i64: 32, 96>}, {pipeline_mode = #tpu.pipeline_mode<synchronous>, transform_indices = @transform_3, window_bounds = array<i64: 1, 96>}, {pipeline_mode = #tpu.pipeline_mode<synchronous>, transform_indices = @transform_4, window_bounds = array<i64: 32, 32>}, {pipeline_mode = #tpu.pipeline_mode<synchronous>, transform_indices = @transform_5, window_bounds = array<i64: 1, 32>}, {pipeline_mode = #tpu.pipeline_mode<synchronous>, transform_indices = @transform_6, window_bounds = array<i64: 1, 32>}, {pipeline_mode = #tpu.pipeline_mode<synchronous>, transform_indices = @transform_7, window_bounds = array<i64: 1, 32>}, {transform_indices = @transform_8, window_bounds = array<i64: 1, 8, 32>}]} {
    %c0 = arith.constant 0 : index
    %c0_0 = arith.constant 0 : index
    %c0_1 = arith.constant 0 : index
    %0 = vector.load %arg1[%c0, %c0_0, %c0_1] : memref<1x8x32xf32, #tpu.memory_space<vmem>>, vector<1x8x32xf32>
    %1 = vector.shape_cast %0 : vector<1x8x32xf32> to vector<8x32xf32>
    %c0_2 = arith.constant 0 : index
    %c0_3 = arith.constant 0 : index
    %c0_4 = arith.constant 0 : index
    %2 = vector.load %arg2[%c0_2, %c0_3, %c0_4] : memref<1x8x32xf32, #tpu.memory_space<vmem>>, vector<1x8x32xf32>
    %3 = vector.shape_cast %2 : vector<1x8x32xf32> to vector<8x32xf32>
    %4 = arith.truncf %1 : vector<8x32xf32> to vector<8x32xbf16>
    %c0_5 = arith.constant 0 : index
    %c0_6 = arith.constant 0 : index
    %5 = vector.load %arg3[%c0_5, %c0_6] : memref<32x96xbf16, #tpu.memory_space<vmem>>, vector<32x32xbf16>
    %cst = arith.constant dense<0.000000e+00> : vector<8x32xf32>
    %6 = tpu.matmul %4, %5, %cst {dimension_numbers = #tpu.dot_dimension_numbers<[1], [0], [0], [1], [0, 0, 1, 1], [], []>} : vector<8x32xbf16>, vector<32x32xbf16>, vector<8x32xf32> -> vector<8x32xf32>
    %c0_7 = arith.constant 0 : index
    %c0_8 = arith.constant 0 : index
    %7 = vector.load %arg4[%c0_7, %c0_8] : memref<1x96xf32, #tpu.memory_space<vmem>>, vector<1x32xf32>
    %8 = vector.broadcast %7 : vector<1x32xf32> to vector<8x32xf32>
    %9 = arith.addf %6, %8 : vector<8x32xf32>
    %10 = arith.truncf %3 : vector<8x32xf32> to vector<8x32xbf16>
    %c0_9 = arith.constant 0 : index
    %c32 = arith.constant 32 : index
    %11 = vector.load %arg3[%c0_9, %c32] : memref<32x96xbf16, #tpu.memory_space<vmem>>, vector<32x64xbf16>
    %cst_10 = arith.constant dense<0.000000e+00> : vector<8x64xf32>
    %12 = tpu.matmul %10, %11, %cst_10 {dimension_numbers = #tpu.dot_dimension_numbers<[1], [0], [0], [1], [0, 0, 1, 1], [], []>} : vector<8x32xbf16>, vector<32x64xbf16>, vector<8x64xf32> -> vector<8x64xf32>
    %c0_11 = arith.constant 0 : index
    %c32_12 = arith.constant 32 : index
    %13 = vector.load %arg4[%c0_11, %c32_12] : memref<1x96xf32, #tpu.memory_space<vmem>>, vector<1x64xf32>
    %14 = vector.broadcast %13 : vector<1x64xf32> to vector<8x64xf32>
    %15 = arith.addf %12, %14 : vector<8x64xf32>
    %16 = vector.extract_strided_slice %15 {offsets = [0, 0], sizes = [8, 32], strides = [1, 1]} : vector<8x64xf32> to vector<8x32xf32>
    %17 = vector.extract_strided_slice %15 {offsets = [0, 32], sizes = [8, 32], strides = [1, 1]} : vector<8x64xf32> to vector<8x32xf32>
    %cst_13 = arith.constant 5.000000e-01 : f32
    %18 = vector.broadcast %cst_13 : f32 to vector<8x32xf32>
    %19 = arith.mulf %9, %18 : vector<8x32xf32>
    %20 = vector.extract_strided_slice %19 {offsets = [0, 0], sizes = [8, 8], strides = [1, 1]} : vector<8x32xf32> to vector<8x8xf32>
    %21 = vector.shape_cast %20 : vector<8x8xf32> to vector<2x4x8xf32>
    %22 = vector.extract_strided_slice %16 {offsets = [0, 0], sizes = [8, 8], strides = [1, 1]} : vector<8x32xf32> to vector<8x8xf32>
    %23 = vector.shape_cast %22 : vector<8x8xf32> to vector<2x4x8xf32>
    %24 = vector.extract_strided_slice %17 {offsets = [0, 0], sizes = [8, 8], strides = [1, 1]} : vector<8x32xf32> to vector<8x8xf32>
    %25 = vector.shape_cast %24 : vector<8x8xf32> to vector<2x4x8xf32>
    %26 = arith.truncf %21 : vector<2x4x8xf32> to vector<2x4x8xbf16>
    %27 = arith.truncf %23 : vector<2x4x8xf32> to vector<2x4x8xbf16>
    "tpu.trace_start"() <{level = 10 : i32, message = "ncd,nkd->nck"}> : () -> ()
    %cst_14 = arith.constant dense<0.000000e+00> : vector<2x4x4xf32>
    %28 = tpu.matmul %26, %27, %cst_14 {dimension_numbers = #tpu.dot_dimension_numbers<[2], [2], [1], [1], [0, 0, 0, 1, 1, 1], [0], [0]>} : vector<2x4x8xbf16>, vector<2x4x8xbf16>, vector<2x4x4xf32> -> vector<2x4x4xf32>
    "tpu.trace_stop"() : () -> ()
    %cst_15 = arith.constant dense<0xFF800000> : vector<2x4xf32>
    %29 = vector.multi_reduction <maximumf>, %28, %cst_15 [2] : vector<2x4x4xf32> to vector<2x4xf32>
    %30 = vector.shape_cast %29 : vector<2x4xf32> to vector<2x4x1xf32>
    %31 = vector.broadcast %30 : vector<2x4x1xf32> to vector<2x4x4xf32>
    %32 = arith.subf %28, %31 : vector<2x4x4xf32>
    %33 = math.exp %32 : vector<2x4x4xf32>
    %cst_16 = arith.constant dense<0.000000e+00> : vector<2x4xf32>
    %34 = vector.multi_reduction <add>, %33, %cst_16 [2] : vector<2x4x4xf32> to vector<2x4xf32>
    %35 = vector.shape_cast %34 : vector<2x4xf32> to vector<2x4x1xf32>
    %36 = tpu.reciprocal %35 {approx = true} : vector<2x4x1xf32> -> vector<2x4x1xf32>
    %37 = vector.broadcast %36 : vector<2x4x1xf32> to vector<2x4x4xf32>
    %38 = arith.mulf %33, %37 : vector<2x4x4xf32>
    %39 = arith.truncf %38 : vector<2x4x4xf32> to vector<2x4x4xbf16>
    %40 = arith.truncf %25 : vector<2x4x8xf32> to vector<2x4x8xbf16>
    "tpu.trace_start"() <{level = 10 : i32, message = "nck,nkv->ncv"}> : () -> ()
    %cst_17 = arith.constant dense<0.000000e+00> : vector<2x4x8xf32>
    %41 = tpu.matmul %39, %40, %cst_17 {dimension_numbers = #tpu.dot_dimension_numbers<[2], [1], [1], [2], [0, 0, 0, 1, 1, 2], [0], [0]>} : vector<2x4x4xbf16>, vector<2x4x8xbf16>, vector<2x4x8xf32> -> vector<2x4x8xf32>
    "tpu.trace_stop"() : () -> ()
    %42 = vector.shape_cast %41 : vector<2x4x8xf32> to vector<8x8xf32>
    %43 = vector.extract_strided_slice %19 {offsets = [0, 8], sizes = [8, 8], strides = [1, 1]} : vector<8x32xf32> to vector<8x8xf32>
    %44 = vector.shape_cast %43 : vector<8x8xf32> to vector<2x4x8xf32>
    %45 = vector.extract_strided_slice %16 {offsets = [0, 8], sizes = [8, 8], strides = [1, 1]} : vector<8x32xf32> to vector<8x8xf32>
    %46 = vector.shape_cast %45 : vector<8x8xf32> to vector<2x4x8xf32>
    %47 = vector.extract_strided_slice %17 {offsets = [0, 8], sizes = [8, 8], strides = [1, 1]} : vector<8x32xf32> to vector<8x8xf32>
    %48 = vector.shape_cast %47 : vector<8x8xf32> to vector<2x4x8xf32>
    %49 = arith.truncf %44 : vector<2x4x8xf32> to vector<2x4x8xbf16>
    %50 = arith.truncf %46 : vector<2x4x8xf32> to vector<2x4x8xbf16>
    "tpu.trace_start"() <{level = 10 : i32, message = "ncd,nkd->nck"}> : () -> ()
    %cst_18 = arith.constant dense<0.000000e+00> : vector<2x4x4xf32>
    %51 = tpu.matmul %49, %50, %cst_18 {dimension_numbers = #tpu.dot_dimension_numbers<[2], [2], [1], [1], [0, 0, 0, 1, 1, 1], [0], [0]>} : vector<2x4x8xbf16>, vector<2x4x8xbf16>, vector<2x4x4xf32> -> vector<2x4x4xf32>
    "tpu.trace_stop"() : () -> ()
    %cst_19 = arith.constant dense<0xFF800000> : vector<2x4xf32>
    %52 = vector.multi_reduction <maximumf>, %51, %cst_19 [2] : vector<2x4x4xf32> to vector<2x4xf32>
    %53 = vector.shape_cast %52 : vector<2x4xf32> to vector<2x4x1xf32>
    %54 = vector.broadcast %53 : vector<2x4x1xf32> to vector<2x4x4xf32>
    %55 = arith.subf %51, %54 : vector<2x4x4xf32>
    %56 = math.exp %55 : vector<2x4x4xf32>
    %cst_20 = arith.constant dense<0.000000e+00> : vector<2x4xf32>
    %57 = vector.multi_reduction <add>, %56, %cst_20 [2] : vector<2x4x4xf32> to vector<2x4xf32>
    %58 = vector.shape_cast %57 : vector<2x4xf32> to vector<2x4x1xf32>
    %59 = tpu.reciprocal %58 {approx = true} : vector<2x4x1xf32> -> vector<2x4x1xf32>
    %60 = vector.broadcast %59 : vector<2x4x1xf32> to vector<2x4x4xf32>
    %61 = arith.mulf %56, %60 : vector<2x4x4xf32>
    %62 = arith.truncf %61 : vector<2x4x4xf32> to vector<2x4x4xbf16>
    %63 = arith.truncf %48 : vector<2x4x8xf32> to vector<2x4x8xbf16>
    "tpu.trace_start"() <{level = 10 : i32, message = "nck,nkv->ncv"}> : () -> ()
    %cst_21 = arith.constant dense<0.000000e+00> : vector<2x4x8xf32>
    %64 = tpu.matmul %62, %63, %cst_21 {dimension_numbers = #tpu.dot_dimension_numbers<[2], [1], [1], [2], [0, 0, 0, 1, 1, 2], [0], [0]>} : vector<2x4x4xbf16>, vector<2x4x8xbf16>, vector<2x4x8xf32> -> vector<2x4x8xf32>
    "tpu.trace_stop"() : () -> ()
    %65 = vector.shape_cast %64 : vector<2x4x8xf32> to vector<8x8xf32>
    %66 = vector.extract_strided_slice %19 {offsets = [0, 16], sizes = [8, 8], strides = [1, 1]} : vector<8x32xf32> to vector<8x8xf32>
    %67 = vector.shape_cast %66 : vector<8x8xf32> to vector<2x4x8xf32>
    %68 = vector.extract_strided_slice %16 {offsets = [0, 16], sizes = [8, 8], strides = [1, 1]} : vector<8x32xf32> to vector<8x8xf32>
    %69 = vector.shape_cast %68 : vector<8x8xf32> to vector<2x4x8xf32>
    %70 = vector.extract_strided_slice %17 {offsets = [0, 16], sizes = [8, 8], strides = [1, 1]} : vector<8x32xf32> to vector<8x8xf32>
    %71 = vector.shape_cast %70 : vector<8x8xf32> to vector<2x4x8xf32>
    %72 = arith.truncf %67 : vector<2x4x8xf32> to vector<2x4x8xbf16>
    %73 = arith.truncf %69 : vector<2x4x8xf32> to vector<2x4x8xbf16>
    "tpu.trace_start"() <{level = 10 : i32, message = "ncd,nkd->nck"}> : () -> ()
    %cst_22 = arith.constant dense<0.000000e+00> : vector<2x4x4xf32>
    %74 = tpu.matmul %72, %73, %cst_22 {dimension_numbers = #tpu.dot_dimension_numbers<[2], [2], [1], [1], [0, 0, 0, 1, 1, 1], [0], [0]>} : vector<2x4x8xbf16>, vector<2x4x8xbf16>, vector<2x4x4xf32> -> vector<2x4x4xf32>
    "tpu.trace_stop"() : () -> ()
    %cst_23 = arith.constant dense<0xFF800000> : vector<2x4xf32>
    %75 = vector.multi_reduction <maximumf>, %74, %cst_23 [2] : vector<2x4x4xf32> to vector<2x4xf32>
    %76 = vector.shape_cast %75 : vector<2x4xf32> to vector<2x4x1xf32>
    %77 = vector.broadcast %76 : vector<2x4x1xf32> to vector<2x4x4xf32>
    %78 = arith.subf %74, %77 : vector<2x4x4xf32>
    %79 = math.exp %78 : vector<2x4x4xf32>
    %cst_24 = arith.constant dense<0.000000e+00> : vector<2x4xf32>
    %80 = vector.multi_reduction <add>, %79, %cst_24 [2] : vector<2x4x4xf32> to vector<2x4xf32>
    %81 = vector.shape_cast %80 : vector<2x4xf32> to vector<2x4x1xf32>
    %82 = tpu.reciprocal %81 {approx = true} : vector<2x4x1xf32> -> vector<2x4x1xf32>
    %83 = vector.broadcast %82 : vector<2x4x1xf32> to vector<2x4x4xf32>
    %84 = arith.mulf %79, %83 : vector<2x4x4xf32>
    %85 = arith.truncf %84 : vector<2x4x4xf32> to vector<2x4x4xbf16>
    %86 = arith.truncf %71 : vector<2x4x8xf32> to vector<2x4x8xbf16>
    "tpu.trace_start"() <{level = 10 : i32, message = "nck,nkv->ncv"}> : () -> ()
    %cst_25 = arith.constant dense<0.000000e+00> : vector<2x4x8xf32>
    %87 = tpu.matmul %85, %86, %cst_25 {dimension_numbers = #tpu.dot_dimension_numbers<[2], [1], [1], [2], [0, 0, 0, 1, 1, 2], [0], [0]>} : vector<2x4x4xbf16>, vector<2x4x8xbf16>, vector<2x4x8xf32> -> vector<2x4x8xf32>
    "tpu.trace_stop"() : () -> ()
    %88 = vector.shape_cast %87 : vector<2x4x8xf32> to vector<8x8xf32>
    %89 = vector.extract_strided_slice %19 {offsets = [0, 24], sizes = [8, 8], strides = [1, 1]} : vector<8x32xf32> to vector<8x8xf32>
    %90 = vector.shape_cast %89 : vector<8x8xf32> to vector<2x4x8xf32>
    %91 = vector.extract_strided_slice %16 {offsets = [0, 24], sizes = [8, 8], strides = [1, 1]} : vector<8x32xf32> to vector<8x8xf32>
    %92 = vector.shape_cast %91 : vector<8x8xf32> to vector<2x4x8xf32>
    %93 = vector.extract_strided_slice %17 {offsets = [0, 24], sizes = [8, 8], strides = [1, 1]} : vector<8x32xf32> to vector<8x8xf32>
    %94 = vector.shape_cast %93 : vector<8x8xf32> to vector<2x4x8xf32>
    %95 = arith.truncf %90 : vector<2x4x8xf32> to vector<2x4x8xbf16>
    %96 = arith.truncf %92 : vector<2x4x8xf32> to vector<2x4x8xbf16>
    "tpu.trace_start"() <{level = 10 : i32, message = "ncd,nkd->nck"}> : () -> ()
    %cst_26 = arith.constant dense<0.000000e+00> : vector<2x4x4xf32>
    %97 = tpu.matmul %95, %96, %cst_26 {dimension_numbers = #tpu.dot_dimension_numbers<[2], [2], [1], [1], [0, 0, 0, 1, 1, 1], [0], [0]>} : vector<2x4x8xbf16>, vector<2x4x8xbf16>, vector<2x4x4xf32> -> vector<2x4x4xf32>
    "tpu.trace_stop"() : () -> ()
    %cst_27 = arith.constant dense<0xFF800000> : vector<2x4xf32>
    %98 = vector.multi_reduction <maximumf>, %97, %cst_27 [2] : vector<2x4x4xf32> to vector<2x4xf32>
    %99 = vector.shape_cast %98 : vector<2x4xf32> to vector<2x4x1xf32>
    %100 = vector.broadcast %99 : vector<2x4x1xf32> to vector<2x4x4xf32>
    %101 = arith.subf %97, %100 : vector<2x4x4xf32>
    %102 = math.exp %101 : vector<2x4x4xf32>
    %cst_28 = arith.constant dense<0.000000e+00> : vector<2x4xf32>
    %103 = vector.multi_reduction <add>, %102, %cst_28 [2] : vector<2x4x4xf32> to vector<2x4xf32>
    %104 = vector.shape_cast %103 : vector<2x4xf32> to vector<2x4x1xf32>
    %105 = tpu.reciprocal %104 {approx = true} : vector<2x4x1xf32> -> vector<2x4x1xf32>
    %106 = vector.broadcast %105 : vector<2x4x1xf32> to vector<2x4x4xf32>
    %107 = arith.mulf %102, %106 : vector<2x4x4xf32>
    %108 = arith.truncf %107 : vector<2x4x4xf32> to vector<2x4x4xbf16>
    %109 = arith.truncf %94 : vector<2x4x8xf32> to vector<2x4x8xbf16>
    "tpu.trace_start"() <{level = 10 : i32, message = "nck,nkv->ncv"}> : () -> ()
    %cst_29 = arith.constant dense<0.000000e+00> : vector<2x4x8xf32>
    %110 = tpu.matmul %108, %109, %cst_29 {dimension_numbers = #tpu.dot_dimension_numbers<[2], [1], [1], [2], [0, 0, 0, 1, 1, 2], [0], [0]>} : vector<2x4x4xbf16>, vector<2x4x8xbf16>, vector<2x4x8xf32> -> vector<2x4x8xf32>
    "tpu.trace_stop"() : () -> ()
    %111 = vector.shape_cast %110 : vector<2x4x8xf32> to vector<8x8xf32>
    %112 = tpu.concatenate %42, %65, %88, %111 in 1 : vector<8x8xf32>, vector<8x8xf32>, vector<8x8xf32>, vector<8x8xf32> -> vector<8x32xf32>
    %113 = arith.truncf %112 : vector<8x32xf32> to vector<8x32xbf16>
    %c0_30 = arith.constant 0 : index
    %c0_31 = arith.constant 0 : index
    %114 = vector.load %arg5[%c0_30, %c0_31] : memref<32x32xbf16, #tpu.memory_space<vmem>>, vector<32x32xbf16>
    %cst_32 = arith.constant dense<0.000000e+00> : vector<8x32xf32>
    %115 = tpu.matmul %113, %114, %cst_32 {dimension_numbers = #tpu.dot_dimension_numbers<[1], [0], [0], [1], [0, 0, 1, 1], [], []>} : vector<8x32xbf16>, vector<32x32xbf16>, vector<8x32xf32> -> vector<8x32xf32>
    %c0_33 = arith.constant 0 : index
    %c0_34 = arith.constant 0 : index
    %116 = vector.load %arg6[%c0_33, %c0_34] : memref<1x32xf32, #tpu.memory_space<vmem>>, vector<1x32xf32>
    %117 = vector.broadcast %116 : vector<1x32xf32> to vector<8x32xf32>
    %118 = arith.addf %115, %117 : vector<8x32xf32>
    %119 = arith.addf %118, %1 : vector<8x32xf32>
    %cst_35 = arith.constant dense<0.000000e+00> : vector<8xf32>
    %120 = vector.multi_reduction <add>, %119, %cst_35 [1] : vector<8x32xf32> to vector<8xf32>
    %121 = vector.shape_cast %120 : vector<8xf32> to vector<8x1xf32>
    %cst_36 = arith.constant 3.200000e+01 : f32
    %122 = vector.broadcast %cst_36 : f32 to vector<8x1xf32>
    %123 = arith.divf %121, %122 : vector<8x1xf32>
    %124 = vector.broadcast %123 : vector<8x1xf32> to vector<8x32xf32>
    %125 = arith.subf %119, %124 : vector<8x32xf32>
    %126 = arith.mulf %125, %125 : vector<8x32xf32>
    %cst_37 = arith.constant dense<0.000000e+00> : vector<8xf32>
    %127 = vector.multi_reduction <add>, %126, %cst_37 [1] : vector<8x32xf32> to vector<8xf32>
    %128 = vector.shape_cast %127 : vector<8xf32> to vector<8x1xf32>
    %cst_38 = arith.constant 3.200000e+01 : f32
    %129 = vector.broadcast %cst_38 : f32 to vector<8x1xf32>
    %130 = arith.divf %128, %129 : vector<8x1xf32>
    %cst_39 = arith.constant 9.99999974E-6 : f32
    %131 = vector.broadcast %cst_39 : f32 to vector<8x1xf32>
    %132 = arith.addf %130, %131 : vector<8x1xf32>
    %133 = math.rsqrt %132 : vector<8x1xf32>
    %134 = vector.broadcast %133 : vector<8x1xf32> to vector<8x32xf32>
    %135 = arith.mulf %125, %134 : vector<8x32xf32>
    %c0_40 = arith.constant 0 : index
    %c0_41 = arith.constant 0 : index
    %136 = vector.load %arg7[%c0_40, %c0_41] : memref<1x32xf32, #tpu.memory_space<vmem>>, vector<1x32xf32>
    %137 = vector.broadcast %136 : vector<1x32xf32> to vector<8x32xf32>
    %138 = arith.mulf %135, %137 : vector<8x32xf32>
    %c0_42 = arith.constant 0 : index
    %c0_43 = arith.constant 0 : index
    %139 = vector.load %arg8[%c0_42, %c0_43] : memref<1x32xf32, #tpu.memory_space<vmem>>, vector<1x32xf32>
    %140 = vector.broadcast %139 : vector<1x32xf32> to vector<8x32xf32>
    %141 = arith.addf %138, %140 : vector<8x32xf32>
    %c0_44 = arith.constant 0 : index
    %c0_45 = arith.constant 0 : index
    %c0_46 = arith.constant 0 : index
    %142 = vector.load %arg9[%c0_44, %c0_45, %c0_46] : memref<1x8x32xf32, #tpu.memory_space<vmem>>, vector<1x8x32xf32>
    %143 = vector.shape_cast %142 : vector<1x8x32xf32> to vector<8x32xf32>
    %144 = vector.shape_cast %141 : vector<8x32xf32> to vector<1x8x32xf32>
    tpu.vector_store %arg9[%c0_44, %c0_45, %c0_46], %144 {strides = array<i32>} : memref<1x8x32xf32, #tpu.memory_space<vmem>>, vector<1x8x32xf32>,
    return
  }
  func.func @transform_0(%arg0: i32) -> (i32, i32, i32) {
    %c0_i32 = arith.constant 0 : i32
    %c0_i32_0 = arith.constant 0 : i32
    %c0_i32_1 = arith.constant 0 : i32
    return %arg0, %c0_i32, %c0_i32_0 : i32, i32, i32
  }
  func.func @transform_1(%arg0: i32) -> (i32, i32, i32) {
    %c0_i32 = arith.constant 0 : i32
    %c0_i32_0 = arith.constant 0 : i32
    %c0_i32_1 = arith.constant 0 : i32
    return %arg0, %c0_i32, %c0_i32_0 : i32, i32, i32
  }
  func.func @transform_2(%arg0: i32) -> (i32, i32) {
    %c0_i32 = arith.constant 0 : i32
    %c0_i32_0 = arith.constant 0 : i32
    %c0_i32_1 = arith.constant 0 : i32
    return %c0_i32, %c0_i32_0 : i32, i32
  }
  func.func @transform_3(%arg0: i32) -> (i32, i32) {
    %c0_i32 = arith.constant 0 : i32
    %c0_i32_0 = arith.constant 0 : i32
    %c0_i32_1 = arith.constant 0 : i32
    return %c0_i32, %c0_i32_0 : i32, i32
  }
  func.func @transform_4(%arg0: i32) -> (i32, i32) {
    %c0_i32 = arith.constant 0 : i32
    %c0_i32_0 = arith.constant 0 : i32
    %c0_i32_1 = arith.constant 0 : i32
    return %c0_i32, %c0_i32_0 : i32, i32
  }
  func.func @transform_5(%arg0: i32) -> (i32, i32) {
    %c0_i32 = arith.constant 0 : i32
    %c0_i32_0 = arith.constant 0 : i32
    %c0_i32_1 = arith.constant 0 : i32
    return %c0_i32, %c0_i32_0 : i32, i32
  }
  func.func @transform_6(%arg0: i32) -> (i32, i32) {
    %c0_i32 = arith.constant 0 : i32
    %c0_i32_0 = arith.constant 0 : i32
    %c0_i32_1 = arith.constant 0 : i32
    return %c0_i32, %c0_i32_0 : i32, i32
  }
  func.func @transform_7(%arg0: i32) -> (i32, i32) {
    %c0_i32 = arith.constant 0 : i32
    %c0_i32_0 = arith.constant 0 : i32
    %c0_i32_1 = arith.constant 0 : i32
    return %c0_i32, %c0_i32_0 : i32, i32
  }
  func.func @transform_8(%arg0: i32) -> (i32, i32, i32) {
    %c0_i32 = arith.constant 0 : i32
    %c0_i32_0 = arith.constant 0 : i32
    %c0_i32_1 = arith.constant 0 : i32
    return %arg0, %c0_i32, %c0_i32_0 : i32, i32, i32
  }
}

</mosaic_0001>

<llo_original>
// kernel: decoder_forward.4
$region0: #{decoder_forward.4}
  #allocation0 [shape = 'u32[]', space=smem, size = 0x4, offset = 0x4, fixed_abs, tag = 'smem constant byte address 0x4 - core index']
  #allocation1 [shape = 'u32[144,128]{1,0:T(1,128)}', space=vmem, size = 0x12000, scoped, tag = 'internal scratch']
  %s0 = inlined_call_operand.vmem [shape: f32[2,8,32], index: 0, kind: input, shape index: {}]
  %s1 = inlined_call_operand.vmem [shape: f32[2,8,32], index: 1, kind: input, shape index: {}]
  %s2 = inlined_call_operand.vmem [shape: bf16[32,96], index: 2, kind: input, shape index: {}]
  %s3 = inlined_call_operand.vmem [shape: f32[1,96], index: 3, kind: input, shape index: {}]
  %s4 = inlined_call_operand.vmem [shape: bf16[32,32], index: 4, kind: input, shape index: {}]
  %s5 = inlined_call_operand.vmem [shape: f32[1,32], index: 5, kind: input, shape index: {}]
  %s6 = inlined_call_operand.vmem [shape: f32[1,32], index: 6, kind: input, shape index: {}]
  %s7 = inlined_call_operand.vmem [shape: f32[1,32], index: 7, kind: input, shape index: {}]
  %s8 = inlined_call_operand.vmem [shape: f32[2,8,32], index: 8, kind: output, shape index: {}]
  %s9 = sld [smem:[#allocation0]]
  $region65: #{decoder_forward.4} parent=0
    _
  %s11 = ssub.s32 1, %s9
  %s12 = scalar_select 0, %s11, %s9
  loop: start=0, step=1, limit=4
  $region2: #{decoder_forward.4} parent=0 // loop_pre_header
    _
  $region3: #{decoder_forward.4} parent=0 // loop_header
    %s14 = sphi 0, %s18
    %p15 = scmp.ge.s32.totalorder %s14, 4
    %s24 = sphi 0, %s26
    %s27 = sphi 0, %s24
    %s28 = sphi 0, %s27
    %s44 = sphi 0, %s28
    %s50 = sphi 0, %s52
    %s53 = sphi 0, %s50
    %s54 = sphi 0, %s53
    %s70 = sphi 0, %s54
    %s74 = sphi 0, %s74
    %s76 = sphi 0, %s74
    %s77 = sphi 0, %s76
    %s91 = sphi 0, %s77
    %s95 = sphi 0, %s95
    %s97 = sphi 0, %s95
    %s98 = sphi 0, %s97
    %s112 = sphi 0, %s98
    %s116 = sphi 0, %s116
    %s118 = sphi 0, %s116
    %s119 = sphi 0, %s118
    %s133 = sphi 0, %s119
    %s137 = sphi 0, %s137
    %s139 = sphi 0, %s137
    %s140 = sphi 0, %s139
    %s154 = sphi 0, %s140
    %s158 = sphi 0, %s158
    %s160 = sphi 0, %s158
    %s161 = sphi 0, %s160
    %s175 = sphi 0, %s161
    %s179 = sphi 0, %s179
    %s181 = sphi 0, %s179
    %s182 = sphi 0, %s181
    %s196 = sphi 0, %s182
    %s202 = sphi 0, %s204
    %s205 = sphi 0, %s202
    %s206 = sphi 0, %s205
    %s222 = sphi 0, %s206
  $region4: #{decoder_forward.4} parent=0 // loop_header_branch
    %17 = sbr.rel (%p15) target = $region8
  $region5: #{decoder_forward.4} parent=0 // loop_body
    %s19 = ssub.s32 %s14, 1
    %s20 = ssub.s32 %s14, 2
    %s21 = sadd.s32 %s14, 1
    %s22 = ssub.s32 %s14, %s21
    %p23 = scmp.eq.s32.totalorder %s22, 0
    %s25 = sadd.s32 %s24, 1
    %s26 = scalar_select %p23, %s24, %s25
    %p29 = pneg %p23
    %p30 = scmp.eq.s32.totalorder %s14, 1
    %p31 = por %p29, %p30
    %p32 = scmp.ne.s32.totalorder %s24, %s27
    %p33 = scmp.eq.s32.totalorder %s14, 0
    %p34 = por %p32, %p33
    %p35 = scmp.ne.s32.totalorder %s24, %s27
    %p36 = scmp.eq.s32.totalorder %s19, 1
    %p37 = por %p35, %p36
    %p38 = scmp.ne.s32.totalorder %s27, %s28
    %p39 = scmp.eq.s32.totalorder %s19, 0
    %p40 = por %p38, %p39
    %p41 = scmp.ne.s32.totalorder %s27, %s28
    %p42 = scmp.eq.s32.totalorder %s20, 1
    %p43 = por %p41, %p42
    %p45 = scmp.ne.s32.totalorder %s28, %s44
    %p46 = scmp.eq.s32.totalorder %s20, 0
    %p47 = por %p45, %p46
    %s48 = ssub.s32 %s14, %s21
    %p49 = scmp.eq.s32.totalorder %s48, 0
    %s51 = sadd.s32 %s50, 1
    %s52 = scalar_select %p49, %s50, %s51
    %p55 = pneg %p49
    %p56 = scmp.eq.s32.totalorder %s14, 1
    %p57 = por %p55, %p56
    %p58 = scmp.ne.s32.totalorder %s50, %s53
    %p59 = scmp.eq.s32.totalorder %s14, 0
    %p60 = por %p58, %p59
    %p61 = scmp.ne.s32.totalorder %s50, %s53
    %p62 = scmp.eq.s32.totalorder %s19, 1
    %p63 = por %p61, %p62
    %p64 = scmp.ne.s32.totalorder %s53, %s54
    %p65 = scmp.eq.s32.totalorder %s19, 0
    %p66 = por %p64, %p65
    %p67 = scmp.ne.s32.totalorder %s53, %s54
    %p68 = scmp.eq.s32.totalorder %s20, 1
    %p69 = por %p67, %p68
    %p71 = scmp.ne.s32.totalorder %s54, %s70
    %p72 = scmp.eq.s32.totalorder %s20, 0
    %p73 = por %p71, %p72
    %s75 = sadd.s32 %s74, 1
    %p78 = scmp.eq.s32.totalorder %s14, 1
    %p79 = scmp.ne.s32.totalorder %s74, %s76
    %p80 = scmp.eq.s32.totalorder %s14, 0
    %p81 = por %p79, %p80
    %p82 = scmp.ne.s32.totalorder %s74, %s76
    %p83 = scmp.eq.s32.totalorder %s19, 1
    %p84 = por %p82, %p83
    %p85 = scmp.ne.s32.totalorder %s76, %s77
    %p86 = scmp.eq.s32.totalorder %s19, 0
    %p87 = por %p85, %p86
    %p88 = scmp.ne.s32.totalorder %s76, %s77
    %p89 = scmp.eq.s32.totalorder %s20, 1
    %p90 = por %p88, %p89
    %p92 = scmp.ne.s32.totalorder %s77, %s91
    %p93 = scmp.eq.s32.totalorder %s20, 0
    %p94 = por %p92, %p93
    %s96 = sadd.s32 %s95, 1
    %p99 = scmp.eq.s32.totalorder %s14, 1
    %p100 = scmp.ne.s32.totalorder %s95, %s97
    %p101 = scmp.eq.s32.totalorder %s14, 0
    %p102 = por %p100, %p101
    %p103 = scmp.ne.s32.totalorder %s95, %s97
    %p104 = scmp.eq.s32.totalorder %s19, 1
    %p105 = por %p103, %p104
    %p106 = scmp.ne.s32.totalorder %s97, %s98
    %p107 = scmp.eq.s32.totalorder %s19, 0
    %p108 = por %p106, %p107
    %p109 = scmp.ne.s32.totalorder %s97, %s98
    %p110 = scmp.eq.s32.totalorder %s20, 1
    %p111 = por %p109, %p110
    %p113 = scmp.ne.s32.totalorder %s98, %s112
    %p114 = scmp.eq.s32.totalorder %s20, 0
    %p115 = por %p113, %p114
    %s117 = sadd.s32 %s116, 1
    %p120 = scmp.eq.s32.totalorder %s14, 1
    %p121 = scmp.ne.s32.totalorder %s116, %s118
    %p122 = scmp.eq.s32.totalorder %s14, 0
    %p123 = por %p121, %p122
    %p124 = scmp.ne.s32.totalorder %s116, %s118
    %p125 = scmp.eq.s32.totalorder %s19, 1
    %p126 = por %p124, %p125
    %p127 = scmp.ne.s32.totalorder %s118, %s119
    %p128 = scmp.eq.s32.totalorder %s19, 0
    %p129 = por %p127, %p128
    %p130 = scmp.ne.s32.totalorder %s118, %s119
    %p131 = scmp.eq.s32.totalorder %s20, 1
    %p132 = por %p130, %p131
    %p134 = scmp.ne.s32.totalorder %s119, %s133
    %p135 = scmp.eq.s32.totalorder %s20, 0
    %p136 = por %p134, %p135
    %s138 = sadd.s32 %s137, 1
    %p141 = scmp.eq.s32.totalorder %s14, 1
    %p142 = scmp.ne.s32.totalorder %s137, %s139
    %p143 = scmp.eq.s32.totalorder %s14, 0
    %p144 = por %p142, %p143
    %p145 = scmp.ne.s32.totalorder %s137, %s139
    %p146 = scmp.eq.s32.totalorder %s19, 1
    %p147 = por %p145, %p146
    %p148 = scmp.ne.s32.totalorder %s139, %s140
    %p149 = scmp.eq.s32.totalorder %s19, 0
    %p150 = por %p148, %p149
    %p151 = scmp.ne.s32.totalorder %s139, %s140
    %p152 = scmp.eq.s32.totalorder %s20, 1
    %p153 = por %p151, %p152
    %p155 = scmp.ne.s32.totalorder %s140, %s154
    %p156 = scmp.eq.s32.totalorder %s20, 0
    %p157 = por %p155, %p156
    %s159 = sadd.s32 %s158, 1
    %p162 = scmp.eq.s32.totalorder %s14, 1
    %p163 = scmp.ne.s32.totalorder %s158, %s160
    %p164 = scmp.eq.s32.totalorder %s14, 0
    %p165 = por %p163, %p164
    %p166 = scmp.ne.s32.totalorder %s158, %s160
    %p167 = scmp.eq.s32.totalorder %s19, 1
    %p168 = por %p166, %p167
    %p169 = scmp.ne.s32.totalorder %s160, %s161
    %p170 = scmp.eq.s32.totalorder %s19, 0
    %p171 = por %p169, %p170
    %p172 = scmp.ne.s32.totalorder %s160, %s161
    %p173 = scmp.eq.s32.totalorder %s20, 1
    %p174 = por %p172, %p173
    %p176 = scmp.ne.s32.totalorder %s161, %s175
    %p177 = scmp.eq.s32.totalorder %s20, 0
    %p178 = por %p176, %p177
    %s180 = sadd.s32 %s179, 1
    %p183 = scmp.eq.s32.totalorder %s14, 1
    %p184 = scmp.ne.s32.totalorder %s179, %s181
    %p185 = scmp.eq.s32.totalorder %s14, 0
    %p186 = por %p184, %p185
    %p187 = scmp.ne.s32.totalorder %s179, %s181
    %p188 = scmp.eq.s32.totalorder %s19, 1
    %p189 = por %p187, %p188
    %p190 = scmp.ne.s32.totalorder %s181, %s182
    %p191 = scmp.eq.s32.totalorder %s19, 0
    %p192 = por %p190, %p191
    %p193 = scmp.ne.s32.totalorder %s181, %s182
    %p194 = scmp.eq.s32.totalorder %s20, 1
    %p195 = por %p193, %p194
    %p197 = scmp.ne.s32.totalorder %s182, %s196
    %p198 = scmp.eq.s32.totalorder %s20, 0
    %p199 = por %p197, %p198
    %s200 = ssub.s32 %s14, %s21
    %p201 = scmp.eq.s32.totalorder %s200, 0
    %s203 = sadd.s32 %s202, 1
    %s204 = scalar_select %p201, %s202, %s203
    %p207 = pneg %p201
    %p208 = scmp.eq.s32.totalorder %s14, 1
    %p209 = por %p207, %p208
    %p210 = scmp.ne.s32.totalorder %s202, %s205
    %p211 = scmp.eq.s32.totalorder %s14, 0
    %p212 = por %p210, %p211
    %p213 = scmp.ne.s32.totalorder %s202, %s205
    %p214 = scmp.eq.s32.totalorder %s19, 1
    %p215 = por %p213, %p214
    %p216 = scmp.ne.s32.totalorder %s205, %s206
    %p217 = scmp.eq.s32.totalorder %s19, 0
    %p218 = por %p216, %p217
    %p219 = scmp.ne.s32.totalorder %s205, %s206
    %p220 = scmp.eq.s32.totalorder %s20, 1
    %p221 = por %p219, %p220
    %p223 = scmp.ne.s32.totalorder %s206, %s222
    %p224 = scmp.eq.s32.totalorder %s20, 0
    %p225 = por %p223, %p224
    %p226 = scmp.le.s32.totalorder 1, %s14
    %p227 = scmp.lt.s32.totalorder %s14, 3
    %p228 = pnand %p226, %p227
    %p229 = pneg %p228
    // Predicated region
    $region9: #{decoder_forward.4} parent=5 // pred_check
      _
    $region10: #{decoder_forward.4} parent=5 // pred_check_branch
      %231 = sbr.rel (%p228) target = $region12
    $region11: #{decoder_forward.4} parent=5 // pred_region
      %s232 = ssub.s32 %s14, 1
      // Predicated region
      $region13: #{decoder_forward.4} parent=11 // pred_check
        %p233 = pneg %p87
      $region14: #{decoder_forward.4} parent=11 // pred_check_branch
        %235 = sbr.rel (%p233) target = $region16
      $region15: #{decoder_forward.4} parent=11 // pred_region
        _
      $region16: #{decoder_forward.4} parent=11 // pred_fallthru
        _
      // Predicated region
      $region17: #{decoder_forward.4} parent=11 // pred_check
        %p236 = pneg %p108
      $region18: #{decoder_forward.4} parent=11 // pred_check_branch
        %238 = sbr.rel (%p236) target = $region20
      $region19: #{decoder_forward.4} parent=11 // pred_region
        _
      $region20: #{decoder_forward.4} parent=11 // pred_fallthru
        _
      // Predicated region
      $region21: #{decoder_forward.4} parent=11 // pred_check
        %p239 = pneg %p129
      $region22: #{decoder_forward.4} parent=11 // pred_check_branch
        %241 = sbr.rel (%p239) target = $region24
      $region23: #{decoder_forward.4} parent=11 // pred_region
        _
      $region24: #{decoder_forward.4} parent=11 // pred_fallthru
        _
      // Predicated region
      $region25: #{decoder_forward.4} parent=11 // pred_check
        %p242 = pneg %p150
      $region26: #{decoder_forward.4} parent=11 // pred_check_branch
        %244 = sbr.rel (%p242) target = $region28
      $region27: #{decoder_forward.4} parent=11 // pred_region
        _
      $region28: #{decoder_forward.4} parent=11 // pred_fallthru
        _
      // Predicated region
      $region29: #{decoder_forward.4} parent=11 // pred_check
        %p245 = pneg %p171
      $region30: #{decoder_forward.4} parent=11 // pred_check_branch
        %247 = sbr.rel (%p245) target = $region32
      $region31: #{decoder_forward.4} parent=11 // pred_region
        _
      $region32: #{decoder_forward.4} parent=11 // pred_fallthru
        _
      // Predicated region
      $region33: #{decoder_forward.4} parent=11 // pred_check
        %p248 = pneg %p192
      $region34: #{decoder_forward.4} parent=11 // pred_check_branch
        %250 = sbr.rel (%p248) target = $region36
      $region35: #{decoder_forward.4} parent=11 // pred_region
        _
      $region36: #{decoder_forward.4} parent=11 // pred_fallthru
        _
    $region12: #{decoder_forward.4} parent=5 // pred_fallthru
      _
    %p251 = scmp.lt.s32.totalorder %s14, 2
    // Predicated region
    $region37: #{decoder_forward.4} parent=5 // pred_check
      %p252 = pneg %p251
    $region38: #{decoder_forward.4} parent=5 // pred_check_branch
      %254 = sbr.rel (%p252) target = $region40
    $region39: #{decoder_forward.4} parent=5 // pred_region
      // Predicated region
      $region41: #{decoder_forward.4} parent=39 // pred_check
        %p255 = pneg %p34
      $region42: #{decoder_forward.4} parent=39 // pred_check_branch
        %257 = sbr.rel (%p255) target = $region44
      $region43: #{decoder_forward.4} parent=39 // pred_region
        %p258 = scmp.lt.s32.totalorder %s14, 1
        %s259 = scalar_select %p258, %s14, 1
        %s260 = smul.addr %s259, 8
        %s261 = scalar_lea.vmem %s0, %s260
      $region44: #{decoder_forward.4} parent=39 // pred_fallthru
        _
      // Predicated region
      $region45: #{decoder_forward.4} parent=39 // pred_check
        %p262 = pneg %p60
      $region46: #{decoder_forward.4} parent=39 // pred_check_branch
        %264 = sbr.rel (%p262) target = $region48
      $region47: #{decoder_forward.4} parent=39 // pred_region
        %p265 = scmp.lt.s32.totalorder %s14, 1
        %s266 = scalar_select %p265, %s14, 1
        %s267 = smul.addr %s266, 8
        %s268 = scalar_lea.vmem %s1, %s267
      $region48: #{decoder_forward.4} parent=39 // pred_fallthru
        _
    $region40: #{decoder_forward.4} parent=5 // pred_fallthru
      _
    %p269 = scmp.le.s32.totalorder 1, %s14
    %p270 = scmp.lt.s32.totalorder %s14, 3
    %p271 = pnand %p269, %p270
    %p272 = pneg %p271
    // Predicated region
    $region49: #{decoder_forward.4} parent=5 // pred_check
      _
    $region50: #{decoder_forward.4} parent=5 // pred_check_branch
      %274 = sbr.rel (%p271) target = $region52
    $region51: #{decoder_forward.4} parent=5 // pred_region
      %s275 = ssub.s32 %s14, 1
      %p276 = scmp.lt.s32.totalorder %s19, 1
      %s277 = scalar_select %p276, %s19, 1
      %s278 = smul.addr %s277, 8
      %s279 = scalar_lea.vmem %s0, %s278
      %p280 = pneg %p40
      %p281 = pneg %p37
      %p282 = scmp.lt.s32.totalorder %s19, 1
      %s283 = scalar_select %p282, %s19, 1
      %s284 = smul.addr %s283, 8
      %s285 = scalar_lea.vmem %s1, %s284
      %p286 = pneg %p66
      %p287 = pneg %p63
      %p288 = pneg %p87
      %p289 = pneg %p84
      %p290 = pneg %p108
      %p291 = pneg %p105
      %p292 = pneg %p129
      %p293 = pneg %p126
      %p294 = pneg %p150
      %p295 = pneg %p147
      %p296 = pneg %p171
      %p297 = pneg %p168
      %p298 = pneg %p192
      %p299 = pneg %p189
      %p300 = pneg %p218
      %p301 = pneg %p215
      %p302 = scmp.lt.s32.totalorder %s19, 1
      %s303 = scalar_select %p302, %s19, 1
      %s304 = smul.addr %s303, 8
      %s305 = scalar_lea.vmem %s8, %s304
      %p306 = scmp.lt.s32.totalorder %s19, 1
      %s307 = scalar_select %p306, %s19, 1
      %s308 = smul.addr %s307, 8
      %s309 = scalar_lea.vmem %s0, %s308
      %p310 = scmp.lt.s32.totalorder %s19, 1
      %s311 = scalar_select %p310, %s19, 1
      %s312 = smul.addr %s311, 8
      %s313 = scalar_lea.vmem %s1, %s312
      %p314 = scmp.lt.s32.totalorder %s19, 1
      %s315 = scalar_select %p314, %s19, 1
      %s316 = smul.addr %s315, 8
      %s317 = scalar_lea.vmem %s8, %s316
      %v319 = vld [vmem:[%s309] sm:$0xff]
      %v320 = vld [vmem:[%s313] sm:$0xff]
      %v321 = vpack.c.bf16 %v319, %v319
      %v322 = vld [vmem:[%s2] sm:$0xf]
      %v323 = vld [vmem:[%s2 + $0x4] sm:$0xf]
      %v324 = vld [vmem:[%s2 + $0x8] sm:$0xf]
      %v325 = vld [vmem:[%s2 + $0xc] sm:$0xf]
      %v326 = vld [vmem:[%s3] sm:$0x1]
      %v328 = vlaneseq
      %v329 = vshrl.u32 %v328, 7
      %v330 = vsub.s32 0, %v329
      %v331 = vrot.slane %v326, %v330
      %v337 = vunpack.c.l.b16 %v322
      %v338 = vunpack.c.l.b16 %v323
      %v339 = vunpack.c.l.b16 %v324
      %v340 = vunpack.c.l.b16 %v325
      %v341 = vpack.c.b16 %v338, %v337
      %v342 = vpack.c.b16 %v340, %v339
      %vm345 = vcmask 261120
      %v347 = vsel %vm345, %v321, 0
      %349 = vmatprep.subr.bf16.mxu0 0
      %350 = vmatpush1.bf16.msra.mxu0 %v341
      %351 = vmatprep.subr.bf16.mxu0 0
      %352 = vmatpush1.bf16.msra.mxu0 %v342
      %353 = vmatprep.subr.bf16.mxu0 0
      %354 = vmatpush1.bf16.msra.mxu0 0
      %355 = vmatprep.subr.bf16.mxu0 0
      %356 = vmatpush1.bf16.msra.mxu0 0
      %357 = vmatprep.subr.bf16.mxu0 0
      %358 = vmatpush1.bf16.msra.mxu0 0
      %359 = vmatprep.subr.bf16.mxu0 0
      %360 = vmatpush1.bf16.msra.mxu0 0
      %361 = vmatprep.subr.bf16.mxu0 0
      %362 = vmatpush1.bf16.msra.mxu0 0
      %363 = vmatprep.subr.bf16.mxu0 0
      %364 = vmatpush1.bf16.msra.mxu0 0
      %365 = vmatprep.subr.bf16.mxu0 0
      %366 = vmatpush1.bf16.msra.mxu0 0
      %367 = vmatprep.subr.bf16.mxu0 0
      %368 = vmatpush1.bf16.msra.mxu0 0
      %369 = vmatprep.subr.bf16.mxu0 0
      %370 = vmatpush1.bf16.msra.mxu0 0
      %371 = vmatprep.subr.bf16.mxu0 0
      %372 = vmatpush1.bf16.msra.mxu0 0
      %373 = vmatprep.subr.bf16.mxu0 0
      %374 = vmatpush1.bf16.msra.mxu0 0
      %375 = vmatprep.subr.bf16.mxu0 0
      %376 = vmatpush1.bf16.msra.mxu0 0
      %377 = vmatprep.subr.bf16.mxu0 0
      %378 = vmatpush1.bf16.msra.mxu0 0
      %379 = vmatprep.subr.bf16.mxu0 0
      %380 = vmatpush1.bf16.msra.mxu0 0
      %381 = vmatprep.mubr.bf16.mxu0 0
      %382 = vmatmul.mubr.bf16.gmra.mrb[0].mxu0 %v347
      %v383 = vpop.f32.mrb[0].mxu0
      %v384 = vadd.f32 %v331, %v383
      %v385 = vpop.f32.mrb[0].mxu0
      %v386 = vpop.f32.mrb[0].mxu0
      %v387 = vpop.f32.mrb[0].mxu0
      %388 = vdwg.mxu0
      %v389 = vpack.c.bf16 %v320, %v320
      %390 = vrot.lane.b32.xlu0 %v341, 96
      %v391 = vpop.permute.xlu0 %390
      %392 = vrot.lane.b32.xlu0 %v342, 96
      %v393 = vpop.permute.xlu0 %392
      %396 = vrot.lane.b32.xlu0 %v331, 96
      %v397 = vpop.permute.xlu0 %396
      %v400 = vsel %vm345, %v389, 0
      %402 = vmatprep.subr.bf16.mxu0 0
      %403 = vmatpush1.bf16.msra.mxu0 %v391
      %404 = vmatprep.subr.bf16.mxu0 0
      %405 = vmatpush1.bf16.msra.mxu0 %v393
      %406 = vmatprep.subr.bf16.mxu0 0
      %407 = vmatpush1.bf16.msra.mxu0 0
      %408 = vmatprep.subr.bf16.mxu0 0
      %409 = vmatpush1.bf16.msra.mxu0 0
      %410 = vmatprep.subr.bf16.mxu0 0
      %411 = vmatpush1.bf16.msra.mxu0 0
      %412 = vmatprep.subr.bf16.mxu0 0
      %413 = vmatpush1.bf16.msra.mxu0 0
      %414 = vmatprep.subr.bf16.mxu0 0
      %415 = vmatpush1.bf16.msra.mxu0 0
      %416 = vmatprep.subr.bf16.mxu0 0
      %417 = vmatpush1.bf16.msra.mxu0 0
      %418 = vmatprep.subr.bf16.mxu0 0
      %419 = vmatpush1.bf16.msra.mxu0 0
      %420 = vmatprep.subr.bf16.mxu0 0
      %421 = vmatpush1.bf16.msra.mxu0 0
      %422 = vmatprep.subr.bf16.mxu0 0
      %423 = vmatpush1.bf16.msra.mxu0 0
      %424 = vmatprep.subr.bf16.mxu0 0
      %425 = vmatpush1.bf16.msra.mxu0 0
      %426 = vmatprep.subr.bf16.mxu0 0
      %427 = vmatpush1.bf16.msra.mxu0 0
      %428 = vmatprep.subr.bf16.mxu0 0
      %429 = vmatpush1.bf16.msra.mxu0 0
      %430 = vmatprep.subr.bf16.mxu0 0
      %431 = vmatpush1.bf16.msra.mxu0 0
      %432 = vmatprep.subr.bf16.mxu0 0
      %433 = vmatpush1.bf16.msra.mxu0 0
      %434 = vmatprep.mubr.bf16.mxu0 0
      %435 = vmatmul.mubr.bf16.gmra.mrb[0].mxu0 %v400
      %v436 = vpop.f32.mrb[0].mxu0
      %v437 = vadd.f32 %v397, %v436
      %v438 = vpop.f32.mrb[0].mxu0
      %v439 = vpop.f32.mrb[0].mxu0
      %v440 = vpop.f32.mrb[0].mxu0
      %441 = vdwg.mxu0
      %v442 = vmul.f32 %v384, 0.5
      %v444 = vcombine.high %v442, %v442
      %v447 = vcombine.high %v437, %v437
      %v449 = vpack.c.bf16 %v442, %v442
      %v450 = vpack.c.bf16 %v444, %v444
      %v451 = vpack.c.bf16 %v437, %v437
      %v452 = vpack.c.bf16 %v447, %v447
      %vm453 = vcmask 64512
      %v455 = vsel %vm453, %v449, 0
      %v458 = vsel %vm453, %v451, 0
      %460 = vmatprep.subr.bf16.mxu0 0
      %461 = vmatpush1.bf16.xpose.msra.mxu0 %v458
      %462 = vmatprep.subr.bf16.mxu0 0
      %463 = vmatpush1.bf16.xpose.msra.mxu0 0
      %464 = vmatprep.subr.bf16.mxu0 0
      %465 = vmatpush1.bf16.xpose.msra.mxu0 0
      %466 = vmatprep.subr.bf16.mxu0 0
      %467 = vmatpush1.bf16.xpose.msra.mxu0 0
      %468 = vmatprep.subr.bf16.mxu0 0
      %469 = vmatpush1.bf16.xpose.msra.mxu0 0
      %470 = vmatprep.subr.bf16.mxu0 0
      %471 = vmatpush1.bf16.xpose.msra.mxu0 0
      %472 = vmatprep.subr.bf16.mxu0 0
      %473 = vmatpush1.bf16.xpose.msra.mxu0 0
      %474 = vmatprep.subr.bf16.mxu0 0
      %475 = vmatpush1.bf16.xpose.msra.mxu0 0
      %476 = vmatprep.subr.bf16.mxu0 0
      %477 = vmatpush1.bf16.xpose.msra.mxu0 0
      %478 = vmatprep.subr.bf16.mxu0 0
      %479 = vmatpush1.bf16.xpose.msra.mxu0 0
      %480 = vmatprep.subr.bf16.mxu0 0
      %481 = vmatpush1.bf16.xpose.msra.mxu0 0
      %482 = vmatprep.subr.bf16.mxu0 0
      %483 = vmatpush1.bf16.xpose.msra.mxu0 0
      %484 = vmatprep.subr.bf16.mxu0 0
      %485 = vmatpush1.bf16.xpose.msra.mxu0 0
      %486 = vmatprep.subr.bf16.mxu0 0
      %487 = vmatpush1.bf16.xpose.msra.mxu0 0
      %488 = vmatprep.subr.bf16.mxu0 0
      %489 = vmatpush1.bf16.xpose.msra.mxu0 0
      %490 = vmatprep.subr.bf16.mxu0 0
      %491 = vmatpush1.bf16.xpose.msra.mxu0 0
      %492 = vmatprep.mubr.bf16.mxu0 0
      %493 = vmatmul.mubr.bf16.gmra.mrb[0].mxu0 %v455
      %v494 = vpop.f32.mrb[0].mxu0
      %v495 = vadd.f32 0.0, %v494
      %v496 = vpop.f32.mrb[0].mxu0
      %v497 = vpop.f32.mrb[0].mxu0
      %v498 = vpop.f32.mrb[0].mxu0
      %499 = vdwg.mxu0
      %v501 = vsel %vm453, %v450, 0
      %v504 = vsel %vm453, %v452, 0
      %506 = vmatprep.subr.bf16.mxu0 0
      %507 = vmatpush1.bf16.xpose.msra.mxu0 %v504
      %508 = vmatprep.subr.bf16.mxu0 0
      %509 = vmatpush1.bf16.xpose.msra.mxu0 0
      %510 = vmatprep.subr.bf16.mxu0 0
      %511 = vmatpush1.bf16.xpose.msra.mxu0 0
      %512 = vmatprep.subr.bf16.mxu0 0
      %513 = vmatpush1.bf16.xpose.msra.mxu0 0
      %514 = vmatprep.subr.bf16.mxu0 0
      %515 = vmatpush1.bf16.xpose.msra.mxu0 0
      %516 = vmatprep.subr.bf16.mxu0 0
      %517 = vmatpush1.bf16.xpose.msra.mxu0 0
      %518 = vmatprep.subr.bf16.mxu0 0
      %519 = vmatpush1.bf16.xpose.msra.mxu0 0
      %520 = vmatprep.subr.bf16.mxu0 0
      %521 = vmatpush1.bf16.xpose.msra.mxu0 0
      %522 = vmatprep.subr.bf16.mxu0 0
      %523 = vmatpush1.bf16.xpose.msra.mxu0 0
      %524 = vmatprep.subr.bf16.mxu0 0
      %525 = vmatpush1.bf16.xpose.msra.mxu0 0
      %526 = vmatprep.subr.bf16.mxu0 0
      %527 = vmatpush1.bf16.xpose.msra.mxu0 0
      %528 = vmatprep.subr.bf16.mxu0 0
      %529 = vmatpush1.bf16.xpose.msra.mxu0 0
      %530 = vmatprep.subr.bf16.mxu0 0
      %531 = vmatpush1.bf16.xpose.msra.mxu0 0
      %532 = vmatprep.subr.bf16.mxu0 0
      %533 = vmatpush1.bf16.xpose.msra.mxu0 0
      %534 = vmatprep.subr.bf16.mxu0 0
      %535 = vmatpush1.bf16.xpose.msra.mxu0 0
      %536 = vmatprep.subr.bf16.mxu0 0
      %537 = vmatpush1.bf16.xpose.msra.mxu0 0
      %538 = vmatprep.mubr.bf16.mxu0 0
      %539 = vmatmul.mubr.bf16.gmra.mrb[0].mxu0 %v501
      %v540 = vpop.f32.mrb[0].mxu0
      %v541 = vadd.f32 0.0, %v540
      %v542 = vpop.f32.mrb[0].mxu0
      %v543 = vpop.f32.mrb[0].mxu0
      %v544 = vpop.f32.mrb[0].mxu0
      %545 = vdwg.mxu0
      %vm546 = vcmask 27648
      %v547 = vsel %vm546, %v495, -inf
      %548 = vmax.xlane.f32.xlu0 %v547
      %v549 = vpop.xlane.xlu0 %548
      %v550 = vsel %vm546, %v541, -inf
      %551 = vmax.xlane.f32.xlu0 %v550
      %v552 = vpop.xlane.xlu0 %551
      %v553 = vsub.f32 %v495, %v549
      %v554 = vsub.f32 %v541, %v552
      %v555 = vmul.f32 %v553, 1.442695
      %v556 = vpow.pop %v555
      %v557 = vmul.f32 %v554, 1.442695
      %v558 = vpow.pop %v557
      %v559 = vsel %vm546, %v556, 0.0
      %560 = vadd.xlane.f32.xlu0 %v559
      %v561 = vpop.xlane.xlu0 %560
      %v562 = vsel %vm546, %v558, 0.0
      %563 = vadd.xlane.f32.xlu0 %v562
      %v564 = vpop.xlane.xlu0 %563
      %v565 = vrcp.pop %v561
      %v566 = vrcp.pop %v564
      %v567 = vmul.f32 %v556, %v565
      %v568 = vmul.f32 %v558, %v566
      %v569 = vpack.c.bf16 %v567, %v567
      %v570 = vpack.c.bf16 %v568, %v568
      %572 = vrot.lane.b32.xlu0 %v451, 96
      %v573 = vpop.permute.xlu0 %572
      %vm574 = vcmask 31744
      %v576 = vsel %vm574, %v569, 0
      %vm578 = vcmask 1041408
      %v580 = vsel %vm578, %v573, 0
      %582 = vmatprep.subr.bf16.mxu0 0
      %583 = vmatpush1.bf16.msra.mxu0 %v580
      %584 = vmatprep.subr.bf16.mxu0 0
      %585 = vmatpush1.bf16.msra.mxu0 0
      %586 = vmatprep.subr.bf16.mxu0 0
      %587 = vmatpush1.bf16.msra.mxu0 0
      %588 = vmatprep.subr.bf16.mxu0 0
      %589 = vmatpush1.bf16.msra.mxu0 0
      %590 = vmatprep.subr.bf16.mxu0 0
      %591 = vmatpush1.bf16.msra.mxu0 0
      %592 = vmatprep.subr.bf16.mxu0 0
      %593 = vmatpush1.bf16.msra.mxu0 0
      %594 = vmatprep.subr.bf16.mxu0 0
      %595 = vmatpush1.bf16.msra.mxu0 0
      %596 = vmatprep.subr.bf16.mxu0 0
      %597 = vmatpush1.bf16.msra.mxu0 0
      %598 = vmatprep.subr.bf16.mxu0 0
      %599 = vmatpush1.bf16.msra.mxu0 0
      %600 = vmatprep.subr.bf16.mxu0 0
      %601 = vmatpush1.bf16.msra.mxu0 0
      %602 = vmatprep.subr.bf16.mxu0 0
      %603 = vmatpush1.bf16.msra.mxu0 0
      %604 = vmatprep.subr.bf16.mxu0 0
      %605 = vmatpush1.bf16.msra.mxu0 0
      %606 = vmatprep.subr.bf16.mxu0 0
      %607 = vmatpush1.bf16.msra.mxu0 0
      %608 = vmatprep.subr.bf16.mxu0 0
      %609 = vmatpush1.bf16.msra.mxu0 0
      %610 = vmatprep.subr.bf16.mxu0 0
      %611 = vmatpush1.bf16.msra.mxu0 0
      %612 = vmatprep.subr.bf16.mxu0 0
      %613 = vmatpush1.bf16.msra.mxu0 0
      %614 = vmatprep.mubr.bf16.mxu0 0
      %615 = vmatmul.mubr.bf16.gmra.mrb[0].mxu0 %v576
      %v616 = vpop.f32.mrb[0].mxu0
      %v617 = vadd.f32 0.0, %v616
      %v618 = vpop.f32.mrb[0].mxu0
      %v619 = vpop.f32.mrb[0].mxu0
      %v620 = vpop.f32.mrb[0].mxu0
      %621 = vdwg.mxu0
      %623 = vrot.lane.b32.xlu0 %v452, 96
      %v624 = vpop.permute.xlu0 %623
      %v626 = vsel %vm574, %v570, 0
      %v629 = vsel %vm578, %v624, 0
      %631 = vmatprep.subr.bf16.mxu0 0
      %632 = vmatpush1.bf16.msra.mxu0 %v629
      %633 = vmatprep.subr.bf16.mxu0 0
      %634 = vmatpush1.bf16.msra.mxu0 0
      %635 = vmatprep.subr.bf16.mxu0 0
      %636 = vmatpush1.bf16.msra.mxu0 0
      %637 = vmatprep.subr.bf16.mxu0 0
      %638 = vmatpush1.bf16.msra.mxu0 0
      %639 = vmatprep.subr.bf16.mxu0 0
      %640 = vmatpush1.bf16.msra.mxu0 0
      %641 = vmatprep.subr.bf16.mxu0 0
      %642 = vmatpush1.bf16.msra.mxu0 0
      %643 = vmatprep.subr.bf16.mxu0 0
      %644 = vmatpush1.bf16.msra.mxu0 0
      %645 = vmatprep.subr.bf16.mxu0 0
      %646 = vmatpush1.bf16.msra.mxu0 0
      %647 = vmatprep.subr.bf16.mxu0 0
      %648 = vmatpush1.bf16.msra.mxu0 0
      %649 = vmatprep.subr.bf16.mxu0 0
      %650 = vmatpush1.bf16.msra.mxu0 0
      %651 = vmatprep.subr.bf16.mxu0 0
      %652 = vmatpush1.bf16.msra.mxu0 0
      %653 = vmatprep.subr.bf16.mxu0 0
      %654 = vmatpush1.bf16.msra.mxu0 0
      %655 = vmatprep.subr.bf16.mxu0 0
      %656 = vmatpush1.bf16.msra.mxu0 0
      %657 = vmatprep.subr.bf16.mxu0 0
      %658 = vmatpush1.bf16.msra.mxu0 0
      %659 = vmatprep.subr.bf16.mxu0 0
      %660 = vmatpush1.bf16.msra.mxu0 0
      %661 = vmatprep.subr.bf16.mxu0 0
      %662 = vmatpush1.bf16.msra.mxu0 0
      %663 = vmatprep.mubr.bf16.mxu0 0
      %664 = vmatmul.mubr.bf16.gmra.mrb[0].mxu0 %v626
      %v665 = vpop.f32.mrb[0].mxu0
      %v666 = vadd.f32 0.0, %v665
      %v667 = vpop.f32.mrb[0].mxu0
      %v668 = vpop.f32.mrb[0].mxu0
      %v669 = vpop.f32.mrb[0].mxu0
      %670 = vdwg.mxu0
      %672 = vrot.lane.b32.xlu0 %v449, 120
      %v673 = vpop.permute.xlu0 %672
      %674 = vrot.lane.b32.xlu0 %v451, 120
      %v675 = vpop.permute.xlu0 %674
      %v677 = vsel %vm453, %v673, 0
      %v680 = vsel %vm453, %v675, 0
      %682 = vmatprep.subr.bf16.mxu0 0
      %683 = vmatpush1.bf16.xpose.msra.mxu0 %v680
      %684 = vmatprep.subr.bf16.mxu0 0
      %685 = vmatpush1.bf16.xpose.msra.mxu0 0
      %686 = vmatprep.subr.bf16.mxu0 0
      %687 = vmatpush1.bf16.xpose.msra.mxu0 0
      %688 = vmatprep.subr.bf16.mxu0 0
      %689 = vmatpush1.bf16.xpose.msra.mxu0 0
      %690 = vmatprep.subr.bf16.mxu0 0
      %691 = vmatpush1.bf16.xpose.msra.mxu0 0
      %692 = vmatprep.subr.bf16.mxu0 0
      %693 = vmatpush1.bf16.xpose.msra.mxu0 0
      %694 = vmatprep.subr.bf16.mxu0 0
      %695 = vmatpush1.bf16.xpose.msra.mxu0 0
      %696 = vmatprep.subr.bf16.mxu0 0
      %697 = vmatpush1.bf16.xpose.msra.mxu0 0
      %698 = vmatprep.subr.bf16.mxu0 0
      %699 = vmatpush1.bf16.xpose.msra.mxu0 0
      %700 = vmatprep.subr.bf16.mxu0 0
      %701 = vmatpush1.bf16.xpose.msra.mxu0 0
      %702 = vmatprep.subr.bf16.mxu0 0
      %703 = vmatpush1.bf16.xpose.msra.mxu0 0
      %704 = vmatprep.subr.bf16.mxu0 0
      %705 = vmatpush1.bf16.xpose.msra.mxu0 0
      %706 = vmatprep.subr.bf16.mxu0 0
      %707 = vmatpush1.bf16.xpose.msra.mxu0 0
      %708 = vmatprep.subr.bf16.mxu0 0
      %709 = vmatpush1.bf16.xpose.msra.mxu0 0
      %710 = vmatprep.subr.bf16.mxu0 0
      %711 = vmatpush1.bf16.xpose.msra.mxu0 0
      %712 = vmatprep.subr.bf16.mxu0 0
      %713 = vmatpush1.bf16.xpose.msra.mxu0 0
      %714 = vmatprep.mubr.bf16.mxu0 0
      %715 = vmatmul.mubr.bf16.gmra.mrb[0].mxu0 %v677
      %v716 = vpop.f32.mrb[0].mxu0
      %v717 = vadd.f32 0.0, %v716
      %v718 = vpop.f32.mrb[0].mxu0
      %v719 = vpop.f32.mrb[0].mxu0
      %v720 = vpop.f32.mrb[0].mxu0
      %721 = vdwg.mxu0
      %723 = vrot.lane.b32.xlu0 %v450, 120
      %v724 = vpop.permute.xlu0 %723
      %725 = vrot.lane.b32.xlu0 %v452, 120
      %v726 = vpop.permute.xlu0 %725
      %v728 = vsel %vm453, %v724, 0
      %v731 = vsel %vm453, %v726, 0
      %733 = vmatprep.subr.bf16.mxu0 0
      %734 = vmatpush1.bf16.xpose.msra.mxu0 %v731
      %735 = vmatprep.subr.bf16.mxu0 0
      %736 = vmatpush1.bf16.xpose.msra.mxu0 0
      %737 = vmatprep.subr.bf16.mxu0 0
      %738 = vmatpush1.bf16.xpose.msra.mxu0 0
      %739 = vmatprep.subr.bf16.mxu0 0
      %740 = vmatpush1.bf16.xpose.msra.mxu0 0
      %741 = vmatprep.subr.bf16.mxu0 0
      %742 = vmatpush1.bf16.xpose.msra.mxu0 0
      %743 = vmatprep.subr.bf16.mxu0 0
      %744 = vmatpush1.bf16.xpose.msra.mxu0 0
      %745 = vmatprep.subr.bf16.mxu0 0
      %746 = vmatpush1.bf16.xpose.msra.mxu0 0
      %747 = vmatprep.subr.bf16.mxu0 0
      %748 = vmatpush1.bf16.xpose.msra.mxu0 0
      %749 = vmatprep.subr.bf16.mxu0 0
      %750 = vmatpush1.bf16.xpose.msra.mxu0 0
      %751 = vmatprep.subr.bf16.mxu0 0
      %752 = vmatpush1.bf16.xpose.msra.mxu0 0
      %753 = vmatprep.subr.bf16.mxu0 0
      %754 = vmatpush1.bf16.xpose.msra.mxu0 0
      %755 = vmatprep.subr.bf16.mxu0 0
      %756 = vmatpush1.bf16.xpose.msra.mxu0 0
      %757 = vmatprep.subr.bf16.mxu0 0
      %758 = vmatpush1.bf16.xpose.msra.mxu0 0
      %759 = vmatprep.subr.bf16.mxu0 0
      %760 = vmatpush1.bf16.xpose.msra.mxu0 0
      %761 = vmatprep.subr.bf16.mxu0 0
      %762 = vmatpush1.bf16.xpose.msra.mxu0 0
      %763 = vmatprep.subr.bf16.mxu0 0
      %764 = vmatpush1.bf16.xpose.msra.mxu0 0
      %765 = vmatprep.mubr.bf16.mxu0 0
      %766 = vmatmul.mubr.bf16.gmra.mrb[0].mxu0 %v728
      %v767 = vpop.f32.mrb[0].mxu0
      %v768 = vadd.f32 0.0, %v767
      %v769 = vpop.f32.mrb[0].mxu0
      %v770 = vpop.f32.mrb[0].mxu0
      %v771 = vpop.f32.mrb[0].mxu0
      %772 = vdwg.mxu0
      %v773 = vsel %vm546, %v717, -inf
      %774 = vmax.xlane.f32.xlu0 %v773
      %v775 = vpop.xlane.xlu0 %774
      %v776 = vsel %vm546, %v768, -inf
      %777 = vmax.xlane.f32.xlu0 %v776
      %v778 = vpop.xlane.xlu0 %777
      %v779 = vsub.f32 %v717, %v775
      %v780 = vsub.f32 %v768, %v778
      %v781 = vmul.f32 %v779, 1.442695
      %v782 = vpow.pop %v781
      %v783 = vmul.f32 %v780, 1.442695
      %v784 = vpow.pop %v783
      %v785 = vsel %vm546, %v782, 0.0
      %786 = vadd.xlane.f32.xlu0 %v785
      %v787 = vpop.xlane.xlu0 %786
      %v788 = vsel %vm546, %v784, 0.0
      %789 = vadd.xlane.f32.xlu0 %v788
      %v790 = vpop.xlane.xlu0 %789
      %v791 = vrcp.pop %v787
      %v792 = vrcp.pop %v790
      %v793 = vmul.f32 %v782, %v791
      %v794 = vmul.f32 %v784, %v792
      %v795 = vpack.c.bf16 %v793, %v793
      %v796 = vpack.c.bf16 %v794, %v794
      %797 = vrot.lane.b32.xlu0 %v451, 88
      %v798 = vpop.permute.xlu0 %797
      %v800 = vsel %vm574, %v795, 0
      %v803 = vsel %vm578, %v798, 0
      %805 = vmatprep.subr.bf16.mxu0 0
      %806 = vmatpush1.bf16.msra.mxu0 %v803
      %807 = vmatprep.subr.bf16.mxu0 0
      %808 = vmatpush1.bf16.msra.mxu0 0
      %809 = vmatprep.subr.bf16.mxu0 0
      %810 = vmatpush1.bf16.msra.mxu0 0
      %811 = vmatprep.subr.bf16.mxu0 0
      %812 = vmatpush1.bf16.msra.mxu0 0
      %813 = vmatprep.subr.bf16.mxu0 0
      %814 = vmatpush1.bf16.msra.mxu0 0
      %815 = vmatprep.subr.bf16.mxu0 0
      %816 = vmatpush1.bf16.msra.mxu0 0
      %817 = vmatprep.subr.bf16.mxu0 0
      %818 = vmatpush1.bf16.msra.mxu0 0
      %819 = vmatprep.subr.bf16.mxu0 0
      %820 = vmatpush1.bf16.msra.mxu0 0
      %821 = vmatprep.subr.bf16.mxu0 0
      %822 = vmatpush1.bf16.msra.mxu0 0
      %823 = vmatprep.subr.bf16.mxu0 0
      %824 = vmatpush1.bf16.msra.mxu0 0
      %825 = vmatprep.subr.bf16.mxu0 0
      %826 = vmatpush1.bf16.msra.mxu0 0
      %827 = vmatprep.subr.bf16.mxu0 0
      %828 = vmatpush1.bf16.msra.mxu0 0
      %829 = vmatprep.subr.bf16.mxu0 0
      %830 = vmatpush1.bf16.msra.mxu0 0
      %831 = vmatprep.subr.bf16.mxu0 0
      %832 = vmatpush1.bf16.msra.mxu0 0
      %833 = vmatprep.subr.bf16.mxu0 0
      %834 = vmatpush1.bf16.msra.mxu0 0
      %835 = vmatprep.subr.bf16.mxu0 0
      %836 = vmatpush1.bf16.msra.mxu0 0
      %837 = vmatprep.mubr.bf16.mxu0 0
      %838 = vmatmul.mubr.bf16.gmra.mrb[0].mxu0 %v800
      %v839 = vpop.f32.mrb[0].mxu0
      %v840 = vadd.f32 0.0, %v839
      %v841 = vpop.f32.mrb[0].mxu0
      %v842 = vpop.f32.mrb[0].mxu0
      %v843 = vpop.f32.mrb[0].mxu0
      %844 = vdwg.mxu0
      %845 = vrot.lane.b32.xlu0 %v452, 88
      %v846 = vpop.permute.xlu0 %845
      %v848 = vsel %vm574, %v796, 0
      %v851 = vsel %vm578, %v846, 0
      %853 = vmatprep.subr.bf16.mxu0 0
      %854 = vmatpush1.bf16.msra.mxu0 %v851
      %855 = vmatprep.subr.bf16.mxu0 0
      %856 = vmatpush1.bf16.msra.mxu0 0
      %857 = vmatprep.subr.bf16.mxu0 0
      %858 = vmatpush1.bf16.msra.mxu0 0
      %859 = vmatprep.subr.bf16.mxu0 0
      %860 = vmatpush1.bf16.msra.mxu0 0
      %861 = vmatprep.subr.bf16.mxu0 0
      %862 = vmatpush1.bf16.msra.mxu0 0
      %863 = vmatprep.subr.bf16.mxu0 0
      %864 = vmatpush1.bf16.msra.mxu0 0
      %865 = vmatprep.subr.bf16.mxu0 0
      %866 = vmatpush1.bf16.msra.mxu0 0
      %867 = vmatprep.subr.bf16.mxu0 0
      %868 = vmatpush1.bf16.msra.mxu0 0
      %869 = vmatprep.subr.bf16.mxu0 0
      %870 = vmatpush1.bf16.msra.mxu0 0
      %871 = vmatprep.subr.bf16.mxu0 0
      %872 = vmatpush1.bf16.msra.mxu0 0
      %873 = vmatprep.subr.bf16.mxu0 0
      %874 = vmatpush1.bf16.msra.mxu0 0
      %875 = vmatprep.subr.bf16.mxu0 0
      %876 = vmatpush1.bf16.msra.mxu0 0
      %877 = vmatprep.subr.bf16.mxu0 0
      %878 = vmatpush1.bf16.msra.mxu0 0
      %879 = vmatprep.subr.bf16.mxu0 0
      %880 = vmatpush1.bf16.msra.mxu0 0
      %881 = vmatprep.subr.bf16.mxu0 0
      %882 = vmatpush1.bf16.msra.mxu0 0
      %883 = vmatprep.subr.bf16.mxu0 0
      %884 = vmatpush1.bf16.msra.mxu0 0
      %885 = vmatprep.mubr.bf16.mxu0 0
      %886 = vmatmul.mubr.bf16.gmra.mrb[0].mxu0 %v848
      %v887 = vpop.f32.mrb[0].mxu0
      %v888 = vadd.f32 0.0, %v887
      %v889 = vpop.f32.mrb[0].mxu0
      %v890 = vpop.f32.mrb[0].mxu0
      %v891 = vpop.f32.mrb[0].mxu0
      %892 = vdwg.mxu0
      %893 = vrot.lane.b32.xlu0 %v449, 112
      %v894 = vpop.permute.xlu0 %893
      %895 = vrot.lane.b32.xlu0 %v451, 112
      %v896 = vpop.permute.xlu0 %895
      %v898 = vsel %vm453, %v894, 0
      %v901 = vsel %vm453, %v896, 0
      %903 = vmatprep.subr.bf16.mxu0 0
      %904 = vmatpush1.bf16.xpose.msra.mxu0 %v901
      %905 = vmatprep.subr.bf16.mxu0 0
      %906 = vmatpush1.bf16.xpose.msra.mxu0 0
      %907 = vmatprep.subr.bf16.mxu0 0
      %908 = vmatpush1.bf16.xpose.msra.mxu0 0
      %909 = vmatprep.subr.bf16.mxu0 0
      %910 = vmatpush1.bf16.xpose.msra.mxu0 0
      %911 = vmatprep.subr.bf16.mxu0 0
      %912 = vmatpush1.bf16.xpose.msra.mxu0 0
      %913 = vmatprep.subr.bf16.mxu0 0
      %914 = vmatpush1.bf16.xpose.msra.mxu0 0
      %915 = vmatprep.subr.bf16.mxu0 0
      %916 = vmatpush1.bf16.xpose.msra.mxu0 0
      %917 = vmatprep.subr.bf16.mxu0 0
      %918 = vmatpush1.bf16.xpose.msra.mxu0 0
      %919 = vmatprep.subr.bf16.mxu0 0
      %920 = vmatpush1.bf16.xpose.msra.mxu0 0
      %921 = vmatprep.subr.bf16.mxu0 0
      %922 = vmatpush1.bf16.xpose.msra.mxu0 0
      %923 = vmatprep.subr.bf16.mxu0 0
      %924 = vmatpush1.bf16.xpose.msra.mxu0 0
      %925 = vmatprep.subr.bf16.mxu0 0
      %926 = vmatpush1.bf16.xpose.msra.mxu0 0
      %927 = vmatprep.subr.bf16.mxu0 0
      %928 = vmatpush1.bf16.xpose.msra.mxu0 0
      %929 = vmatprep.subr.bf16.mxu0 0
      %930 = vmatpush1.bf16.xpose.msra.mxu0 0
      %931 = vmatprep.subr.bf16.mxu0 0
      %932 = vmatpush1.bf16.xpose.msra.mxu0 0
      %933 = vmatprep.subr.bf16.mxu0 0
      %934 = vmatpush1.bf16.xpose.msra.mxu0 0
      %935 = vmatprep.mubr.bf16.mxu0 0
      %936 = vmatmul.mubr.bf16.gmra.mrb[0].mxu0 %v898
      %v937 = vpop.f32.mrb[0].mxu0
      %v938 = vadd.f32 0.0, %v937
      %v939 = vpop.f32.mrb[0].mxu0
      %v940 = vpop.f32.mrb[0].mxu0
      %v941 = vpop.f32.mrb[0].mxu0
      %942 = vdwg.mxu0
      %943 = vrot.lane.b32.xlu0 %v450, 112
      %v944 = vpop.permute.xlu0 %943
      %945 = vrot.lane.b32.xlu0 %v452, 112
      %v946 = vpop.permute.xlu0 %945
      %v948 = vsel %vm453, %v944, 0
      %v951 = vsel %vm453, %v946, 0
      %953 = vmatprep.subr.bf16.mxu0 0
      %954 = vmatpush1.bf16.xpose.msra.mxu0 %v951
      %955 = vmatprep.subr.bf16.mxu0 0
      %956 = vmatpush1.bf16.xpose.msra.mxu0 0
      %957 = vmatprep.subr.bf16.mxu0 0
      %958 = vmatpush1.bf16.xpose.msra.mxu0 0
      %959 = vmatprep.subr.bf16.mxu0 0
      %960 = vmatpush1.bf16.xpose.msra.mxu0 0
      %961 = vmatprep.subr.bf16.mxu0 0
      %962 = vmatpush1.bf16.xpose.msra.mxu0 0
      %963 = vmatprep.subr.bf16.mxu0 0
      %964 = vmatpush1.bf16.xpose.msra.mxu0 0
      %965 = vmatprep.subr.bf16.mxu0 0
      %966 = vmatpush1.bf16.xpose.msra.mxu0 0
      %967 = vmatprep.subr.bf16.mxu0 0
      %968 = vmatpush1.bf16.xpose.msra.mxu0 0
      %969 = vmatprep.subr.bf16.mxu0 0
      %970 = vmatpush1.bf16.xpose.msra.mxu0 0
      %971 = vmatprep.subr.bf16.mxu0 0
      %972 = vmatpush1.bf16.xpose.msra.mxu0 0
      %973 = vmatprep.subr.bf16.mxu0 0
      %974 = vmatpush1.bf16.xpose.msra.mxu0 0
      %975 = vmatprep.subr.bf16.mxu0 0
      %976 = vmatpush1.bf16.xpose.msra.mxu0 0
      %977 = vmatprep.subr.bf16.mxu0 0
      %978 = vmatpush1.bf16.xpose.msra.mxu0 0
      %979 = vmatprep.subr.bf16.mxu0 0
      %980 = vmatpush1.bf16.xpose.msra.mxu0 0
      %981 = vmatprep.subr.bf16.mxu0 0
      %982 = vmatpush1.bf16.xpose.msra.mxu0 0
      %983 = vmatprep.subr.bf16.mxu0 0
      %984 = vmatpush1.bf16.xpose.msra.mxu0 0
      %985 = vmatprep.mubr.bf16.mxu0 0
      %986 = vmatmul.mubr.bf16.gmra.mrb[0].mxu0 %v948
      %v987 = vpop.f32.mrb[0].mxu0
      %v988 = vadd.f32 0.0, %v987
      %v989 = vpop.f32.mrb[0].mxu0
      %v990 = vpop.f32.mrb[0].mxu0
      %v991 = vpop.f32.mrb[0].mxu0
      %992 = vdwg.mxu0
      %v993 = vsel %vm546, %v938, -inf
      %994 = vmax.xlane.f32.xlu0 %v993
      %v995 = vpop.xlane.xlu0 %994
      %v996 = vsel %vm546, %v988, -inf
      %997 = vmax.xlane.f32.xlu0 %v996
      %v998 = vpop.xlane.xlu0 %997
      %v999 = vsub.f32 %v938, %v995
      %v1000 = vsub.f32 %v988, %v998
      %v1001 = vmul.f32 %v999, 1.442695
      %v1002 = vpow.pop %v1001
      %v1003 = vmul.f32 %v1000, 1.442695
      %v1004 = vpow.pop %v1003
      %v1005 = vsel %vm546, %v1002, 0.0
      %1006 = vadd.xlane.f32.xlu0 %v1005
      %v1007 = vpop.xlane.xlu0 %1006
      %v1008 = vsel %vm546, %v1004, 0.0
      %1009 = vadd.xlane.f32.xlu0 %v1008
      %v1010 = vpop.xlane.xlu0 %1009
      %v1011 = vrcp.pop %v1007
      %v1012 = vrcp.pop %v1010
      %v1013 = vmul.f32 %v1002, %v1011
      %v1014 = vmul.f32 %v1004, %v1012
      %v1015 = vpack.c.bf16 %v1013, %v1013
      %v1016 = vpack.c.bf16 %v1014, %v1014
      %1017 = vrot.lane.b32.xlu0 %v451, 80
      %v1018 = vpop.permute.xlu0 %1017
      %v1020 = vsel %vm574, %v1015, 0
      %v1023 = vsel %vm578, %v1018, 0
      %1025 = vmatprep.subr.bf16.mxu0 0
      %1026 = vmatpush1.bf16.msra.mxu0 %v1023
      %1027 = vmatprep.subr.bf16.mxu0 0
      %1028 = vmatpush1.bf16.msra.mxu0 0
      %1029 = vmatprep.subr.bf16.mxu0 0
      %1030 = vmatpush1.bf16.msra.mxu0 0
      %1031 = vmatprep.subr.bf16.mxu0 0
      %1032 = vmatpush1.bf16.msra.mxu0 0
      %1033 = vmatprep.subr.bf16.mxu0 0
      %1034 = vmatpush1.bf16.msra.mxu0 0
      %1035 = vmatprep.subr.bf16.mxu0 0
      %1036 = vmatpush1.bf16.msra.mxu0 0
      %1037 = vmatprep.subr.bf16.mxu0 0
      %1038 = vmatpush1.bf16.msra.mxu0 0
      %1039 = vmatprep.subr.bf16.mxu0 0
      %1040 = vmatpush1.bf16.msra.mxu0 0
      %1041 = vmatprep.subr.bf16.mxu0 0
      %1042 = vmatpush1.bf16.msra.mxu0 0
      %1043 = vmatprep.subr.bf16.mxu0 0
      %1044 = vmatpush1.bf16.msra.mxu0 0
      %1045 = vmatprep.subr.bf16.mxu0 0
      %1046 = vmatpush1.bf16.msra.mxu0 0
      %1047 = vmatprep.subr.bf16.mxu0 0
      %1048 = vmatpush1.bf16.msra.mxu0 0
      %1049 = vmatprep.subr.bf16.mxu0 0
      %1050 = vmatpush1.bf16.msra.mxu0 0
      %1051 = vmatprep.subr.bf16.mxu0 0
      %1052 = vmatpush1.bf16.msra.mxu0 0
      %1053 = vmatprep.subr.bf16.mxu0 0
      %1054 = vmatpush1.bf16.msra.mxu0 0
      %1055 = vmatprep.subr.bf16.mxu0 0
      %1056 = vmatpush1.bf16.msra.mxu0 0
      %1057 = vmatprep.mubr.bf16.mxu0 0
      %1058 = vmatmul.mubr.bf16.gmra.mrb[0].mxu0 %v1020
      %v1059 = vpop.f32.mrb[0].mxu0
      %v1060 = vadd.f32 0.0, %v1059
      %v1061 = vpop.f32.mrb[0].mxu0
      %v1062 = vpop.f32.mrb[0].mxu0
      %v1063 = vpop.f32.mrb[0].mxu0
      %1064 = vdwg.mxu0
      %1065 = vrot.lane.b32.xlu0 %v452, 80
      %v1066 = vpop.permute.xlu0 %1065
      %v1068 = vsel %vm574, %v1016, 0
      %v1071 = vsel %vm578, %v1066, 0
      %1073 = vmatprep.subr.bf16.mxu0 0
      %1074 = vmatpush1.bf16.msra.mxu0 %v1071
      %1075 = vmatprep.subr.bf16.mxu0 0
      %1076 = vmatpush1.bf16.msra.mxu0 0
      %1077 = vmatprep.subr.bf16.mxu0 0
      %1078 = vmatpush1.bf16.msra.mxu0 0
      %1079 = vmatprep.subr.bf16.mxu0 0
      %1080 = vmatpush1.bf16.msra.mxu0 0
      %1081 = vmatprep.subr.bf16.mxu0 0
      %1082 = vmatpush1.bf16.msra.mxu0 0
      %1083 = vmatprep.subr.bf16.mxu0 0
      %1084 = vmatpush1.bf16.msra.mxu0 0
      %1085 = vmatprep.subr.bf16.mxu0 0
      %1086 = vmatpush1.bf16.msra.mxu0 0
      %1087 = vmatprep.subr.bf16.mxu0 0
      %1088 = vmatpush1.bf16.msra.mxu0 0
      %1089 = vmatprep.subr.bf16.mxu0 0
      %1090 = vmatpush1.bf16.msra.mxu0 0
      %1091 = vmatprep.subr.bf16.mxu0 0
      %1092 = vmatpush1.bf16.msra.mxu0 0
      %1093 = vmatprep.subr.bf16.mxu0 0
      %1094 = vmatpush1.bf16.msra.mxu0 0
      %1095 = vmatprep.subr.bf16.mxu0 0
      %1096 = vmatpush1.bf16.msra.mxu0 0
      %1097 = vmatprep.subr.bf16.mxu0 0
      %1098 = vmatpush1.bf16.msra.mxu0 0
      %1099 = vmatprep.subr.bf16.mxu0 0
      %1100 = vmatpush1.bf16.msra.mxu0 0
      %1101 = vmatprep.subr.bf16.mxu0 0
      %1102 = vmatpush1.bf16.msra.mxu0 0
      %1103 = vmatprep.subr.bf16.mxu0 0
      %1104 = vmatpush1.bf16.msra.mxu0 0
      %1105 = vmatprep.mubr.bf16.mxu0 0
      %1106 = vmatmul.mubr.bf16.gmra.mrb[0].mxu0 %v1068
      %v1107 = vpop.f32.mrb[0].mxu0
      %v1108 = vadd.f32 0.0, %v1107
      %v1109 = vpop.f32.mrb[0].mxu0
      %v1110 = vpop.f32.mrb[0].mxu0
      %v1111 = vpop.f32.mrb[0].mxu0
      %1112 = vdwg.mxu0
      %1113 = vrot.lane.b32.xlu0 %v449, 104
      %v1114 = vpop.permute.xlu0 %1113
      %1115 = vrot.lane.b32.xlu0 %v451, 104
      %v1116 = vpop.permute.xlu0 %1115
      %v1118 = vsel %vm453, %v1114, 0
      %v1121 = vsel %vm453, %v1116, 0
      %1123 = vmatprep.subr.bf16.mxu0 0
      %1124 = vmatpush1.bf16.xpose.msra.mxu0 %v1121
      %1125 = vmatprep.subr.bf16.mxu0 0
      %1126 = vmatpush1.bf16.xpose.msra.mxu0 0
      %1127 = vmatprep.subr.bf16.mxu0 0
      %1128 = vmatpush1.bf16.xpose.msra.mxu0 0
      %1129 = vmatprep.subr.bf16.mxu0 0
      %1130 = vmatpush1.bf16.xpose.msra.mxu0 0
      %1131 = vmatprep.subr.bf16.mxu0 0
      %1132 = vmatpush1.bf16.xpose.msra.mxu0 0
      %1133 = vmatprep.subr.bf16.mxu0 0
      %1134 = vmatpush1.bf16.xpose.msra.mxu0 0
      %1135 = vmatprep.subr.bf16.mxu0 0
      %1136 = vmatpush1.bf16.xpose.msra.mxu0 0
      %1137 = vmatprep.subr.bf16.mxu0 0
      %1138 = vmatpush1.bf16.xpose.msra.mxu0 0
      %1139 = vmatprep.subr.bf16.mxu0 0
      %1140 = vmatpush1.bf16.xpose.msra.mxu0 0
      %1141 = vmatprep.subr.bf16.mxu0 0
      %1142 = vmatpush1.bf16.xpose.msra.mxu0 0
      %1143 = vmatprep.subr.bf16.mxu0 0
      %1144 = vmatpush1.bf16.xpose.msra.mxu0 0
      %1145 = vmatprep.subr.bf16.mxu0 0
      %1146 = vmatpush1.bf16.xpose.msra.mxu0 0
      %1147 = vmatprep.subr.bf16.mxu0 0
      %1148 = vmatpush1.bf16.xpose.msra.mxu0 0
      %1149 = vmatprep.subr.bf16.mxu0 0
      %1150 = vmatpush1.bf16.xpose.msra.mxu0 0
      %1151 = vmatprep.subr.bf16.mxu0 0
      %1152 = vmatpush1.bf16.xpose.msra.mxu0 0
      %1153 = vmatprep.subr.bf16.mxu0 0
      %1154 = vmatpush1.bf16.xpose.msra.mxu0 0
      %1155 = vmatprep.mubr.bf16.mxu0 0
      %1156 = vmatmul.mubr.bf16.gmra.mrb[0].mxu0 %v1118
      %v1157 = vpop.f32.mrb[0].mxu0
      %v1158 = vadd.f32 0.0, %v1157
      %v1159 = vpop.f32.mrb[0].mxu0
      %v1160 = vpop.f32.mrb[0].mxu0
      %v1161 = vpop.f32.mrb[0].mxu0
      %1162 = vdwg.mxu0
      %1163 = vrot.lane.b32.xlu0 %v450, 104
      %v1164 = vpop.permute.xlu0 %1163
      %1165 = vrot.lane.b32.xlu0 %v452, 104
      %v1166 = vpop.permute.xlu0 %1165
      %v1168 = vsel %vm453, %v1164, 0
      %v1171 = vsel %vm453, %v1166, 0
      %1173 = vmatprep.subr.bf16.mxu0 0
      %1174 = vmatpush1.bf16.xpose.msra.mxu0 %v1171
      %1175 = vmatprep.subr.bf16.mxu0 0
      %1176 = vmatpush1.bf16.xpose.msra.mxu0 0
      %1177 = vmatprep.subr.bf16.mxu0 0
      %1178 = vmatpush1.bf16.xpose.msra.mxu0 0
      %1179 = vmatprep.subr.bf16.mxu0 0
      %1180 = vmatpush1.bf16.xpose.msra.mxu0 0
      %1181 = vmatprep.subr.bf16.mxu0 0
      %1182 = vmatpush1.bf16.xpose.msra.mxu0 0
      %1183 = vmatprep.subr.bf16.mxu0 0
      %1184 = vmatpush1.bf16.xpose.msra.mxu0 0
      %1185 = vmatprep.subr.bf16.mxu0 0
      %1186 = vmatpush1.bf16.xpose.msra.mxu0 0
      %1187 = vmatprep.subr.bf16.mxu0 0
      %1188 = vmatpush1.bf16.xpose.msra.mxu0 0
      %1189 = vmatprep.subr.bf16.mxu0 0
      %1190 = vmatpush1.bf16.xpose.msra.mxu0 0
      %1191 = vmatprep.subr.bf16.mxu0 0
      %1192 = vmatpush1.bf16.xpose.msra.mxu0 0
      %1193 = vmatprep.subr.bf16.mxu0 0
      %1194 = vmatpush1.bf16.xpose.msra.mxu0 0
      %1195 = vmatprep.subr.bf16.mxu0 0
      %1196 = vmatpush1.bf16.xpose.msra.mxu0 0
      %1197 = vmatprep.subr.bf16.mxu0 0
      %1198 = vmatpush1.bf16.xpose.msra.mxu0 0
      %1199 = vmatprep.subr.bf16.mxu0 0
      %1200 = vmatpush1.bf16.xpose.msra.mxu0 0
      %1201 = vmatprep.subr.bf16.mxu0 0
      %1202 = vmatpush1.bf16.xpose.msra.mxu0 0
      %1203 = vmatprep.subr.bf16.mxu0 0
      %1204 = vmatpush1.bf16.xpose.msra.mxu0 0
      %1205 = vmatprep.mubr.bf16.mxu0 0
      %1206 = vmatmul.mubr.bf16.gmra.mrb[0].mxu0 %v1168
      %v1207 = vpop.f32.mrb[0].mxu0
      %v1208 = vadd.f32 0.0, %v1207
      %v1209 = vpop.f32.mrb[0].mxu0
      %v1210 = vpop.f32.mrb[0].mxu0
      %v1211 = vpop.f32.mrb[0].mxu0
      %1212 = vdwg.mxu0
      %v1213 = vsel %vm546, %v1158, -inf
      %1214 = vmax.xlane.f32.xlu0 %v1213
      %v1215 = vpop.xlane.xlu0 %1214
      %v1216 = vsel %vm546, %v1208, -inf
      %1217 = vmax.xlane.f32.xlu0 %v1216
      %v1218 = vpop.xlane.xlu0 %1217
      %v1219 = vsub.f32 %v1158, %v1215
      %v1220 = vsub.f32 %v1208, %v1218
      %v1221 = vmul.f32 %v1219, 1.442695
      %v1222 = vpow.pop %v1221
      %v1223 = vmul.f32 %v1220, 1.442695
      %v1224 = vpow.pop %v1223
      %v1225 = vsel %vm546, %v1222, 0.0
      %1226 = vadd.xlane.f32.xlu0 %v1225
      %v1227 = vpop.xlane.xlu0 %1226
      %v1228 = vsel %vm546, %v1224, 0.0
      %1229 = vadd.xlane.f32.xlu0 %v1228
      %v1230 = vpop.xlane.xlu0 %1229
      %v1231 = vrcp.pop %v1227
      %v1232 = vrcp.pop %v1230
      %v1233 = vmul.f32 %v1222, %v1231
      %v1234 = vmul.f32 %v1224, %v1232
      %v1235 = vpack.c.bf16 %v1233, %v1233
      %v1236 = vpack.c.bf16 %v1234, %v1234
      %1237 = vrot.lane.b32.xlu0 %v451, 72
      %v1238 = vpop.permute.xlu0 %1237
      %v1240 = vsel %vm574, %v1235, 0
      %v1243 = vsel %vm578, %v1238, 0
      %1245 = vmatprep.subr.bf16.mxu0 0
      %1246 = vmatpush1.bf16.msra.mxu0 %v1243
      %1247 = vmatprep.subr.bf16.mxu0 0
      %1248 = vmatpush1.bf16.msra.mxu0 0
      %1249 = vmatprep.subr.bf16.mxu0 0
      %1250 = vmatpush1.bf16.msra.mxu0 0
      %1251 = vmatprep.subr.bf16.mxu0 0
      %1252 = vmatpush1.bf16.msra.mxu0 0
      %1253 = vmatprep.subr.bf16.mxu0 0
      %1254 = vmatpush1.bf16.msra.mxu0 0
      %1255 = vmatprep.subr.bf16.mxu0 0
      %1256 = vmatpush1.bf16.msra.mxu0 0
      %1257 = vmatprep.subr.bf16.mxu0 0
      %1258 = vmatpush1.bf16.msra.mxu0 0
      %1259 = vmatprep.subr.bf16.mxu0 0
      %1260 = vmatpush1.bf16.msra.mxu0 0
      %1261 = vmatprep.subr.bf16.mxu0 0
      %1262 = vmatpush1.bf16.msra.mxu0 0
      %1263 = vmatprep.subr.bf16.mxu0 0
      %1264 = vmatpush1.bf16.msra.mxu0 0
      %1265 = vmatprep.subr.bf16.mxu0 0
      %1266 = vmatpush1.bf16.msra.mxu0 0
      %1267 = vmatprep.subr.bf16.mxu0 0
      %1268 = vmatpush1.bf16.msra.mxu0 0
      %1269 = vmatprep.subr.bf16.mxu0 0
      %1270 = vmatpush1.bf16.msra.mxu0 0
      %1271 = vmatprep.subr.bf16.mxu0 0
      %1272 = vmatpush1.bf16.msra.mxu0 0
      %1273 = vmatprep.subr.bf16.mxu0 0
      %1274 = vmatpush1.bf16.msra.mxu0 0
      %1275 = vmatprep.subr.bf16.mxu0 0
      %1276 = vmatpush1.bf16.msra.mxu0 0
      %1277 = vmatprep.mubr.bf16.mxu0 0
      %1278 = vmatmul.mubr.bf16.gmra.mrb[0].mxu0 %v1240
      %v1279 = vpop.f32.mrb[0].mxu0
      %v1280 = vadd.f32 0.0, %v1279
      %v1281 = vpop.f32.mrb[0].mxu0
      %v1282 = vpop.f32.mrb[0].mxu0
      %v1283 = vpop.f32.mrb[0].mxu0
      %1284 = vdwg.mxu0
      %1285 = vrot.lane.b32.xlu0 %v452, 72
      %v1286 = vpop.permute.xlu0 %1285
      %v1288 = vsel %vm574, %v1236, 0
      %v1291 = vsel %vm578, %v1286, 0
      %1293 = vmatprep.subr.bf16.mxu0 0
      %1294 = vmatpush1.bf16.msra.mxu0 %v1291
      %1295 = vmatprep.subr.bf16.mxu0 0
      %1296 = vmatpush1.bf16.msra.mxu0 0
      %1297 = vmatprep.subr.bf16.mxu0 0
      %1298 = vmatpush1.bf16.msra.mxu0 0
      %1299 = vmatprep.subr.bf16.mxu0 0
      %1300 = vmatpush1.bf16.msra.mxu0 0
      %1301 = vmatprep.subr.bf16.mxu0 0
      %1302 = vmatpush1.bf16.msra.mxu0 0
      %1303 = vmatprep.subr.bf16.mxu0 0
      %1304 = vmatpush1.bf16.msra.mxu0 0
      %1305 = vmatprep.subr.bf16.mxu0 0
      %1306 = vmatpush1.bf16.msra.mxu0 0
      %1307 = vmatprep.subr.bf16.mxu0 0
      %1308 = vmatpush1.bf16.msra.mxu0 0
      %1309 = vmatprep.subr.bf16.mxu0 0
      %1310 = vmatpush1.bf16.msra.mxu0 0
      %1311 = vmatprep.subr.bf16.mxu0 0
      %1312 = vmatpush1.bf16.msra.mxu0 0
      %1313 = vmatprep.subr.bf16.mxu0 0
      %1314 = vmatpush1.bf16.msra.mxu0 0
      %1315 = vmatprep.subr.bf16.mxu0 0
      %1316 = vmatpush1.bf16.msra.mxu0 0
      %1317 = vmatprep.subr.bf16.mxu0 0
      %1318 = vmatpush1.bf16.msra.mxu0 0
      %1319 = vmatprep.subr.bf16.mxu0 0
      %1320 = vmatpush1.bf16.msra.mxu0 0
      %1321 = vmatprep.subr.bf16.mxu0 0
      %1322 = vmatpush1.bf16.msra.mxu0 0
      %1323 = vmatprep.subr.bf16.mxu0 0
      %1324 = vmatpush1.bf16.msra.mxu0 0
      %1325 = vmatprep.mubr.bf16.mxu0 0
      %1326 = vmatmul.mubr.bf16.gmra.mrb[0].mxu0 %v1288
      %v1327 = vpop.f32.mrb[0].mxu0
      %v1328 = vadd.f32 0.0, %v1327
      %v1329 = vpop.f32.mrb[0].mxu0
      %v1330 = vpop.f32.mrb[0].mxu0
      %v1331 = vpop.f32.mrb[0].mxu0
      %1332 = vdwg.mxu0
      %v1335 = vcombine.low %v617, %v666
      %v1339 = vcombine.low %v840, %v888
      %1340 = vrot.lane.b32.xlu0 %v1339, 8
      %v1341 = vpop.permute.xlu0 %1340
      %v1345 = vcombine.low %v1060, %v1108
      %1346 = vrot.lane.b32.xlu0 %v1345, 16
      %v1347 = vpop.permute.xlu0 %1346
      %v1351 = vcombine.low %v1280, %v1328
      %1352 = vrot.lane.b32.xlu0 %v1351, 24
      %v1353 = vpop.permute.xlu0 %1352
      %v1355 = vsel %vm453, %v1335, %v1341
      %vm1356 = vcmask 130048
      %v1357 = vsel %vm1356, %v1355, %v1347
      %vm1358 = vcmask 195584
      %v1359 = vsel %vm1358, %v1357, %v1353
      %v1360 = vpack.c.bf16 %v1359, %v1359
      %v1361 = vld [vmem:[%s4] sm:$0xf]
      %v1362 = vld [vmem:[%s4 + $0x4] sm:$0xf]
      %v1363 = vld [vmem:[%s4 + $0x8] sm:$0xf]
      %v1364 = vld [vmem:[%s4 + $0xc] sm:$0xf]
      %v1365 = vld [vmem:[%s5] sm:$0x1]
      %v1367 = vlaneseq
      %v1368 = vshrl.u32 %v1367, 7
      %v1369 = vsub.s32 0, %v1368
      %v1370 = vrot.slane %v1365, %v1369
      %v1376 = vunpack.c.l.b16 %v1361
      %v1377 = vunpack.c.l.b16 %v1362
      %v1378 = vunpack.c.l.b16 %v1363
      %v1379 = vunpack.c.l.b16 %v1364
      %v1380 = vpack.c.b16 %v1377, %v1376
      %v1381 = vpack.c.b16 %v1379, %v1378
      %v1385 = vsel %vm345, %v1360, 0
      %1387 = vmatprep.subr.bf16.mxu0 0
      %1388 = vmatpush1.bf16.msra.mxu0 %v1380
      %1389 = vmatprep.subr.bf16.mxu0 0
      %1390 = vmatpush1.bf16.msra.mxu0 %v1381
      %1391 = vmatprep.subr.bf16.mxu0 0
      %1392 = vmatpush1.bf16.msra.mxu0 0
      %1393 = vmatprep.subr.bf16.mxu0 0
      %1394 = vmatpush1.bf16.msra.mxu0 0
      %1395 = vmatprep.subr.bf16.mxu0 0
      %1396 = vmatpush1.bf16.msra.mxu0 0
      %1397 = vmatprep.subr.bf16.mxu0 0
      %1398 = vmatpush1.bf16.msra.mxu0 0
      %1399 = vmatprep.subr.bf16.mxu0 0
      %1400 = vmatpush1.bf16.msra.mxu0 0
      %1401 = vmatprep.subr.bf16.mxu0 0
      %1402 = vmatpush1.bf16.msra.mxu0 0
      %1403 = vmatprep.subr.bf16.mxu0 0
      %1404 = vmatpush1.bf16.msra.mxu0 0
      %1405 = vmatprep.subr.bf16.mxu0 0
      %1406 = vmatpush1.bf16.msra.mxu0 0
      %1407 = vmatprep.subr.bf16.mxu0 0
      %1408 = vmatpush1.bf16.msra.mxu0 0
      %1409 = vmatprep.subr.bf16.mxu0 0
      %1410 = vmatpush1.bf16.msra.mxu0 0
      %1411 = vmatprep.subr.bf16.mxu0 0
      %1412 = vmatpush1.bf16.msra.mxu0 0
      %1413 = vmatprep.subr.bf16.mxu0 0
      %1414 = vmatpush1.bf16.msra.mxu0 0
      %1415 = vmatprep.subr.bf16.mxu0 0
      %1416 = vmatpush1.bf16.msra.mxu0 0
      %1417 = vmatprep.subr.bf16.mxu0 0
      %1418 = vmatpush1.bf16.msra.mxu0 0
      %1419 = vmatprep.mubr.bf16.mxu0 0
      %1420 = vmatmul.mubr.bf16.gmra.mrb[0].mxu0 %v1385
      %v1421 = vpop.f32.mrb[0].mxu0
      %v1422 = vadd.f32 %v1370, %v1421
      %v1423 = vpop.f32.mrb[0].mxu0
      %v1424 = vpop.f32.mrb[0].mxu0
      %v1425 = vpop.f32.mrb[0].mxu0
      %1426 = vdwg.mxu0
      %v1427 = vadd.f32 %v1422, %v319
      %v1428 = vsel %vm345, %v1427, 0.0
      %1429 = vadd.xlane.f32.xlu0 %v1428
      %v1430 = vpop.xlane.xlu0 %1429
      %v1431 = vrcp.pop 32.0
      %v1432 = vmul.f32 %v1430, %v1431
      %v1433 = vsub.f32 %v1427, %v1432
      %v1434 = vmul.f32 %v1433, %v1433
      %v1435 = vsel %vm345, %v1434, 0.0
      %1436 = vadd.xlane.f32.xlu0 %v1435
      %v1437 = vpop.xlane.xlu0 %1436
      %v1438 = vmul.f32 %v1437, %v1431
      %v1439 = vadd.f32 %v1438, 1e-05
      %v1440 = vrsqrt.pop %v1439
      %v1441 = vmul.f32 %v1433, %v1440
      %v1442 = vld [vmem:[%s6] sm:$0x1]
      %v1444 = vlaneseq
      %v1445 = vshrl.u32 %v1444, 7
      %v1446 = vsub.s32 0, %v1445
      %v1447 = vrot.slane %v1442, %v1446
      %v1449 = vmul.f32 %v1441, %v1447
      %v1450 = vld [vmem:[%s7] sm:$0x1]
      %v1452 = vlaneseq
      %v1453 = vshrl.u32 %v1452, 7
      %v1454 = vsub.s32 0, %v1453
      %v1455 = vrot.slane %v1450, %v1454
      %v1457 = vadd.f32 %v1449, %v1455
      %1458 = vst.msk [vmem:[%s317] sm:$0xff] %vm345, %v1457
      %p1459 = scmp.lt.s32.totalorder %s19, 1
      %s1460 = scalar_select %p1459, %s19, 1
      %s1461 = smul.addr %s1460, 8
      %s1462 = scalar_lea.vmem %s8, %s1461
      // Predicated region
      $region53: #{decoder_forward.4} parent=51 // pred_check
        %p1463 = pneg %p215
      $region54: #{decoder_forward.4} parent=51 // pred_check_branch
        %1465 = sbr.rel (%p1463) target = $region56
      $region55: #{decoder_forward.4} parent=51 // pred_region
        _
      $region56: #{decoder_forward.4} parent=51 // pred_fallthru
        _
    $region52: #{decoder_forward.4} parent=5 // pred_fallthru
      _
    %p1466 = scmp.le.s32.totalorder 2, %s14
    // Predicated region
    $region57: #{decoder_forward.4} parent=5 // pred_check
      %p1467 = pneg %p1466
    $region58: #{decoder_forward.4} parent=5 // pred_check_branch
      %1469 = sbr.rel (%p1467) target = $region60
    $region59: #{decoder_forward.4} parent=5 // pred_region
      %s1470 = ssub.s32 %s14, 2
      // Predicated region
      $region61: #{decoder_forward.4} parent=59 // pred_check
        %p1471 = pneg %p221
      $region62: #{decoder_forward.4} parent=59 // pred_check_branch
        %1473 = sbr.rel (%p1471) target = $region64
      $region63: #{decoder_forward.4} parent=59 // pred_region
        %p1474 = scmp.lt.s32.totalorder %s20, 1
        %s1475 = scalar_select %p1474, %s20, 1
        %s1476 = smul.addr %s1475, 8
        %s1477 = scalar_lea.vmem %s8, %s1476
      $region64: #{decoder_forward.4} parent=59 // pred_fallthru
        _
    $region60: #{decoder_forward.4} parent=5 // pred_fallthru
      _
  $region6: #{decoder_forward.4} parent=0 // loop_footer
    %s18 = sadd.s32 1, %s14
  $region7: #{decoder_forward.4} parent=0 // loop_footer_branch
    %13 = sbr.rel target = $region3
  $region8: #{decoder_forward.4} parent=0 // loop_exit
    _

// kernel: decoder_forward.3
$region0: #{decoder_forward.3}
  #allocation0 [shape = 'u32[]', space=smem, size = 0x4, offset = 0x4, fixed_abs, tag = 'smem constant byte address 0x4 - core index']
  #allocation1 [shape = 'u32[144,128]{1,0:T(1,128)}', space=vmem, size = 0x12000, scoped, tag = 'internal scratch']
  %s0 = inlined_call_operand.vmem [shape: f32[2,8,32], index: 0, kind: input, shape index: {}, may-alias: {0,1}]
  %s1 = inlined_call_operand.vmem [shape: f32[2,8,32], index: 1, kind: input, shape index: {}, may-alias: {0,1}]
  %s2 = inlined_call_operand.vmem [shape: bf16[32,96], index: 2, kind: input, shape index: {}]
  %s3 = inlined_call_operand.vmem [shape: f32[1,96], index: 3, kind: input, shape index: {}]
  %s4 = inlined_call_operand.vmem [shape: bf16[32,32], index: 4, kind: input, shape index: {}]
  %s5 = inlined_call_operand.vmem [shape: f32[1,32], index: 5, kind: input, shape index: {}]
  %s6 = inlined_call_operand.vmem [shape: f32[1,32], index: 6, kind: input, shape index: {}]
  %s7 = inlined_call_operand.vmem [shape: f32[1,32], index: 7, kind: input, shape index: {}]
  %s8 = inlined_call_operand.vmem [shape: f32[2,8,32], index: 8, kind: output, shape index: {}]
  %s9 = sld [smem:[#allocation0]]
  $region65: #{decoder_forward.3} parent=0
    _
  %s11 = ssub.s32 1, %s9
  %s12 = scalar_select 0, %s11, %s9
  loop: start=0, step=1, limit=4
  $region2: #{decoder_forward.3} parent=0 // loop_pre_header
    _
  $region3: #{decoder_forward.3} parent=0 // loop_header
    %s14 = sphi 0, %s18
    %p15 = scmp.ge.s32.totalorder %s14, 4
    %s24 = sphi 0, %s26
    %s27 = sphi 0, %s24
    %s28 = sphi 0, %s27
    %s44 = sphi 0, %s28
    %s50 = sphi 0, %s52
    %s53 = sphi 0, %s50
    %s54 = sphi 0, %s53
    %s70 = sphi 0, %s54
    %s74 = sphi 0, %s74
    %s76 = sphi 0, %s74
    %s77 = sphi 0, %s76
    %s91 = sphi 0, %s77
    %s95 = sphi 0, %s95
    %s97 = sphi 0, %s95
    %s98 = sphi 0, %s97
    %s112 = sphi 0, %s98
    %s116 = sphi 0, %s116
    %s118 = sphi 0, %s116
    %s119 = sphi 0, %s118
    %s133 = sphi 0, %s119
    %s137 = sphi 0, %s137
    %s139 = sphi 0, %s137
    %s140 = sphi 0, %s139
    %s154 = sphi 0, %s140
    %s158 = sphi 0, %s158
    %s160 = sphi 0, %s158
    %s161 = sphi 0, %s160
    %s175 = sphi 0, %s161
    %s179 = sphi 0, %s179
    %s181 = sphi 0, %s179
    %s182 = sphi 0, %s181
    %s196 = sphi 0, %s182
    %s202 = sphi 0, %s204
    %s205 = sphi 0, %s202
    %s206 = sphi 0, %s205
    %s222 = sphi 0, %s206
  $region4: #{decoder_forward.3} parent=0 // loop_header_branch
    %17 = sbr.rel (%p15) target = $region8
  $region5: #{decoder_forward.3} parent=0 // loop_body
    %s19 = ssub.s32 %s14, 1
    %s20 = ssub.s32 %s14, 2
    %s21 = sadd.s32 %s14, 1
    %s22 = ssub.s32 %s14, %s21
    %p23 = scmp.eq.s32.totalorder %s22, 0
    %s25 = sadd.s32 %s24, 1
    %s26 = scalar_select %p23, %s24, %s25
    %p29 = pneg %p23
    %p30 = scmp.eq.s32.totalorder %s14, 1
    %p31 = por %p29, %p30
    %p32 = scmp.ne.s32.totalorder %s24, %s27
    %p33 = scmp.eq.s32.totalorder %s14, 0
    %p34 = por %p32, %p33
    %p35 = scmp.ne.s32.totalorder %s24, %s27
    %p36 = scmp.eq.s32.totalorder %s19, 1
    %p37 = por %p35, %p36
    %p38 = scmp.ne.s32.totalorder %s27, %s28
    %p39 = scmp.eq.s32.totalorder %s19, 0
    %p40 = por %p38, %p39
    %p41 = scmp.ne.s32.totalorder %s27, %s28
    %p42 = scmp.eq.s32.totalorder %s20, 1
    %p43 = por %p41, %p42
    %p45 = scmp.ne.s32.totalorder %s28, %s44
    %p46 = scmp.eq.s32.totalorder %s20, 0
    %p47 = por %p45, %p46
    %s48 = ssub.s32 %s14, %s21
    %p49 = scmp.eq.s32.totalorder %s48, 0
    %s51 = sadd.s32 %s50, 1
    %s52 = scalar_select %p49, %s50, %s51
    %p55 = pneg %p49
    %p56 = scmp.eq.s32.totalorder %s14, 1
    %p57 = por %p55, %p56
    %p58 = scmp.ne.s32.totalorder %s50, %s53
    %p59 = scmp.eq.s32.totalorder %s14, 0
    %p60 = por %p58, %p59
    %p61 = scmp.ne.s32.totalorder %s50, %s53
    %p62 = scmp.eq.s32.totalorder %s19, 1
    %p63 = por %p61, %p62
    %p64 = scmp.ne.s32.totalorder %s53, %s54
    %p65 = scmp.eq.s32.totalorder %s19, 0
    %p66 = por %p64, %p65
    %p67 = scmp.ne.s32.totalorder %s53, %s54
    %p68 = scmp.eq.s32.totalorder %s20, 1
    %p69 = por %p67, %p68
    %p71 = scmp.ne.s32.totalorder %s54, %s70
    %p72 = scmp.eq.s32.totalorder %s20, 0
    %p73 = por %p71, %p72
    %s75 = sadd.s32 %s74, 1
    %p78 = scmp.eq.s32.totalorder %s14, 1
    %p79 = scmp.ne.s32.totalorder %s74, %s76
    %p80 = scmp.eq.s32.totalorder %s14, 0
    %p81 = por %p79, %p80
    %p82 = scmp.ne.s32.totalorder %s74, %s76
    %p83 = scmp.eq.s32.totalorder %s19, 1
    %p84 = por %p82, %p83
    %p85 = scmp.ne.s32.totalorder %s76, %s77
    %p86 = scmp.eq.s32.totalorder %s19, 0
    %p87 = por %p85, %p86
    %p88 = scmp.ne.s32.totalorder %s76, %s77
    %p89 = scmp.eq.s32.totalorder %s20, 1
    %p90 = por %p88, %p89
    %p92 = scmp.ne.s32.totalorder %s77, %s91
    %p93 = scmp.eq.s32.totalorder %s20, 0
    %p94 = por %p92, %p93
    %s96 = sadd.s32 %s95, 1
    %p99 = scmp.eq.s32.totalorder %s14, 1
    %p100 = scmp.ne.s32.totalorder %s95, %s97
    %p101 = scmp.eq.s32.totalorder %s14, 0
    %p102 = por %p100, %p101
    %p103 = scmp.ne.s32.totalorder %s95, %s97
    %p104 = scmp.eq.s32.totalorder %s19, 1
    %p105 = por %p103, %p104
    %p106 = scmp.ne.s32.totalorder %s97, %s98
    %p107 = scmp.eq.s32.totalorder %s19, 0
    %p108 = por %p106, %p107
    %p109 = scmp.ne.s32.totalorder %s97, %s98
    %p110 = scmp.eq.s32.totalorder %s20, 1
    %p111 = por %p109, %p110
    %p113 = scmp.ne.s32.totalorder %s98, %s112
    %p114 = scmp.eq.s32.totalorder %s20, 0
    %p115 = por %p113, %p114
    %s117 = sadd.s32 %s116, 1
    %p120 = scmp.eq.s32.totalorder %s14, 1
    %p121 = scmp.ne.s32.totalorder %s116, %s118
    %p122 = scmp.eq.s32.totalorder %s14, 0
    %p123 = por %p121, %p122
    %p124 = scmp.ne.s32.totalorder %s116, %s118
    %p125 = scmp.eq.s32.totalorder %s19, 1
    %p126 = por %p124, %p125
    %p127 = scmp.ne.s32.totalorder %s118, %s119
    %p128 = scmp.eq.s32.totalorder %s19, 0
    %p129 = por %p127, %p128
    %p130 = scmp.ne.s32.totalorder %s118, %s119
    %p131 = scmp.eq.s32.totalorder %s20, 1
    %p132 = por %p130, %p131
    %p134 = scmp.ne.s32.totalorder %s119, %s133
    %p135 = scmp.eq.s32.totalorder %s20, 0
    %p136 = por %p134, %p135
    %s138 = sadd.s32 %s137, 1
    %p141 = scmp.eq.s32.totalorder %s14, 1
    %p142 = scmp.ne.s32.totalorder %s137, %s139
    %p143 = scmp.eq.s32.totalorder %s14, 0
    %p144 = por %p142, %p143
    %p145 = scmp.ne.s32.totalorder %s137, %s139
    %p146 = scmp.eq.s32.totalorder %s19, 1
    %p147 = por %p145, %p146
    %p148 = scmp.ne.s32.totalorder %s139, %s140
    %p149 = scmp.eq.s32.totalorder %s19, 0
    %p150 = por %p148, %p149
    %p151 = scmp.ne.s32.totalorder %s139, %s140
    %p152 = scmp.eq.s32.totalorder %s20, 1
    %p153 = por %p151, %p152
    %p155 = scmp.ne.s32.totalorder %s140, %s154
    %p156 = scmp.eq.s32.totalorder %s20, 0
    %p157 = por %p155, %p156
    %s159 = sadd.s32 %s158, 1
    %p162 = scmp.eq.s32.totalorder %s14, 1
    %p163 = scmp.ne.s32.totalorder %s158, %s160
    %p164 = scmp.eq.s32.totalorder %s14, 0
    %p165 = por %p163, %p164
    %p166 = scmp.ne.s32.totalorder %s158, %s160
    %p167 = scmp.eq.s32.totalorder %s19, 1
    %p168 = por %p166, %p167
    %p169 = scmp.ne.s32.totalorder %s160, %s161
    %p170 = scmp.eq.s32.totalorder %s19, 0
    %p171 = por %p169, %p170
    %p172 = scmp.ne.s32.totalorder %s160, %s161
    %p173 = scmp.eq.s32.totalorder %s20, 1
    %p174 = por %p172, %p173
    %p176 = scmp.ne.s32.totalorder %s161, %s175
    %p177 = scmp.eq.s32.totalorder %s20, 0
    %p178 = por %p176, %p177
    %s180 = sadd.s32 %s179, 1
    %p183 = scmp.eq.s32.totalorder %s14, 1
    %p184 = scmp.ne.s32.totalorder %s179, %s181
    %p185 = scmp.eq.s32.totalorder %s14, 0
    %p186 = por %p184, %p185
    %p187 = scmp.ne.s32.totalorder %s179, %s181
    %p188 = scmp.eq.s32.totalorder %s19, 1
    %p189 = por %p187, %p188
    %p190 = scmp.ne.s32.totalorder %s181, %s182
    %p191 = scmp.eq.s32.totalorder %s19, 0
    %p192 = por %p190, %p191
    %p193 = scmp.ne.s32.totalorder %s181, %s182
    %p194 = scmp.eq.s32.totalorder %s20, 1
    %p195 = por %p193, %p194
    %p197 = scmp.ne.s32.totalorder %s182, %s196
    %p198 = scmp.eq.s32.totalorder %s20, 0
    %p199 = por %p197, %p198
    %s200 = ssub.s32 %s14, %s21
    %p201 = scmp.eq.s32.totalorder %s200, 0
    %s203 = sadd.s32 %s202, 1
    %s204 = scalar_select %p201, %s202, %s203
    %p207 = pneg %p201
    %p208 = scmp.eq.s32.totalorder %s14, 1
    %p209 = por %p207, %p208
    %p210 = scmp.ne.s32.totalorder %s202, %s205
    %p211 = scmp.eq.s32.totalorder %s14, 0
    %p212 = por %p210, %p211
    %p213 = scmp.ne.s32.totalorder %s202, %s205
    %p214 = scmp.eq.s32.totalorder %s19, 1
    %p215 = por %p213, %p214
    %p216 = scmp.ne.s32.totalorder %s205, %s206
    %p217 = scmp.eq.s32.totalorder %s19, 0
    %p218 = por %p216, %p217
    %p219 = scmp.ne.s32.totalorder %s205, %s206
    %p220 = scmp.eq.s32.totalorder %s20, 1
    %p221 = por %p219, %p220
    %p223 = scmp.ne.s32.totalorder %s206, %s222
    %p224 = scmp.eq.s32.totalorder %s20, 0
    %p225 = por %p223, %p224
    %p226 = scmp.le.s32.totalorder 1, %s14
    %p227 = scmp.lt.s32.totalorder %s14, 3
    %p228 = pnand %p226, %p227
    %p229 = pneg %p228
    // Predicated region
    $region9: #{decoder_forward.3} parent=5 // pred_check
      _
    $region10: #{decoder_forward.3} parent=5 // pred_check_branch
      %231 = sbr.rel (%p228) target = $region12
    $region11: #{decoder_forward.3} parent=5 // pred_region
      %s232 = ssub.s32 %s14, 1
      // Predicated region
      $region13: #{decoder_forward.3} parent=11 // pred_check
        %p233 = pneg %p87
      $region14: #{decoder_forward.3} parent=11 // pred_check_branch
        %235 = sbr.rel (%p233) target = $region16
      $region15: #{decoder_forward.3} parent=11 // pred_region
        _
      $region16: #{decoder_forward.3} parent=11 // pred_fallthru
        _
      // Predicated region
      $region17: #{decoder_forward.3} parent=11 // pred_check
        %p236 = pneg %p108
      $region18: #{decoder_forward.3} parent=11 // pred_check_branch
        %238 = sbr.rel (%p236) target = $region20
      $region19: #{decoder_forward.3} parent=11 // pred_region
        _
      $region20: #{decoder_forward.3} parent=11 // pred_fallthru
        _
      // Predicated region
      $region21: #{decoder_forward.3} parent=11 // pred_check
        %p239 = pneg %p129
      $region22: #{decoder_forward.3} parent=11 // pred_check_branch
        %241 = sbr.rel (%p239) target = $region24
      $region23: #{decoder_forward.3} parent=11 // pred_region
        _
      $region24: #{decoder_forward.3} parent=11 // pred_fallthru
        _
      // Predicated region
      $region25: #{decoder_forward.3} parent=11 // pred_check
        %p242 = pneg %p150
      $region26: #{decoder_forward.3} parent=11 // pred_check_branch
        %244 = sbr.rel (%p242) target = $region28
      $region27: #{decoder_forward.3} parent=11 // pred_region
        _
      $region28: #{decoder_forward.3} parent=11 // pred_fallthru
        _
      // Predicated region
      $region29: #{decoder_forward.3} parent=11 // pred_check
        %p245 = pneg %p171
      $region30: #{decoder_forward.3} parent=11 // pred_check_branch
        %247 = sbr.rel (%p245) target = $region32
      $region31: #{decoder_forward.3} parent=11 // pred_region
        _
      $region32: #{decoder_forward.3} parent=11 // pred_fallthru
        _
      // Predicated region
      $region33: #{decoder_forward.3} parent=11 // pred_check
        %p248 = pneg %p192
      $region34: #{decoder_forward.3} parent=11 // pred_check_branch
        %250 = sbr.rel (%p248) target = $region36
      $region35: #{decoder_forward.3} parent=11 // pred_region
        _
      $region36: #{decoder_forward.3} parent=11 // pred_fallthru
        _
    $region12: #{decoder_forward.3} parent=5 // pred_fallthru
      _
    %p251 = scmp.lt.s32.totalorder %s14, 2
    // Predicated region
    $region37: #{decoder_forward.3} parent=5 // pred_check
      %p252 = pneg %p251
    $region38: #{decoder_forward.3} parent=5 // pred_check_branch
      %254 = sbr.rel (%p252) target = $region40
    $region39: #{decoder_forward.3} parent=5 // pred_region
      // Predicated region
      $region41: #{decoder_forward.3} parent=39 // pred_check
        %p255 = pneg %p34
      $region42: #{decoder_forward.3} parent=39 // pred_check_branch
        %257 = sbr.rel (%p255) target = $region44
      $region43: #{decoder_forward.3} parent=39 // pred_region
        %p258 = scmp.lt.s32.totalorder %s14, 1
        %s259 = scalar_select %p258, %s14, 1
        %s260 = smul.addr %s259, 8
        %s261 = scalar_lea.vmem %s0, %s260
      $region44: #{decoder_forward.3} parent=39 // pred_fallthru
        _
      // Predicated region
      $region45: #{decoder_forward.3} parent=39 // pred_check
        %p262 = pneg %p60
      $region46: #{decoder_forward.3} parent=39 // pred_check_branch
        %264 = sbr.rel (%p262) target = $region48
      $region47: #{decoder_forward.3} parent=39 // pred_region
        %p265 = scmp.lt.s32.totalorder %s14, 1
        %s266 = scalar_select %p265, %s14, 1
        %s267 = smul.addr %s266, 8
        %s268 = scalar_lea.vmem %s1, %s267
      $region48: #{decoder_forward.3} parent=39 // pred_fallthru
        _
    $region40: #{decoder_forward.3} parent=5 // pred_fallthru
      _
    %p269 = scmp.le.s32.totalorder 1, %s14
    %p270 = scmp.lt.s32.totalorder %s14, 3
    %p271 = pnand %p269, %p270
    %p272 = pneg %p271
    // Predicated region
    $region49: #{decoder_forward.3} parent=5 // pred_check
      _
    $region50: #{decoder_forward.3} parent=5 // pred_check_branch
      %274 = sbr.rel (%p271) target = $region52
    $region51: #{decoder_forward.3} parent=5 // pred_region
      %s275 = ssub.s32 %s14, 1
      %p276 = scmp.lt.s32.totalorder %s19, 1
      %s277 = scalar_select %p276, %s19, 1
      %s278 = smul.addr %s277, 8
      %s279 = scalar_lea.vmem %s0, %s278
      %p280 = pneg %p40
      %p281 = pneg %p37
      %p282 = scmp.lt.s32.totalorder %s19, 1
      %s283 = scalar_select %p282, %s19, 1
      %s284 = smul.addr %s283, 8
      %s285 = scalar_lea.vmem %s1, %s284
      %p286 = pneg %p66
      %p287 = pneg %p63
      %p288 = pneg %p87
      %p289 = pneg %p84
      %p290 = pneg %p108
      %p291 = pneg %p105
      %p292 = pneg %p129
      %p293 = pneg %p126
      %p294 = pneg %p150
      %p295 = pneg %p147
      %p296 = pneg %p171
      %p297 = pneg %p168
      %p298 = pneg %p192
      %p299 = pneg %p189
      %p300 = pneg %p218
      %p301 = pneg %p215
      %p302 = scmp.lt.s32.totalorder %s19, 1
      %s303 = scalar_select %p302, %s19, 1
      %s304 = smul.addr %s303, 8
      %s305 = scalar_lea.vmem %s8, %s304
      %p306 = scmp.lt.s32.totalorder %s19, 1
      %s307 = scalar_select %p306, %s19, 1
      %s308 = smul.addr %s307, 8
      %s309 = scalar_lea.vmem %s0, %s308
      %p310 = scmp.lt.s32.totalorder %s19, 1
      %s311 = scalar_select %p310, %s19, 1
      %s312 = smul.addr %s311, 8
      %s313 = scalar_lea.vmem %s1, %s312
      %p314 = scmp.lt.s32.totalorder %s19, 1
      %s315 = scalar_select %p314, %s19, 1
      %s316 = smul.addr %s315, 8
      %s317 = scalar_lea.vmem %s8, %s316
      %v319 = vld [vmem:[%s309] sm:$0xff]
      %v320 = vpack.c.bf16 %v319, %v319
      %v321 = vld [vmem:[%s2] sm:$0xf]
      %v322 = vld [vmem:[%s2 + $0x4] sm:$0xf]
      %v323 = vld [vmem:[%s2 + $0x8] sm:$0xf]
      %v324 = vld [vmem:[%s2 + $0xc] sm:$0xf]
      %v325 = vld [vmem:[%s3] sm:$0x1]
      %v327 = vlaneseq
      %v328 = vshrl.u32 %v327, 7
      %v329 = vsub.s32 0, %v328
      %v330 = vrot.slane %v325, %v329
      %v336 = vunpack.c.l.b16 %v321
      %v337 = vunpack.c.l.b16 %v322
      %v338 = vunpack.c.l.b16 %v323
      %v339 = vunpack.c.l.b16 %v324
      %v340 = vpack.c.b16 %v337, %v336
      %v341 = vpack.c.b16 %v339, %v338
      %vm344 = vcmask 261120
      %v346 = vsel %vm344, %v320, 0
      %348 = vmatprep.subr.bf16.mxu0 0
      %349 = vmatpush1.bf16.msra.mxu0 %v340
      %350 = vmatprep.subr.bf16.mxu0 0
      %351 = vmatpush1.bf16.msra.mxu0 %v341
      %352 = vmatprep.subr.bf16.mxu0 0
      %353 = vmatpush1.bf16.msra.mxu0 0
      %354 = vmatprep.subr.bf16.mxu0 0
      %355 = vmatpush1.bf16.msra.mxu0 0
      %356 = vmatprep.subr.bf16.mxu0 0
      %357 = vmatpush1.bf16.msra.mxu0 0
      %358 = vmatprep.subr.bf16.mxu0 0
      %359 = vmatpush1.bf16.msra.mxu0 0
      %360 = vmatprep.subr.bf16.mxu0 0
      %361 = vmatpush1.bf16.msra.mxu0 0
      %362 = vmatprep.subr.bf16.mxu0 0
      %363 = vmatpush1.bf16.msra.mxu0 0
      %364 = vmatprep.subr.bf16.mxu0 0
      %365 = vmatpush1.bf16.msra.mxu0 0
      %366 = vmatprep.subr.bf16.mxu0 0
      %367 = vmatpush1.bf16.msra.mxu0 0
      %368 = vmatprep.subr.bf16.mxu0 0
      %369 = vmatpush1.bf16.msra.mxu0 0
      %370 = vmatprep.subr.bf16.mxu0 0
      %371 = vmatpush1.bf16.msra.mxu0 0
      %372 = vmatprep.subr.bf16.mxu0 0
      %373 = vmatpush1.bf16.msra.mxu0 0
      %374 = vmatprep.subr.bf16.mxu0 0
      %375 = vmatpush1.bf16.msra.mxu0 0
      %376 = vmatprep.subr.bf16.mxu0 0
      %377 = vmatpush1.bf16.msra.mxu0 0
      %378 = vmatprep.subr.bf16.mxu0 0
      %379 = vmatpush1.bf16.msra.mxu0 0
      %380 = vmatprep.mubr.bf16.mxu0 0
      %381 = vmatmul.mubr.bf16.gmra.mrb[0].mxu0 %v346
      %v382 = vpop.f32.mrb[0].mxu0
      %v383 = vadd.f32 %v330, %v382
      %v384 = vpop.f32.mrb[0].mxu0
      %v385 = vpop.f32.mrb[0].mxu0
      %v386 = vpop.f32.mrb[0].mxu0
      %387 = vdwg.mxu0
      %v388 = vmul.f32 %v383, 0.5
      %v389 = vlaneseq
      %v390 = vshrl.u32 %v389, 7
      %v391 = vlaneseq
      %v392 = vand.u32 %v391, 127
      %vm393 = vcmp.gt.s32.totalorder %v392, %v390
      %v394 = vsel %vm393, -1e+30, 0.0
      %v396 = vcombine.high %v388, %v388
      %v399 = vcombine.high %v383, %v383
      %v401 = vpack.c.bf16 %v388, %v388
      %v402 = vpack.c.bf16 %v396, %v396
      %v403 = vpack.c.bf16 %v383, %v383
      %v404 = vpack.c.bf16 %v399, %v399
      %406 = vrot.lane.b32.xlu0 %v403, 96
      %v407 = vpop.permute.xlu0 %406
      %vm408 = vcmask 64512
      %v410 = vsel %vm408, %v401, 0
      %v413 = vsel %vm408, %v407, 0
      %415 = vmatprep.subr.bf16.mxu0 0
      %416 = vmatpush1.bf16.xpose.msra.mxu0 %v413
      %417 = vmatprep.subr.bf16.mxu0 0
      %418 = vmatpush1.bf16.xpose.msra.mxu0 0
      %419 = vmatprep.subr.bf16.mxu0 0
      %420 = vmatpush1.bf16.xpose.msra.mxu0 0
      %421 = vmatprep.subr.bf16.mxu0 0
      %422 = vmatpush1.bf16.xpose.msra.mxu0 0
      %423 = vmatprep.subr.bf16.mxu0 0
      %424 = vmatpush1.bf16.xpose.msra.mxu0 0
      %425 = vmatprep.subr.bf16.mxu0 0
      %426 = vmatpush1.bf16.xpose.msra.mxu0 0
      %427 = vmatprep.subr.bf16.mxu0 0
      %428 = vmatpush1.bf16.xpose.msra.mxu0 0
      %429 = vmatprep.subr.bf16.mxu0 0
      %430 = vmatpush1.bf16.xpose.msra.mxu0 0
      %431 = vmatprep.subr.bf16.mxu0 0
      %432 = vmatpush1.bf16.xpose.msra.mxu0 0
      %433 = vmatprep.subr.bf16.mxu0 0
      %434 = vmatpush1.bf16.xpose.msra.mxu0 0
      %435 = vmatprep.subr.bf16.mxu0 0
      %436 = vmatpush1.bf16.xpose.msra.mxu0 0
      %437 = vmatprep.subr.bf16.mxu0 0
      %438 = vmatpush1.bf16.xpose.msra.mxu0 0
      %439 = vmatprep.subr.bf16.mxu0 0
      %440 = vmatpush1.bf16.xpose.msra.mxu0 0
      %441 = vmatprep.subr.bf16.mxu0 0
      %442 = vmatpush1.bf16.xpose.msra.mxu0 0
      %443 = vmatprep.subr.bf16.mxu0 0
      %444 = vmatpush1.bf16.xpose.msra.mxu0 0
      %445 = vmatprep.subr.bf16.mxu0 0
      %446 = vmatpush1.bf16.xpose.msra.mxu0 0
      %447 = vmatprep.mubr.bf16.mxu0 0
      %448 = vmatmul.mubr.bf16.gmra.mrb[0].mxu0 %v410
      %v449 = vpop.f32.mrb[0].mxu0
      %v450 = vadd.f32 %v394, %v449
      %v451 = vpop.f32.mrb[0].mxu0
      %v452 = vpop.f32.mrb[0].mxu0
      %v453 = vpop.f32.mrb[0].mxu0
      %454 = vdwg.mxu0
      %456 = vrot.lane.b32.xlu0 %v404, 96
      %v457 = vpop.permute.xlu0 %456
      %v459 = vsel %vm408, %v402, 0
      %v462 = vsel %vm408, %v457, 0
      %464 = vmatprep.subr.bf16.mxu0 0
      %465 = vmatpush1.bf16.xpose.msra.mxu0 %v462
      %466 = vmatprep.subr.bf16.mxu0 0
      %467 = vmatpush1.bf16.xpose.msra.mxu0 0
      %468 = vmatprep.subr.bf16.mxu0 0
      %469 = vmatpush1.bf16.xpose.msra.mxu0 0
      %470 = vmatprep.subr.bf16.mxu0 0
      %471 = vmatpush1.bf16.xpose.msra.mxu0 0
      %472 = vmatprep.subr.bf16.mxu0 0
      %473 = vmatpush1.bf16.xpose.msra.mxu0 0
      %474 = vmatprep.subr.bf16.mxu0 0
      %475 = vmatpush1.bf16.xpose.msra.mxu0 0
      %476 = vmatprep.subr.bf16.mxu0 0
      %477 = vmatpush1.bf16.xpose.msra.mxu0 0
      %478 = vmatprep.subr.bf16.mxu0 0
      %479 = vmatpush1.bf16.xpose.msra.mxu0 0
      %480 = vmatprep.subr.bf16.mxu0 0
      %481 = vmatpush1.bf16.xpose.msra.mxu0 0
      %482 = vmatprep.subr.bf16.mxu0 0
      %483 = vmatpush1.bf16.xpose.msra.mxu0 0
      %484 = vmatprep.subr.bf16.mxu0 0
      %485 = vmatpush1.bf16.xpose.msra.mxu0 0
      %486 = vmatprep.subr.bf16.mxu0 0
      %487 = vmatpush1.bf16.xpose.msra.mxu0 0
      %488 = vmatprep.subr.bf16.mxu0 0
      %489 = vmatpush1.bf16.xpose.msra.mxu0 0
      %490 = vmatprep.subr.bf16.mxu0 0
      %491 = vmatpush1.bf16.xpose.msra.mxu0 0
      %492 = vmatprep.subr.bf16.mxu0 0
      %493 = vmatpush1.bf16.xpose.msra.mxu0 0
      %494 = vmatprep.subr.bf16.mxu0 0
      %495 = vmatpush1.bf16.xpose.msra.mxu0 0
      %496 = vmatprep.mubr.bf16.mxu0 0
      %497 = vmatmul.mubr.bf16.gmra.mrb[0].mxu0 %v459
      %v498 = vpop.f32.mrb[0].mxu0
      %v499 = vadd.f32 %v394, %v498
      %v500 = vpop.f32.mrb[0].mxu0
      %v501 = vpop.f32.mrb[0].mxu0
      %v502 = vpop.f32.mrb[0].mxu0
      %503 = vdwg.mxu0
      %vm504 = vcmask 27648
      %v505 = vsel %vm504, %v450, -inf
      %506 = vmax.xlane.f32.xlu0 %v505
      %v507 = vpop.xlane.xlu0 %506
      %v508 = vsel %vm504, %v499, -inf
      %509 = vmax.xlane.f32.xlu0 %v508
      %v510 = vpop.xlane.xlu0 %509
      %v511 = vsub.f32 %v450, %v507
      %v512 = vsub.f32 %v499, %v510
      %v513 = vmul.f32 %v511, 1.442695
      %v514 = vpow.pop %v513
      %v515 = vmul.f32 %v512, 1.442695
      %v516 = vpow.pop %v515
      %v517 = vsel %vm504, %v514, 0.0
      %518 = vadd.xlane.f32.xlu0 %v517
      %v519 = vpop.xlane.xlu0 %518
      %v520 = vsel %vm504, %v516, 0.0
      %521 = vadd.xlane.f32.xlu0 %v520
      %v522 = vpop.xlane.xlu0 %521
      %v523 = vrcp.pop %v519
      %v524 = vrcp.pop %v522
      %v525 = vmul.f32 %v514, %v523
      %v526 = vmul.f32 %v516, %v524
      %v527 = vpack.c.bf16 %v525, %v525
      %v528 = vpack.c.bf16 %v526, %v526
      %529 = vrot.lane.b32.xlu0 %v403, 64
      %v530 = vpop.permute.xlu0 %529
      %vm531 = vcmask 31744
      %v533 = vsel %vm531, %v527, 0
      %vm535 = vcmask 1041408
      %v537 = vsel %vm535, %v530, 0
      %539 = vmatprep.subr.bf16.mxu0 0
      %540 = vmatpush1.bf16.msra.mxu0 %v537
      %541 = vmatprep.subr.bf16.mxu0 0
      %542 = vmatpush1.bf16.msra.mxu0 0
      %543 = vmatprep.subr.bf16.mxu0 0
      %544 = vmatpush1.bf16.msra.mxu0 0
      %545 = vmatprep.subr.bf16.mxu0 0
      %546 = vmatpush1.bf16.msra.mxu0 0
      %547 = vmatprep.subr.bf16.mxu0 0
      %548 = vmatpush1.bf16.msra.mxu0 0
      %549 = vmatprep.subr.bf16.mxu0 0
      %550 = vmatpush1.bf16.msra.mxu0 0
      %551 = vmatprep.subr.bf16.mxu0 0
      %552 = vmatpush1.bf16.msra.mxu0 0
      %553 = vmatprep.subr.bf16.mxu0 0
      %554 = vmatpush1.bf16.msra.mxu0 0
      %555 = vmatprep.subr.bf16.mxu0 0
      %556 = vmatpush1.bf16.msra.mxu0 0
      %557 = vmatprep.subr.bf16.mxu0 0
      %558 = vmatpush1.bf16.msra.mxu0 0
      %559 = vmatprep.subr.bf16.mxu0 0
      %560 = vmatpush1.bf16.msra.mxu0 0
      %561 = vmatprep.subr.bf16.mxu0 0
      %562 = vmatpush1.bf16.msra.mxu0 0
      %563 = vmatprep.subr.bf16.mxu0 0
      %564 = vmatpush1.bf16.msra.mxu0 0
      %565 = vmatprep.subr.bf16.mxu0 0
      %566 = vmatpush1.bf16.msra.mxu0 0
      %567 = vmatprep.subr.bf16.mxu0 0
      %568 = vmatpush1.bf16.msra.mxu0 0
      %569 = vmatprep.subr.bf16.mxu0 0
      %570 = vmatpush1.bf16.msra.mxu0 0
      %571 = vmatprep.mubr.bf16.mxu0 0
      %572 = vmatmul.mubr.bf16.gmra.mrb[0].mxu0 %v533
      %v573 = vpop.f32.mrb[0].mxu0
      %v574 = vadd.f32 0.0, %v573
      %v575 = vpop.f32.mrb[0].mxu0
      %v576 = vpop.f32.mrb[0].mxu0
      %v577 = vpop.f32.mrb[0].mxu0
      %578 = vdwg.mxu0
      %579 = vrot.lane.b32.xlu0 %v404, 64
      %v580 = vpop.permute.xlu0 %579
      %v582 = vsel %vm531, %v528, 0
      %v585 = vsel %vm535, %v580, 0
      %587 = vmatprep.subr.bf16.mxu0 0
      %588 = vmatpush1.bf16.msra.mxu0 %v585
      %589 = vmatprep.subr.bf16.mxu0 0
      %590 = vmatpush1.bf16.msra.mxu0 0
      %591 = vmatprep.subr.bf16.mxu0 0
      %592 = vmatpush1.bf16.msra.mxu0 0
      %593 = vmatprep.subr.bf16.mxu0 0
      %594 = vmatpush1.bf16.msra.mxu0 0
      %595 = vmatprep.subr.bf16.mxu0 0
      %596 = vmatpush1.bf16.msra.mxu0 0
      %597 = vmatprep.subr.bf16.mxu0 0
      %598 = vmatpush1.bf16.msra.mxu0 0
      %599 = vmatprep.subr.bf16.mxu0 0
      %600 = vmatpush1.bf16.msra.mxu0 0
      %601 = vmatprep.subr.bf16.mxu0 0
      %602 = vmatpush1.bf16.msra.mxu0 0
      %603 = vmatprep.subr.bf16.mxu0 0
      %604 = vmatpush1.bf16.msra.mxu0 0
      %605 = vmatprep.subr.bf16.mxu0 0
      %606 = vmatpush1.bf16.msra.mxu0 0
      %607 = vmatprep.subr.bf16.mxu0 0
      %608 = vmatpush1.bf16.msra.mxu0 0
      %609 = vmatprep.subr.bf16.mxu0 0
      %610 = vmatpush1.bf16.msra.mxu0 0
      %611 = vmatprep.subr.bf16.mxu0 0
      %612 = vmatpush1.bf16.msra.mxu0 0
      %613 = vmatprep.subr.bf16.mxu0 0
      %614 = vmatpush1.bf16.msra.mxu0 0
      %615 = vmatprep.subr.bf16.mxu0 0
      %616 = vmatpush1.bf16.msra.mxu0 0
      %617 = vmatprep.subr.bf16.mxu0 0
      %618 = vmatpush1.bf16.msra.mxu0 0
      %619 = vmatprep.mubr.bf16.mxu0 0
      %620 = vmatmul.mubr.bf16.gmra.mrb[0].mxu0 %v582
      %v621 = vpop.f32.mrb[0].mxu0
      %v622 = vadd.f32 0.0, %v621
      %v623 = vpop.f32.mrb[0].mxu0
      %v624 = vpop.f32.mrb[0].mxu0
      %v625 = vpop.f32.mrb[0].mxu0
      %626 = vdwg.mxu0
      %628 = vrot.lane.b32.xlu0 %v401, 120
      %v629 = vpop.permute.xlu0 %628
      %630 = vrot.lane.b32.xlu0 %v403, 88
      %v631 = vpop.permute.xlu0 %630
      %v633 = vsel %vm408, %v629, 0
      %v636 = vsel %vm408, %v631, 0
      %638 = vmatprep.subr.bf16.mxu0 0
      %639 = vmatpush1.bf16.xpose.msra.mxu0 %v636
      %640 = vmatprep.subr.bf16.mxu0 0
      %641 = vmatpush1.bf16.xpose.msra.mxu0 0
      %642 = vmatprep.subr.bf16.mxu0 0
      %643 = vmatpush1.bf16.xpose.msra.mxu0 0
      %644 = vmatprep.subr.bf16.mxu0 0
      %645 = vmatpush1.bf16.xpose.msra.mxu0 0
      %646 = vmatprep.subr.bf16.mxu0 0
      %647 = vmatpush1.bf16.xpose.msra.mxu0 0
      %648 = vmatprep.subr.bf16.mxu0 0
      %649 = vmatpush1.bf16.xpose.msra.mxu0 0
      %650 = vmatprep.subr.bf16.mxu0 0
      %651 = vmatpush1.bf16.xpose.msra.mxu0 0
      %652 = vmatprep.subr.bf16.mxu0 0
      %653 = vmatpush1.bf16.xpose.msra.mxu0 0
      %654 = vmatprep.subr.bf16.mxu0 0
      %655 = vmatpush1.bf16.xpose.msra.mxu0 0
      %656 = vmatprep.subr.bf16.mxu0 0
      %657 = vmatpush1.bf16.xpose.msra.mxu0 0
      %658 = vmatprep.subr.bf16.mxu0 0
      %659 = vmatpush1.bf16.xpose.msra.mxu0 0
      %660 = vmatprep.subr.bf16.mxu0 0
      %661 = vmatpush1.bf16.xpose.msra.mxu0 0
      %662 = vmatprep.subr.bf16.mxu0 0
      %663 = vmatpush1.bf16.xpose.msra.mxu0 0
      %664 = vmatprep.subr.bf16.mxu0 0
      %665 = vmatpush1.bf16.xpose.msra.mxu0 0
      %666 = vmatprep.subr.bf16.mxu0 0
      %667 = vmatpush1.bf16.xpose.msra.mxu0 0
      %668 = vmatprep.subr.bf16.mxu0 0
      %669 = vmatpush1.bf16.xpose.msra.mxu0 0
      %670 = vmatprep.mubr.bf16.mxu0 0
      %671 = vmatmul.mubr.bf16.gmra.mrb[0].mxu0 %v633
      %v672 = vpop.f32.mrb[0].mxu0
      %v673 = vadd.f32 %v394, %v672
      %v674 = vpop.f32.mrb[0].mxu0
      %v675 = vpop.f32.mrb[0].mxu0
      %v676 = vpop.f32.mrb[0].mxu0
      %677 = vdwg.mxu0
      %679 = vrot.lane.b32.xlu0 %v402, 120
      %v680 = vpop.permute.xlu0 %679
      %681 = vrot.lane.b32.xlu0 %v404, 88
      %v682 = vpop.permute.xlu0 %681
      %v684 = vsel %vm408, %v680, 0
      %v687 = vsel %vm408, %v682, 0
      %689 = vmatprep.subr.bf16.mxu0 0
      %690 = vmatpush1.bf16.xpose.msra.mxu0 %v687
      %691 = vmatprep.subr.bf16.mxu0 0
      %692 = vmatpush1.bf16.xpose.msra.mxu0 0
      %693 = vmatprep.subr.bf16.mxu0 0
      %694 = vmatpush1.bf16.xpose.msra.mxu0 0
      %695 = vmatprep.subr.bf16.mxu0 0
      %696 = vmatpush1.bf16.xpose.msra.mxu0 0
      %697 = vmatprep.subr.bf16.mxu0 0
      %698 = vmatpush1.bf16.xpose.msra.mxu0 0
      %699 = vmatprep.subr.bf16.mxu0 0
      %700 = vmatpush1.bf16.xpose.msra.mxu0 0
      %701 = vmatprep.subr.bf16.mxu0 0
      %702 = vmatpush1.bf16.xpose.msra.mxu0 0
      %703 = vmatprep.subr.bf16.mxu0 0
      %704 = vmatpush1.bf16.xpose.msra.mxu0 0
      %705 = vmatprep.subr.bf16.mxu0 0
      %706 = vmatpush1.bf16.xpose.msra.mxu0 0
      %707 = vmatprep.subr.bf16.mxu0 0
      %708 = vmatpush1.bf16.xpose.msra.mxu0 0
      %709 = vmatprep.subr.bf16.mxu0 0
      %710 = vmatpush1.bf16.xpose.msra.mxu0 0
      %711 = vmatprep.subr.bf16.mxu0 0
      %712 = vmatpush1.bf16.xpose.msra.mxu0 0
      %713 = vmatprep.subr.bf16.mxu0 0
      %714 = vmatpush1.bf16.xpose.msra.mxu0 0
      %715 = vmatprep.subr.bf16.mxu0 0
      %716 = vmatpush1.bf16.xpose.msra.mxu0 0
      %717 = vmatprep.subr.bf16.mxu0 0
      %718 = vmatpush1.bf16.xpose.msra.mxu0 0
      %719 = vmatprep.subr.bf16.mxu0 0
      %720 = vmatpush1.bf16.xpose.msra.mxu0 0
      %721 = vmatprep.mubr.bf16.mxu0 0
      %722 = vmatmul.mubr.bf16.gmra.mrb[0].mxu0 %v684
      %v723 = vpop.f32.mrb[0].mxu0
      %v724 = vadd.f32 %v394, %v723
      %v725 = vpop.f32.mrb[0].mxu0
      %v726 = vpop.f32.mrb[0].mxu0
      %v727 = vpop.f32.mrb[0].mxu0
      %728 = vdwg.mxu0
      %v729 = vsel %vm504, %v673, -inf
      %730 = vmax.xlane.f32.xlu0 %v729
      %v731 = vpop.xlane.xlu0 %730
      %v732 = vsel %vm504, %v724, -inf
      %733 = vmax.xlane.f32.xlu0 %v732
      %v734 = vpop.xlane.xlu0 %733
      %v735 = vsub.f32 %v673, %v731
      %v736 = vsub.f32 %v724, %v734
      %v737 = vmul.f32 %v735, 1.442695
      %v738 = vpow.pop %v737
      %v739 = vmul.f32 %v736, 1.442695
      %v740 = vpow.pop %v739
      %v741 = vsel %vm504, %v738, 0.0
      %742 = vadd.xlane.f32.xlu0 %v741
      %v743 = vpop.xlane.xlu0 %742
      %v744 = vsel %vm504, %v740, 0.0
      %745 = vadd.xlane.f32.xlu0 %v744
      %v746 = vpop.xlane.xlu0 %745
      %v747 = vrcp.pop %v743
      %v748 = vrcp.pop %v746
      %v749 = vmul.f32 %v738, %v747
      %v750 = vmul.f32 %v740, %v748
      %v751 = vpack.c.bf16 %v749, %v749
      %v752 = vpack.c.bf16 %v750, %v750
      %753 = vrot.lane.b32.xlu0 %v403, 56
      %v754 = vpop.permute.xlu0 %753
      %v756 = vsel %vm531, %v751, 0
      %v759 = vsel %vm535, %v754, 0
      %761 = vmatprep.subr.bf16.mxu0 0
      %762 = vmatpush1.bf16.msra.mxu0 %v759
      %763 = vmatprep.subr.bf16.mxu0 0
      %764 = vmatpush1.bf16.msra.mxu0 0
      %765 = vmatprep.subr.bf16.mxu0 0
      %766 = vmatpush1.bf16.msra.mxu0 0
      %767 = vmatprep.subr.bf16.mxu0 0
      %768 = vmatpush1.bf16.msra.mxu0 0
      %769 = vmatprep.subr.bf16.mxu0 0
      %770 = vmatpush1.bf16.msra.mxu0 0
      %771 = vmatprep.subr.bf16.mxu0 0
      %772 = vmatpush1.bf16.msra.mxu0 0
      %773 = vmatprep.subr.bf16.mxu0 0
      %774 = vmatpush1.bf16.msra.mxu0 0
      %775 = vmatprep.subr.bf16.mxu0 0
      %776 = vmatpush1.bf16.msra.mxu0 0
      %777 = vmatprep.subr.bf16.mxu0 0
      %778 = vmatpush1.bf16.msra.mxu0 0
      %779 = vmatprep.subr.bf16.mxu0 0
      %780 = vmatpush1.bf16.msra.mxu0 0
      %781 = vmatprep.subr.bf16.mxu0 0
      %782 = vmatpush1.bf16.msra.mxu0 0
      %783 = vmatprep.subr.bf16.mxu0 0
      %784 = vmatpush1.bf16.msra.mxu0 0
      %785 = vmatprep.subr.bf16.mxu0 0
      %786 = vmatpush1.bf16.msra.mxu0 0
      %787 = vmatprep.subr.bf16.mxu0 0
      %788 = vmatpush1.bf16.msra.mxu0 0
      %789 = vmatprep.subr.bf16.mxu0 0
      %790 = vmatpush1.bf16.msra.mxu0 0
      %791 = vmatprep.subr.bf16.mxu0 0
      %792 = vmatpush1.bf16.msra.mxu0 0
      %793 = vmatprep.mubr.bf16.mxu0 0
      %794 = vmatmul.mubr.bf16.gmra.mrb[0].mxu0 %v756
      %v795 = vpop.f32.mrb[0].mxu0
      %v796 = vadd.f32 0.0, %v795
      %v797 = vpop.f32.mrb[0].mxu0
      %v798 = vpop.f32.mrb[0].mxu0
      %v799 = vpop.f32.mrb[0].mxu0
      %800 = vdwg.mxu0
      %801 = vrot.lane.b32.xlu0 %v404, 56
      %v802 = vpop.permute.xlu0 %801
      %v804 = vsel %vm531, %v752, 0
      %v807 = vsel %vm535, %v802, 0
      %809 = vmatprep.subr.bf16.mxu0 0
      %810 = vmatpush1.bf16.msra.mxu0 %v807
      %811 = vmatprep.subr.bf16.mxu0 0
      %812 = vmatpush1.bf16.msra.mxu0 0
      %813 = vmatprep.subr.bf16.mxu0 0
      %814 = vmatpush1.bf16.msra.mxu0 0
      %815 = vmatprep.subr.bf16.mxu0 0
      %816 = vmatpush1.bf16.msra.mxu0 0
      %817 = vmatprep.subr.bf16.mxu0 0
      %818 = vmatpush1.bf16.msra.mxu0 0
      %819 = vmatprep.subr.bf16.mxu0 0
      %820 = vmatpush1.bf16.msra.mxu0 0
      %821 = vmatprep.subr.bf16.mxu0 0
      %822 = vmatpush1.bf16.msra.mxu0 0
      %823 = vmatprep.subr.bf16.mxu0 0
      %824 = vmatpush1.bf16.msra.mxu0 0
      %825 = vmatprep.subr.bf16.mxu0 0
      %826 = vmatpush1.bf16.msra.mxu0 0
      %827 = vmatprep.subr.bf16.mxu0 0
      %828 = vmatpush1.bf16.msra.mxu0 0
      %829 = vmatprep.subr.bf16.mxu0 0
      %830 = vmatpush1.bf16.msra.mxu0 0
      %831 = vmatprep.subr.bf16.mxu0 0
      %832 = vmatpush1.bf16.msra.mxu0 0
      %833 = vmatprep.subr.bf16.mxu0 0
      %834 = vmatpush1.bf16.msra.mxu0 0
      %835 = vmatprep.subr.bf16.mxu0 0
      %836 = vmatpush1.bf16.msra.mxu0 0
      %837 = vmatprep.subr.bf16.mxu0 0
      %838 = vmatpush1.bf16.msra.mxu0 0
      %839 = vmatprep.subr.bf16.mxu0 0
      %840 = vmatpush1.bf16.msra.mxu0 0
      %841 = vmatprep.mubr.bf16.mxu0 0
      %842 = vmatmul.mubr.bf16.gmra.mrb[0].mxu0 %v804
      %v843 = vpop.f32.mrb[0].mxu0
      %v844 = vadd.f32 0.0, %v843
      %v845 = vpop.f32.mrb[0].mxu0
      %v846 = vpop.f32.mrb[0].mxu0
      %v847 = vpop.f32.mrb[0].mxu0
      %848 = vdwg.mxu0
      %849 = vrot.lane.b32.xlu0 %v401, 112
      %v850 = vpop.permute.xlu0 %849
      %851 = vrot.lane.b32.xlu0 %v403, 80
      %v852 = vpop.permute.xlu0 %851
      %v854 = vsel %vm408, %v850, 0
      %v857 = vsel %vm408, %v852, 0
      %859 = vmatprep.subr.bf16.mxu0 0
      %860 = vmatpush1.bf16.xpose.msra.mxu0 %v857
      %861 = vmatprep.subr.bf16.mxu0 0
      %862 = vmatpush1.bf16.xpose.msra.mxu0 0
      %863 = vmatprep.subr.bf16.mxu0 0
      %864 = vmatpush1.bf16.xpose.msra.mxu0 0
      %865 = vmatprep.subr.bf16.mxu0 0
      %866 = vmatpush1.bf16.xpose.msra.mxu0 0
      %867 = vmatprep.subr.bf16.mxu0 0
      %868 = vmatpush1.bf16.xpose.msra.mxu0 0
      %869 = vmatprep.subr.bf16.mxu0 0
      %870 = vmatpush1.bf16.xpose.msra.mxu0 0
      %871 = vmatprep.subr.bf16.mxu0 0
      %872 = vmatpush1.bf16.xpose.msra.mxu0 0
      %873 = vmatprep.subr.bf16.mxu0 0
      %874 = vmatpush1.bf16.xpose.msra.mxu0 0
      %875 = vmatprep.subr.bf16.mxu0 0
      %876 = vmatpush1.bf16.xpose.msra.mxu0 0
      %877 = vmatprep.subr.bf16.mxu0 0
      %878 = vmatpush1.bf16.xpose.msra.mxu0 0
      %879 = vmatprep.subr.bf16.mxu0 0
      %880 = vmatpush1.bf16.xpose.msra.mxu0 0
      %881 = vmatprep.subr.bf16.mxu0 0
      %882 = vmatpush1.bf16.xpose.msra.mxu0 0
      %883 = vmatprep.subr.bf16.mxu0 0
      %884 = vmatpush1.bf16.xpose.msra.mxu0 0
      %885 = vmatprep.subr.bf16.mxu0 0
      %886 = vmatpush1.bf16.xpose.msra.mxu0 0
      %887 = vmatprep.subr.bf16.mxu0 0
      %888 = vmatpush1.bf16.xpose.msra.mxu0 0
      %889 = vmatprep.subr.bf16.mxu0 0
      %890 = vmatpush1.bf16.xpose.msra.mxu0 0
      %891 = vmatprep.mubr.bf16.mxu0 0
      %892 = vmatmul.mubr.bf16.gmra.mrb[0].mxu0 %v854
      %v893 = vpop.f32.mrb[0].mxu0
      %v894 = vadd.f32 %v394, %v893
      %v895 = vpop.f32.mrb[0].mxu0
      %v896 = vpop.f32.mrb[0].mxu0
      %v897 = vpop.f32.mrb[0].mxu0
      %898 = vdwg.mxu0
      %899 = vrot.lane.b32.xlu0 %v402, 112
      %v900 = vpop.permute.xlu0 %899
      %901 = vrot.lane.b32.xlu0 %v404, 80
      %v902 = vpop.permute.xlu0 %901
      %v904 = vsel %vm408, %v900, 0
      %v907 = vsel %vm408, %v902, 0
      %909 = vmatprep.subr.bf16.mxu0 0
      %910 = vmatpush1.bf16.xpose.msra.mxu0 %v907
      %911 = vmatprep.subr.bf16.mxu0 0
      %912 = vmatpush1.bf16.xpose.msra.mxu0 0
      %913 = vmatprep.subr.bf16.mxu0 0
      %914 = vmatpush1.bf16.xpose.msra.mxu0 0
      %915 = vmatprep.subr.bf16.mxu0 0
      %916 = vmatpush1.bf16.xpose.msra.mxu0 0
      %917 = vmatprep.subr.bf16.mxu0 0
      %918 = vmatpush1.bf16.xpose.msra.mxu0 0
      %919 = vmatprep.subr.bf16.mxu0 0
      %920 = vmatpush1.bf16.xpose.msra.mxu0 0
      %921 = vmatprep.subr.bf16.mxu0 0
      %922 = vmatpush1.bf16.xpose.msra.mxu0 0
      %923 = vmatprep.subr.bf16.mxu0 0
      %924 = vmatpush1.bf16.xpose.msra.mxu0 0
      %925 = vmatprep.subr.bf16.mxu0 0
      %926 = vmatpush1.bf16.xpose.msra.mxu0 0
      %927 = vmatprep.subr.bf16.mxu0 0
      %928 = vmatpush1.bf16.xpose.msra.mxu0 0
      %929 = vmatprep.subr.bf16.mxu0 0
      %930 = vmatpush1.bf16.xpose.msra.mxu0 0
      %931 = vmatprep.subr.bf16.mxu0 0
      %932 = vmatpush1.bf16.xpose.msra.mxu0 0
      %933 = vmatprep.subr.bf16.mxu0 0
      %934 = vmatpush1.bf16.xpose.msra.mxu0 0
      %935 = vmatprep.subr.bf16.mxu0 0
      %936 = vmatpush1.bf16.xpose.msra.mxu0 0
      %937 = vmatprep.subr.bf16.mxu0 0
      %938 = vmatpush1.bf16.xpose.msra.mxu0 0
      %939 = vmatprep.subr.bf16.mxu0 0
      %940 = vmatpush1.bf16.xpose.msra.mxu0 0
      %941 = vmatprep.mubr.bf16.mxu0 0
      %942 = vmatmul.mubr.bf16.gmra.mrb[0].mxu0 %v904
      %v943 = vpop.f32.mrb[0].mxu0
      %v944 = vadd.f32 %v394, %v943
      %v945 = vpop.f32.mrb[0].mxu0
      %v946 = vpop.f32.mrb[0].mxu0
      %v947 = vpop.f32.mrb[0].mxu0
      %948 = vdwg.mxu0
      %v949 = vsel %vm504, %v894, -inf
      %950 = vmax.xlane.f32.xlu0 %v949
      %v951 = vpop.xlane.xlu0 %950
      %v952 = vsel %vm504, %v944, -inf
      %953 = vmax.xlane.f32.xlu0 %v952
      %v954 = vpop.xlane.xlu0 %953
      %v955 = vsub.f32 %v894, %v951
      %v956 = vsub.f32 %v944, %v954
      %v957 = vmul.f32 %v955, 1.442695
      %v958 = vpow.pop %v957
      %v959 = vmul.f32 %v956, 1.442695
      %v960 = vpow.pop %v959
      %v961 = vsel %vm504, %v958, 0.0
      %962 = vadd.xlane.f32.xlu0 %v961
      %v963 = vpop.xlane.xlu0 %962
      %v964 = vsel %vm504, %v960, 0.0
      %965 = vadd.xlane.f32.xlu0 %v964
      %v966 = vpop.xlane.xlu0 %965
      %v967 = vrcp.pop %v963
      %v968 = vrcp.pop %v966
      %v969 = vmul.f32 %v958, %v967
      %v970 = vmul.f32 %v960, %v968
      %v971 = vpack.c.bf16 %v969, %v969
      %v972 = vpack.c.bf16 %v970, %v970
      %973 = vrot.lane.b32.xlu0 %v403, 48
      %v974 = vpop.permute.xlu0 %973
      %v976 = vsel %vm531, %v971, 0
      %v979 = vsel %vm535, %v974, 0
      %981 = vmatprep.subr.bf16.mxu0 0
      %982 = vmatpush1.bf16.msra.mxu0 %v979
      %983 = vmatprep.subr.bf16.mxu0 0
      %984 = vmatpush1.bf16.msra.mxu0 0
      %985 = vmatprep.subr.bf16.mxu0 0
      %986 = vmatpush1.bf16.msra.mxu0 0
      %987 = vmatprep.subr.bf16.mxu0 0
      %988 = vmatpush1.bf16.msra.mxu0 0
      %989 = vmatprep.subr.bf16.mxu0 0
      %990 = vmatpush1.bf16.msra.mxu0 0
      %991 = vmatprep.subr.bf16.mxu0 0
      %992 = vmatpush1.bf16.msra.mxu0 0
      %993 = vmatprep.subr.bf16.mxu0 0
      %994 = vmatpush1.bf16.msra.mxu0 0
      %995 = vmatprep.subr.bf16.mxu0 0
      %996 = vmatpush1.bf16.msra.mxu0 0
      %997 = vmatprep.subr.bf16.mxu0 0
      %998 = vmatpush1.bf16.msra.mxu0 0
      %999 = vmatprep.subr.bf16.mxu0 0
      %1000 = vmatpush1.bf16.msra.mxu0 0
      %1001 = vmatprep.subr.bf16.mxu0 0
      %1002 = vmatpush1.bf16.msra.mxu0 0
      %1003 = vmatprep.subr.bf16.mxu0 0
      %1004 = vmatpush1.bf16.msra.mxu0 0
      %1005 = vmatprep.subr.bf16.mxu0 0
      %1006 = vmatpush1.bf16.msra.mxu0 0
      %1007 = vmatprep.subr.bf16.mxu0 0
      %1008 = vmatpush1.bf16.msra.mxu0 0
      %1009 = vmatprep.subr.bf16.mxu0 0
      %1010 = vmatpush1.bf16.msra.mxu0 0
      %1011 = vmatprep.subr.bf16.mxu0 0
      %1012 = vmatpush1.bf16.msra.mxu0 0
      %1013 = vmatprep.mubr.bf16.mxu0 0
      %1014 = vmatmul.mubr.bf16.gmra.mrb[0].mxu0 %v976
      %v1015 = vpop.f32.mrb[0].mxu0
      %v1016 = vadd.f32 0.0, %v1015
      %v1017 = vpop.f32.mrb[0].mxu0
      %v1018 = vpop.f32.mrb[0].mxu0
      %v1019 = vpop.f32.mrb[0].mxu0
      %1020 = vdwg.mxu0
      %1021 = vrot.lane.b32.xlu0 %v404, 48
      %v1022 = vpop.permute.xlu0 %1021
      %v1024 = vsel %vm531, %v972, 0
      %v1027 = vsel %vm535, %v1022, 0
      %1029 = vmatprep.subr.bf16.mxu0 0
      %1030 = vmatpush1.bf16.msra.mxu0 %v1027
      %1031 = vmatprep.subr.bf16.mxu0 0
      %1032 = vmatpush1.bf16.msra.mxu0 0
      %1033 = vmatprep.subr.bf16.mxu0 0
      %1034 = vmatpush1.bf16.msra.mxu0 0
      %1035 = vmatprep.subr.bf16.mxu0 0
      %1036 = vmatpush1.bf16.msra.mxu0 0
      %1037 = vmatprep.subr.bf16.mxu0 0
      %1038 = vmatpush1.bf16.msra.mxu0 0
      %1039 = vmatprep.subr.bf16.mxu0 0
      %1040 = vmatpush1.bf16.msra.mxu0 0
      %1041 = vmatprep.subr.bf16.mxu0 0
      %1042 = vmatpush1.bf16.msra.mxu0 0
      %1043 = vmatprep.subr.bf16.mxu0 0
      %1044 = vmatpush1.bf16.msra.mxu0 0
      %1045 = vmatprep.subr.bf16.mxu0 0
      %1046 = vmatpush1.bf16.msra.mxu0 0
      %1047 = vmatprep.subr.bf16.mxu0 0
      %1048 = vmatpush1.bf16.msra.mxu0 0
      %1049 = vmatprep.subr.bf16.mxu0 0
      %1050 = vmatpush1.bf16.msra.mxu0 0
      %1051 = vmatprep.subr.bf16.mxu0 0
      %1052 = vmatpush1.bf16.msra.mxu0 0
      %1053 = vmatprep.subr.bf16.mxu0 0
      %1054 = vmatpush1.bf16.msra.mxu0 0
      %1055 = vmatprep.subr.bf16.mxu0 0
      %1056 = vmatpush1.bf16.msra.mxu0 0
      %1057 = vmatprep.subr.bf16.mxu0 0
      %1058 = vmatpush1.bf16.msra.mxu0 0
      %1059 = vmatprep.subr.bf16.mxu0 0
      %1060 = vmatpush1.bf16.msra.mxu0 0
      %1061 = vmatprep.mubr.bf16.mxu0 0
      %1062 = vmatmul.mubr.bf16.gmra.mrb[0].mxu0 %v1024
      %v1063 = vpop.f32.mrb[0].mxu0
      %v1064 = vadd.f32 0.0, %v1063
      %v1065 = vpop.f32.mrb[0].mxu0
      %v1066 = vpop.f32.mrb[0].mxu0
      %v1067 = vpop.f32.mrb[0].mxu0
      %1068 = vdwg.mxu0
      %1069 = vrot.lane.b32.xlu0 %v401, 104
      %v1070 = vpop.permute.xlu0 %1069
      %1071 = vrot.lane.b32.xlu0 %v403, 72
      %v1072 = vpop.permute.xlu0 %1071
      %v1074 = vsel %vm408, %v1070, 0
      %v1077 = vsel %vm408, %v1072, 0
      %1079 = vmatprep.subr.bf16.mxu0 0
      %1080 = vmatpush1.bf16.xpose.msra.mxu0 %v1077
      %1081 = vmatprep.subr.bf16.mxu0 0
      %1082 = vmatpush1.bf16.xpose.msra.mxu0 0
      %1083 = vmatprep.subr.bf16.mxu0 0
      %1084 = vmatpush1.bf16.xpose.msra.mxu0 0
      %1085 = vmatprep.subr.bf16.mxu0 0
      %1086 = vmatpush1.bf16.xpose.msra.mxu0 0
      %1087 = vmatprep.subr.bf16.mxu0 0
      %1088 = vmatpush1.bf16.xpose.msra.mxu0 0
      %1089 = vmatprep.subr.bf16.mxu0 0
      %1090 = vmatpush1.bf16.xpose.msra.mxu0 0
      %1091 = vmatprep.subr.bf16.mxu0 0
      %1092 = vmatpush1.bf16.xpose.msra.mxu0 0
      %1093 = vmatprep.subr.bf16.mxu0 0
      %1094 = vmatpush1.bf16.xpose.msra.mxu0 0
      %1095 = vmatprep.subr.bf16.mxu0 0
      %1096 = vmatpush1.bf16.xpose.msra.mxu0 0
      %1097 = vmatprep.subr.bf16.mxu0 0
      %1098 = vmatpush1.bf16.xpose.msra.mxu0 0
      %1099 = vmatprep.subr.bf16.mxu0 0
      %1100 = vmatpush1.bf16.xpose.msra.mxu0 0
      %1101 = vmatprep.subr.bf16.mxu0 0
      %1102 = vmatpush1.bf16.xpose.msra.mxu0 0
      %1103 = vmatprep.subr.bf16.mxu0 0
      %1104 = vmatpush1.bf16.xpose.msra.mxu0 0
      %1105 = vmatprep.subr.bf16.mxu0 0
      %1106 = vmatpush1.bf16.xpose.msra.mxu0 0
      %1107 = vmatprep.subr.bf16.mxu0 0
      %1108 = vmatpush1.bf16.xpose.msra.mxu0 0
      %1109 = vmatprep.subr.bf16.mxu0 0
      %1110 = vmatpush1.bf16.xpose.msra.mxu0 0
      %1111 = vmatprep.mubr.bf16.mxu0 0
      %1112 = vmatmul.mubr.bf16.gmra.mrb[0].mxu0 %v1074
      %v1113 = vpop.f32.mrb[0].mxu0
      %v1114 = vadd.f32 %v394, %v1113
      %v1115 = vpop.f32.mrb[0].mxu0
      %v1116 = vpop.f32.mrb[0].mxu0
      %v1117 = vpop.f32.mrb[0].mxu0
      %1118 = vdwg.mxu0
      %1119 = vrot.lane.b32.xlu0 %v402, 104
      %v1120 = vpop.permute.xlu0 %1119
      %1121 = vrot.lane.b32.xlu0 %v404, 72
      %v1122 = vpop.permute.xlu0 %1121
      %v1124 = vsel %vm408, %v1120, 0
      %v1127 = vsel %vm408, %v1122, 0
      %1129 = vmatprep.subr.bf16.mxu0 0
      %1130 = vmatpush1.bf16.xpose.msra.mxu0 %v1127
      %1131 = vmatprep.subr.bf16.mxu0 0
      %1132 = vmatpush1.bf16.xpose.msra.mxu0 0
      %1133 = vmatprep.subr.bf16.mxu0 0
      %1134 = vmatpush1.bf16.xpose.msra.mxu0 0
      %1135 = vmatprep.subr.bf16.mxu0 0
      %1136 = vmatpush1.bf16.xpose.msra.mxu0 0
      %1137 = vmatprep.subr.bf16.mxu0 0
      %1138 = vmatpush1.bf16.xpose.msra.mxu0 0
      %1139 = vmatprep.subr.bf16.mxu0 0
      %1140 = vmatpush1.bf16.xpose.msra.mxu0 0
      %1141 = vmatprep.subr.bf16.mxu0 0
      %1142 = vmatpush1.bf16.xpose.msra.mxu0 0
      %1143 = vmatprep.subr.bf16.mxu0 0
      %1144 = vmatpush1.bf16.xpose.msra.mxu0 0
      %1145 = vmatprep.subr.bf16.mxu0 0
      %1146 = vmatpush1.bf16.xpose.msra.mxu0 0
      %1147 = vmatprep.subr.bf16.mxu0 0
      %1148 = vmatpush1.bf16.xpose.msra.mxu0 0
      %1149 = vmatprep.subr.bf16.mxu0 0
      %1150 = vmatpush1.bf16.xpose.msra.mxu0 0
      %1151 = vmatprep.subr.bf16.mxu0 0
      %1152 = vmatpush1.bf16.xpose.msra.mxu0 0
      %1153 = vmatprep.subr.bf16.mxu0 0
      %1154 = vmatpush1.bf16.xpose.msra.mxu0 0
      %1155 = vmatprep.subr.bf16.mxu0 0
      %1156 = vmatpush1.bf16.xpose.msra.mxu0 0
      %1157 = vmatprep.subr.bf16.mxu0 0
      %1158 = vmatpush1.bf16.xpose.msra.mxu0 0
      %1159 = vmatprep.subr.bf16.mxu0 0
      %1160 = vmatpush1.bf16.xpose.msra.mxu0 0
      %1161 = vmatprep.mubr.bf16.mxu0 0
      %1162 = vmatmul.mubr.bf16.gmra.mrb[0].mxu0 %v1124
      %v1163 = vpop.f32.mrb[0].mxu0
      %v1164 = vadd.f32 %v394, %v1163
      %v1165 = vpop.f32.mrb[0].mxu0
      %v1166 = vpop.f32.mrb[0].mxu0
      %v1167 = vpop.f32.mrb[0].mxu0
      %1168 = vdwg.mxu0
      %v1169 = vsel %vm504, %v1114, -inf
      %1170 = vmax.xlane.f32.xlu0 %v1169
      %v1171 = vpop.xlane.xlu0 %1170
      %v1172 = vsel %vm504, %v1164, -inf
      %1173 = vmax.xlane.f32.xlu0 %v1172
      %v1174 = vpop.xlane.xlu0 %1173
      %v1175 = vsub.f32 %v1114, %v1171
      %v1176 = vsub.f32 %v1164, %v1174
      %v1177 = vmul.f32 %v1175, 1.442695
      %v1178 = vpow.pop %v1177
      %v1179 = vmul.f32 %v1176, 1.442695
      %v1180 = vpow.pop %v1179
      %v1181 = vsel %vm504, %v1178, 0.0
      %1182 = vadd.xlane.f32.xlu0 %v1181
      %v1183 = vpop.xlane.xlu0 %1182
      %v1184 = vsel %vm504, %v1180, 0.0
      %1185 = vadd.xlane.f32.xlu0 %v1184
      %v1186 = vpop.xlane.xlu0 %1185
      %v1187 = vrcp.pop %v1183
      %v1188 = vrcp.pop %v1186
      %v1189 = vmul.f32 %v1178, %v1187
      %v1190 = vmul.f32 %v1180, %v1188
      %v1191 = vpack.c.bf16 %v1189, %v1189
      %v1192 = vpack.c.bf16 %v1190, %v1190
      %1193 = vrot.lane.b32.xlu0 %v403, 40
      %v1194 = vpop.permute.xlu0 %1193
      %v1196 = vsel %vm531, %v1191, 0
      %v1199 = vsel %vm535, %v1194, 0
      %1201 = vmatprep.subr.bf16.mxu0 0
      %1202 = vmatpush1.bf16.msra.mxu0 %v1199
      %1203 = vmatprep.subr.bf16.mxu0 0
      %1204 = vmatpush1.bf16.msra.mxu0 0
      %1205 = vmatprep.subr.bf16.mxu0 0
      %1206 = vmatpush1.bf16.msra.mxu0 0
      %1207 = vmatprep.subr.bf16.mxu0 0
      %1208 = vmatpush1.bf16.msra.mxu0 0
      %1209 = vmatprep.subr.bf16.mxu0 0
      %1210 = vmatpush1.bf16.msra.mxu0 0
      %1211 = vmatprep.subr.bf16.mxu0 0
      %1212 = vmatpush1.bf16.msra.mxu0 0
      %1213 = vmatprep.subr.bf16.mxu0 0
      %1214 = vmatpush1.bf16.msra.mxu0 0
      %1215 = vmatprep.subr.bf16.mxu0 0
      %1216 = vmatpush1.bf16.msra.mxu0 0
      %1217 = vmatprep.subr.bf16.mxu0 0
      %1218 = vmatpush1.bf16.msra.mxu0 0
      %1219 = vmatprep.subr.bf16.mxu0 0
      %1220 = vmatpush1.bf16.msra.mxu0 0
      %1221 = vmatprep.subr.bf16.mxu0 0
      %1222 = vmatpush1.bf16.msra.mxu0 0
      %1223 = vmatprep.subr.bf16.mxu0 0
      %1224 = vmatpush1.bf16.msra.mxu0 0
      %1225 = vmatprep.subr.bf16.mxu0 0
      %1226 = vmatpush1.bf16.msra.mxu0 0
      %1227 = vmatprep.subr.bf16.mxu0 0
      %1228 = vmatpush1.bf16.msra.mxu0 0
      %1229 = vmatprep.subr.bf16.mxu0 0
      %1230 = vmatpush1.bf16.msra.mxu0 0
      %1231 = vmatprep.subr.bf16.mxu0 0
      %1232 = vmatpush1.bf16.msra.mxu0 0
      %1233 = vmatprep.mubr.bf16.mxu0 0
      %1234 = vmatmul.mubr.bf16.gmra.mrb[0].mxu0 %v1196
      %v1235 = vpop.f32.mrb[0].mxu0
      %v1236 = vadd.f32 0.0, %v1235
      %v1237 = vpop.f32.mrb[0].mxu0
      %v1238 = vpop.f32.mrb[0].mxu0
      %v1239 = vpop.f32.mrb[0].mxu0
      %1240 = vdwg.mxu0
      %1241 = vrot.lane.b32.xlu0 %v404, 40
      %v1242 = vpop.permute.xlu0 %1241
      %v1244 = vsel %vm531, %v1192, 0
      %v1247 = vsel %vm535, %v1242, 0
      %1249 = vmatprep.subr.bf16.mxu0 0
      %1250 = vmatpush1.bf16.msra.mxu0 %v1247
      %1251 = vmatprep.subr.bf16.mxu0 0
      %1252 = vmatpush1.bf16.msra.mxu0 0
      %1253 = vmatprep.subr.bf16.mxu0 0
      %1254 = vmatpush1.bf16.msra.mxu0 0
      %1255 = vmatprep.subr.bf16.mxu0 0
      %1256 = vmatpush1.bf16.msra.mxu0 0
      %1257 = vmatprep.subr.bf16.mxu0 0
      %1258 = vmatpush1.bf16.msra.mxu0 0
      %1259 = vmatprep.subr.bf16.mxu0 0
      %1260 = vmatpush1.bf16.msra.mxu0 0
      %1261 = vmatprep.subr.bf16.mxu0 0
      %1262 = vmatpush1.bf16.msra.mxu0 0
      %1263 = vmatprep.subr.bf16.mxu0 0
      %1264 = vmatpush1.bf16.msra.mxu0 0
      %1265 = vmatprep.subr.bf16.mxu0 0
      %1266 = vmatpush1.bf16.msra.mxu0 0
      %1267 = vmatprep.subr.bf16.mxu0 0
      %1268 = vmatpush1.bf16.msra.mxu0 0
      %1269 = vmatprep.subr.bf16.mxu0 0
      %1270 = vmatpush1.bf16.msra.mxu0 0
      %1271 = vmatprep.subr.bf16.mxu0 0
      %1272 = vmatpush1.bf16.msra.mxu0 0
      %1273 = vmatprep.subr.bf16.mxu0 0
      %1274 = vmatpush1.bf16.msra.mxu0 0
      %1275 = vmatprep.subr.bf16.mxu0 0
      %1276 = vmatpush1.bf16.msra.mxu0 0
      %1277 = vmatprep.subr.bf16.mxu0 0
      %1278 = vmatpush1.bf16.msra.mxu0 0
      %1279 = vmatprep.subr.bf16.mxu0 0
      %1280 = vmatpush1.bf16.msra.mxu0 0
      %1281 = vmatprep.mubr.bf16.mxu0 0
      %1282 = vmatmul.mubr.bf16.gmra.mrb[0].mxu0 %v1244
      %v1283 = vpop.f32.mrb[0].mxu0
      %v1284 = vadd.f32 0.0, %v1283
      %v1285 = vpop.f32.mrb[0].mxu0
      %v1286 = vpop.f32.mrb[0].mxu0
      %v1287 = vpop.f32.mrb[0].mxu0
      %1288 = vdwg.mxu0
      %v1291 = vcombine.low %v574, %v622
      %v1295 = vcombine.low %v796, %v844
      %1296 = vrot.lane.b32.xlu0 %v1295, 8
      %v1297 = vpop.permute.xlu0 %1296
      %v1301 = vcombine.low %v1016, %v1064
      %1302 = vrot.lane.b32.xlu0 %v1301, 16
      %v1303 = vpop.permute.xlu0 %1302
      %v1307 = vcombine.low %v1236, %v1284
      %1308 = vrot.lane.b32.xlu0 %v1307, 24
      %v1309 = vpop.permute.xlu0 %1308
      %v1311 = vsel %vm408, %v1291, %v1297
      %vm1312 = vcmask 130048
      %v1313 = vsel %vm1312, %v1311, %v1303
      %vm1314 = vcmask 195584
      %v1315 = vsel %vm1314, %v1313, %v1309
      %v1316 = vpack.c.bf16 %v1315, %v1315
      %v1317 = vld [vmem:[%s4] sm:$0xf]
      %v1318 = vld [vmem:[%s4 + $0x4] sm:$0xf]
      %v1319 = vld [vmem:[%s4 + $0x8] sm:$0xf]
      %v1320 = vld [vmem:[%s4 + $0xc] sm:$0xf]
      %v1321 = vld [vmem:[%s5] sm:$0x1]
      %v1323 = vlaneseq
      %v1324 = vshrl.u32 %v1323, 7
      %v1325 = vsub.s32 0, %v1324
      %v1326 = vrot.slane %v1321, %v1325
      %v1332 = vunpack.c.l.b16 %v1317
      %v1333 = vunpack.c.l.b16 %v1318
      %v1334 = vunpack.c.l.b16 %v1319
      %v1335 = vunpack.c.l.b16 %v1320
      %v1336 = vpack.c.b16 %v1333, %v1332
      %v1337 = vpack.c.b16 %v1335, %v1334
      %v1341 = vsel %vm344, %v1316, 0
      %1343 = vmatprep.subr.bf16.mxu0 0
      %1344 = vmatpush1.bf16.msra.mxu0 %v1336
      %1345 = vmatprep.subr.bf16.mxu0 0
      %1346 = vmatpush1.bf16.msra.mxu0 %v1337
      %1347 = vmatprep.subr.bf16.mxu0 0
      %1348 = vmatpush1.bf16.msra.mxu0 0
      %1349 = vmatprep.subr.bf16.mxu0 0
      %1350 = vmatpush1.bf16.msra.mxu0 0
      %1351 = vmatprep.subr.bf16.mxu0 0
      %1352 = vmatpush1.bf16.msra.mxu0 0
      %1353 = vmatprep.subr.bf16.mxu0 0
      %1354 = vmatpush1.bf16.msra.mxu0 0
      %1355 = vmatprep.subr.bf16.mxu0 0
      %1356 = vmatpush1.bf16.msra.mxu0 0
      %1357 = vmatprep.subr.bf16.mxu0 0
      %1358 = vmatpush1.bf16.msra.mxu0 0
      %1359 = vmatprep.subr.bf16.mxu0 0
      %1360 = vmatpush1.bf16.msra.mxu0 0
      %1361 = vmatprep.subr.bf16.mxu0 0
      %1362 = vmatpush1.bf16.msra.mxu0 0
      %1363 = vmatprep.subr.bf16.mxu0 0
      %1364 = vmatpush1.bf16.msra.mxu0 0
      %1365 = vmatprep.subr.bf16.mxu0 0
      %1366 = vmatpush1.bf16.msra.mxu0 0
      %1367 = vmatprep.subr.bf16.mxu0 0
      %1368 = vmatpush1.bf16.msra.mxu0 0
      %1369 = vmatprep.subr.bf16.mxu0 0
      %1370 = vmatpush1.bf16.msra.mxu0 0
      %1371 = vmatprep.subr.bf16.mxu0 0
      %1372 = vmatpush1.bf16.msra.mxu0 0
      %1373 = vmatprep.subr.bf16.mxu0 0
      %1374 = vmatpush1.bf16.msra.mxu0 0
      %1375 = vmatprep.mubr.bf16.mxu0 0
      %1376 = vmatmul.mubr.bf16.gmra.mrb[0].mxu0 %v1341
      %v1377 = vpop.f32.mrb[0].mxu0
      %v1378 = vadd.f32 %v1326, %v1377
      %v1379 = vpop.f32.mrb[0].mxu0
      %v1380 = vpop.f32.mrb[0].mxu0
      %v1381 = vpop.f32.mrb[0].mxu0
      %1382 = vdwg.mxu0
      %v1383 = vadd.f32 %v1378, %v319
      %v1384 = vsel %vm344, %v1383, 0.0
      %1385 = vadd.xlane.f32.xlu0 %v1384
      %v1386 = vpop.xlane.xlu0 %1385
      %v1387 = vrcp.pop 32.0
      %v1388 = vmul.f32 %v1386, %v1387
      %v1389 = vsub.f32 %v1383, %v1388
      %v1390 = vmul.f32 %v1389, %v1389
      %v1391 = vsel %vm344, %v1390, 0.0
      %1392 = vadd.xlane.f32.xlu0 %v1391
      %v1393 = vpop.xlane.xlu0 %1392
      %v1394 = vmul.f32 %v1393, %v1387
      %v1395 = vadd.f32 %v1394, 1e-05
      %v1396 = vrsqrt.pop %v1395
      %v1397 = vmul.f32 %v1389, %v1396
      %v1398 = vld [vmem:[%s6] sm:$0x1]
      %v1400 = vlaneseq
      %v1401 = vshrl.u32 %v1400, 7
      %v1402 = vsub.s32 0, %v1401
      %v1403 = vrot.slane %v1398, %v1402
      %v1405 = vmul.f32 %v1397, %v1403
      %v1406 = vld [vmem:[%s7] sm:$0x1]
      %v1408 = vlaneseq
      %v1409 = vshrl.u32 %v1408, 7
      %v1410 = vsub.s32 0, %v1409
      %v1411 = vrot.slane %v1406, %v1410
      %v1413 = vadd.f32 %v1405, %v1411
      %1414 = vst.msk [vmem:[%s317] sm:$0xff] %vm344, %v1413
      %p1415 = scmp.lt.s32.totalorder %s19, 1
      %s1416 = scalar_select %p1415, %s19, 1
      %s1417 = smul.addr %s1416, 8
      %s1418 = scalar_lea.vmem %s8, %s1417
      // Predicated region
      $region53: #{decoder_forward.3} parent=51 // pred_check
        %p1419 = pneg %p215
      $region54: #{decoder_forward.3} parent=51 // pred_check_branch
        %1421 = sbr.rel (%p1419) target = $region56
      $region55: #{decoder_forward.3} parent=51 // pred_region
        _
      $region56: #{decoder_forward.3} parent=51 // pred_fallthru
        _
    $region52: #{decoder_forward.3} parent=5 // pred_fallthru
      _
    %p1422 = scmp.le.s32.totalorder 2, %s14
    // Predicated region
    $region57: #{decoder_forward.3} parent=5 // pred_check
      %p1423 = pneg %p1422
    $region58: #{decoder_forward.3} parent=5 // pred_check_branch
      %1425 = sbr.rel (%p1423) target = $region60
    $region59: #{decoder_forward.3} parent=5 // pred_region
      %s1426 = ssub.s32 %s14, 2
      // Predicated region
      $region61: #{decoder_forward.3} parent=59 // pred_check
        %p1427 = pneg %p221
      $region62: #{decoder_forward.3} parent=59 // pred_check_branch
        %1429 = sbr.rel (%p1427) target = $region64
      $region63: #{decoder_forward.3} parent=59 // pred_region
        %p1430 = scmp.lt.s32.totalorder %s20, 1
        %s1431 = scalar_select %p1430, %s20, 1
        %s1432 = smul.addr %s1431, 8
        %s1433 = scalar_lea.vmem %s8, %s1432
      $region64: #{decoder_forward.3} parent=59 // pred_fallthru
        _
    $region60: #{decoder_forward.3} parent=5 // pred_fallthru
      _
  $region6: #{decoder_forward.3} parent=0 // loop_footer
    %s18 = sadd.s32 1, %s14
  $region7: #{decoder_forward.3} parent=0 // loop_footer_branch
    %13 = sbr.rel target = $region3
  $region8: #{decoder_forward.3} parent=0 // loop_exit
    _

// kernel: decoder_forward.5
$region0: #{decoder_forward.5}
  #allocation0 [shape = 'u32[]', space=smem, size = 0x4, offset = 0x4, fixed_abs, tag = 'smem constant byte address 0x4 - core index']
  #allocation1 [shape = 'u32[144,128]{1,0:T(1,128)}', space=vmem, size = 0x12000, scoped, tag = 'internal scratch']
  %s0 = inlined_call_operand.vmem [shape: f32[16,32], index: 0, kind: input, shape index: {}]
  %s1 = inlined_call_operand.vmem [shape: bf16[32,2048], index: 1, kind: input, shape index: {}]
  %s2 = inlined_call_operand.vmem [shape: f32[1,2048], index: 2, kind: input, shape index: {}]
  %s3 = inlined_call_operand.vmem [shape: bf16[2048,32], index: 3, kind: input, shape index: {}]
  %s4 = inlined_call_operand.vmem [shape: f32[1,32], index: 4, kind: input, shape index: {}]
  %s5 = inlined_call_operand.vmem [shape: f32[1,32], index: 5, kind: input, shape index: {}]
  %s6 = inlined_call_operand.vmem [shape: f32[1,32], index: 6, kind: input, shape index: {}]
  %s7 = inlined_call_operand.hbm [shape: f32[16,32], index: 7, kind: output, shape index: {}]
  %s8 = sld [smem:[#allocation0]]
  $region61: #{decoder_forward.5} parent=0
    _
  %s10 = ssub.s32 1, %s8
  %s11 = scalar_select 0, %s10, %s8
  $region1: #{decoder_forward.5} parent=0
    #allocation2 [shape = 'u8[8192]{0}', space=vmem, size = 0x2000, scoped, tag = 'output window, operand 0']
    #allocation3 [shape = 's32[2]{0}', space=sflag, size = 0x8, scoped, tag = 'scoped memory for decoder_forward.5']
    %12 = vsyncpa [#allocation3], 0
    %s13 = scalar_lea.sflag [#allocation3], 1
    %14 = vsyncpa %s13, 0
    loop: start=0, step=1, limit=4
    $region2: #{decoder_forward.5} parent=1 // loop_pre_header
      _
    $region3: #{decoder_forward.5} parent=1 // loop_header
      %s16 = sphi 0, %s20
      %p17 = scmp.ge.s32.totalorder %s16, 4
      %s26 = sphi 0, %s28
      %s29 = sphi 0, %s26
      %s30 = sphi 0, %s29
      %s46 = sphi 0, %s30
      %s50 = sphi 0, %s50
      %s52 = sphi 0, %s50
      %s53 = sphi 0, %s52
      %s67 = sphi 0, %s53
      %s71 = sphi 0, %s71
      %s73 = sphi 0, %s71
      %s74 = sphi 0, %s73
      %s88 = sphi 0, %s74
      %s92 = sphi 0, %s92
      %s94 = sphi 0, %s92
      %s95 = sphi 0, %s94
      %s109 = sphi 0, %s95
      %s113 = sphi 0, %s113
      %s115 = sphi 0, %s113
      %s116 = sphi 0, %s115
      %s130 = sphi 0, %s116
      %s134 = sphi 0, %s134
      %s136 = sphi 0, %s134
      %s137 = sphi 0, %s136
      %s151 = sphi 0, %s137
      %s155 = sphi 0, %s155
      %s157 = sphi 0, %s155
      %s158 = sphi 0, %s157
      %s172 = sphi 0, %s158
      %s178 = sphi 0, %s180
      %s181 = sphi 0, %s178
      %s182 = sphi 0, %s181
      %s198 = sphi 0, %s182
    $region4: #{decoder_forward.5} parent=1 // loop_header_branch
      %19 = sbr.rel (%p17) target = $region8
    $region5: #{decoder_forward.5} parent=1 // loop_body
      %s21 = ssub.s32 %s16, 1
      %s22 = ssub.s32 %s16, 2
      %s23 = sadd.s32 %s16, 1
      %s24 = ssub.s32 %s16, %s23
      %p25 = scmp.eq.s32.totalorder %s24, 0
      %s27 = sadd.s32 %s26, 1
      %s28 = scalar_select %p25, %s26, %s27
      %p31 = pneg %p25
      %p32 = scmp.eq.s32.totalorder %s16, 1
      %p33 = por %p31, %p32
      %p34 = scmp.ne.s32.totalorder %s26, %s29
      %p35 = scmp.eq.s32.totalorder %s16, 0
      %p36 = por %p34, %p35
      %p37 = scmp.ne.s32.totalorder %s26, %s29
      %p38 = scmp.eq.s32.totalorder %s21, 1
      %p39 = por %p37, %p38
      %p40 = scmp.ne.s32.totalorder %s29, %s30
      %p41 = scmp.eq.s32.totalorder %s21, 0
      %p42 = por %p40, %p41
      %p43 = scmp.ne.s32.totalorder %s29, %s30
      %p44 = scmp.eq.s32.totalorder %s22, 1
      %p45 = por %p43, %p44
      %p47 = scmp.ne.s32.totalorder %s30, %s46
      %p48 = scmp.eq.s32.totalorder %s22, 0
      %p49 = por %p47, %p48
      %s51 = sadd.s32 %s50, 1
      %p54 = scmp.eq.s32.totalorder %s16, 1
      %p55 = scmp.ne.s32.totalorder %s50, %s52
      %p56 = scmp.eq.s32.totalorder %s16, 0
      %p57 = por %p55, %p56
      %p58 = scmp.ne.s32.totalorder %s50, %s52
      %p59 = scmp.eq.s32.totalorder %s21, 1
      %p60 = por %p58, %p59
      %p61 = scmp.ne.s32.totalorder %s52, %s53
      %p62 = scmp.eq.s32.totalorder %s21, 0
      %p63 = por %p61, %p62
      %p64 = scmp.ne.s32.totalorder %s52, %s53
      %p65 = scmp.eq.s32.totalorder %s22, 1
      %p66 = por %p64, %p65
      %p68 = scmp.ne.s32.totalorder %s53, %s67
      %p69 = scmp.eq.s32.totalorder %s22, 0
      %p70 = por %p68, %p69
      %s72 = sadd.s32 %s71, 1
      %p75 = scmp.eq.s32.totalorder %s16, 1
      %p76 = scmp.ne.s32.totalorder %s71, %s73
      %p77 = scmp.eq.s32.totalorder %s16, 0
      %p78 = por %p76, %p77
      %p79 = scmp.ne.s32.totalorder %s71, %s73
      %p80 = scmp.eq.s32.totalorder %s21, 1
      %p81 = por %p79, %p80
      %p82 = scmp.ne.s32.totalorder %s73, %s74
      %p83 = scmp.eq.s32.totalorder %s21, 0
      %p84 = por %p82, %p83
      %p85 = scmp.ne.s32.totalorder %s73, %s74
      %p86 = scmp.eq.s32.totalorder %s22, 1
      %p87 = por %p85, %p86
      %p89 = scmp.ne.s32.totalorder %s74, %s88
      %p90 = scmp.eq.s32.totalorder %s22, 0
      %p91 = por %p89, %p90
      %s93 = sadd.s32 %s92, 1
      %p96 = scmp.eq.s32.totalorder %s16, 1
      %p97 = scmp.ne.s32.totalorder %s92, %s94
      %p98 = scmp.eq.s32.totalorder %s16, 0
      %p99 = por %p97, %p98
      %p100 = scmp.ne.s32.totalorder %s92, %s94
      %p101 = scmp.eq.s32.totalorder %s21, 1
      %p102 = por %p100, %p101
      %p103 = scmp.ne.s32.totalorder %s94, %s95
      %p104 = scmp.eq.s32.totalorder %s21, 0
      %p105 = por %p103, %p104
      %p106 = scmp.ne.s32.totalorder %s94, %s95
      %p107 = scmp.eq.s32.totalorder %s22, 1
      %p108 = por %p106, %p107
      %p110 = scmp.ne.s32.totalorder %s95, %s109
      %p111 = scmp.eq.s32.totalorder %s22, 0
      %p112 = por %p110, %p111
      %s114 = sadd.s32 %s113, 1
      %p117 = scmp.eq.s32.totalorder %s16, 1
      %p118 = scmp.ne.s32.totalorder %s113, %s115
      %p119 = scmp.eq.s32.totalorder %s16, 0
      %p120 = por %p118, %p119
      %p121 = scmp.ne.s32.totalorder %s113, %s115
      %p122 = scmp.eq.s32.totalorder %s21, 1
      %p123 = por %p121, %p122
      %p124 = scmp.ne.s32.totalorder %s115, %s116
      %p125 = scmp.eq.s32.totalorder %s21, 0
      %p126 = por %p124, %p125
      %p127 = scmp.ne.s32.totalorder %s115, %s116
      %p128 = scmp.eq.s32.totalorder %s22, 1
      %p129 = por %p127, %p128
      %p131 = scmp.ne.s32.totalorder %s116, %s130
      %p132 = scmp.eq.s32.totalorder %s22, 0
      %p133 = por %p131, %p132
      %s135 = sadd.s32 %s134, 1
      %p138 = scmp.eq.s32.totalorder %s16, 1
      %p139 = scmp.ne.s32.totalorder %s134, %s136
      %p140 = scmp.eq.s32.totalorder %s16, 0
      %p141 = por %p139, %p140
      %p142 = scmp.ne.s32.totalorder %s134, %s136
      %p143 = scmp.eq.s32.totalorder %s21, 1
      %p144 = por %p142, %p143
      %p145 = scmp.ne.s32.totalorder %s136, %s137
      %p146 = scmp.eq.s32.totalorder %s21, 0
      %p147 = por %p145, %p146
      %p148 = scmp.ne.s32.totalorder %s136, %s137
      %p149 = scmp.eq.s32.totalorder %s22, 1
      %p150 = por %p148, %p149
      %p152 = scmp.ne.s32.totalorder %s137, %s151
      %p153 = scmp.eq.s32.totalorder %s22, 0
      %p154 = por %p152, %p153
      %s156 = sadd.s32 %s155, 1
      %p159 = scmp.eq.s32.totalorder %s16, 1
      %p160 = scmp.ne.s32.totalorder %s155, %s157
      %p161 = scmp.eq.s32.totalorder %s16, 0
      %p162 = por %p160, %p161
      %p163 = scmp.ne.s32.totalorder %s155, %s157
      %p164 = scmp.eq.s32.totalorder %s21, 1
      %p165 = por %p163, %p164
      %p166 = scmp.ne.s32.totalorder %s157, %s158
      %p167 = scmp.eq.s32.totalorder %s21, 0
      %p168 = por %p166, %p167
      %p169 = scmp.ne.s32.totalorder %s157, %s158
      %p170 = scmp.eq.s32.totalorder %s22, 1
      %p171 = por %p169, %p170
      %p173 = scmp.ne.s32.totalorder %s158, %s172
      %p174 = scmp.eq.s32.totalorder %s22, 0
      %p175 = por %p173, %p174
      %s176 = ssub.s32 %s16, %s23
      %p177 = scmp.eq.s32.totalorder %s176, 0
      %s179 = sadd.s32 %s178, 1
      %s180 = scalar_select %p177, %s178, %s179
      %p183 = pneg %p177
      %p184 = scmp.eq.s32.totalorder %s16, 1
      %p185 = por %p183, %p184
      %p186 = scmp.ne.s32.totalorder %s178, %s181
      %p187 = scmp.eq.s32.totalorder %s16, 0
      %p188 = por %p186, %p187
      %p189 = scmp.ne.s32.totalorder %s178, %s181
      %p190 = scmp.eq.s32.totalorder %s21, 1
      %p191 = por %p189, %p190
      %p192 = scmp.ne.s32.totalorder %s181, %s182
      %p193 = scmp.eq.s32.totalorder %s21, 0
      %p194 = por %p192, %p193
      %p195 = scmp.ne.s32.totalorder %s181, %s182
      %p196 = scmp.eq.s32.totalorder %s22, 1
      %p197 = por %p195, %p196
      %p199 = scmp.ne.s32.totalorder %s182, %s198
      %p200 = scmp.eq.s32.totalorder %s22, 0
      %p201 = por %p199, %p200
      %p202 = scmp.le.s32.totalorder 1, %s16
      %p203 = scmp.lt.s32.totalorder %s16, 3
      %p204 = pnand %p202, %p203
      %p205 = pneg %p204
      // Predicated region
      $region9: #{decoder_forward.5} parent=5 // pred_check
        _
      $region10: #{decoder_forward.5} parent=5 // pred_check_branch
        %207 = sbr.rel (%p204) target = $region12
      $region11: #{decoder_forward.5} parent=5 // pred_region
        %s208 = ssub.s32 %s16, 1
        // Predicated region
        $region13: #{decoder_forward.5} parent=11 // pred_check
          %p209 = pneg %p63
        $region14: #{decoder_forward.5} parent=11 // pred_check_branch
          %211 = sbr.rel (%p209) target = $region16
        $region15: #{decoder_forward.5} parent=11 // pred_region
          _
        $region16: #{decoder_forward.5} parent=11 // pred_fallthru
          _
        // Predicated region
        $region17: #{decoder_forward.5} parent=11 // pred_check
          %p212 = pneg %p84
        $region18: #{decoder_forward.5} parent=11 // pred_check_branch
          %214 = sbr.rel (%p212) target = $region20
        $region19: #{decoder_forward.5} parent=11 // pred_region
          _
        $region20: #{decoder_forward.5} parent=11 // pred_fallthru
          _
        // Predicated region
        $region21: #{decoder_forward.5} parent=11 // pred_check
          %p215 = pneg %p105
        $region22: #{decoder_forward.5} parent=11 // pred_check_branch
          %217 = sbr.rel (%p215) target = $region24
        $region23: #{decoder_forward.5} parent=11 // pred_region
          _
        $region24: #{decoder_forward.5} parent=11 // pred_fallthru
          _
        // Predicated region
        $region25: #{decoder_forward.5} parent=11 // pred_check
          %p218 = pneg %p126
        $region26: #{decoder_forward.5} parent=11 // pred_check_branch
          %220 = sbr.rel (%p218) target = $region28
        $region27: #{decoder_forward.5} parent=11 // pred_region
          _
        $region28: #{decoder_forward.5} parent=11 // pred_fallthru
          _
        // Predicated region
        $region29: #{decoder_forward.5} parent=11 // pred_check
          %p221 = pneg %p147
        $region30: #{decoder_forward.5} parent=11 // pred_check_branch
          %223 = sbr.rel (%p221) target = $region32
        $region31: #{decoder_forward.5} parent=11 // pred_region
          _
        $region32: #{decoder_forward.5} parent=11 // pred_fallthru
          _
        // Predicated region
        $region33: #{decoder_forward.5} parent=11 // pred_check
          %p224 = pneg %p168
        $region34: #{decoder_forward.5} parent=11 // pred_check_branch
          %226 = sbr.rel (%p224) target = $region36
        $region35: #{decoder_forward.5} parent=11 // pred_region
          _
        $region36: #{decoder_forward.5} parent=11 // pred_fallthru
          _
      $region12: #{decoder_forward.5} parent=5 // pred_fallthru
        _
      %p227 = scmp.lt.s32.totalorder %s16, 2
      // Predicated region
      $region37: #{decoder_forward.5} parent=5 // pred_check
        %p228 = pneg %p227
      $region38: #{decoder_forward.5} parent=5 // pred_check_branch
        %230 = sbr.rel (%p228) target = $region40
      $region39: #{decoder_forward.5} parent=5 // pred_region
        // Predicated region
        $region41: #{decoder_forward.5} parent=39 // pred_check
          %p231 = pneg %p36
        $region42: #{decoder_forward.5} parent=39 // pred_check_branch
          %233 = sbr.rel (%p231) target = $region44
        $region43: #{decoder_forward.5} parent=39 // pred_region
          %p234 = scmp.lt.s32.totalorder %s16, 1
          %s235 = scalar_select %p234, %s16, 1
          %s236 = smul.addr %s235, 8
          %s237 = scalar_lea.vmem %s0, %s236
        $region44: #{decoder_forward.5} parent=39 // pred_fallthru
          _
      $region40: #{decoder_forward.5} parent=5 // pred_fallthru
        _
      %p238 = scmp.le.s32.totalorder 1, %s16
      %p239 = scmp.lt.s32.totalorder %s16, 3
      %p240 = pnand %p238, %p239
      %p241 = pneg %p240
      // Predicated region
      $region45: #{decoder_forward.5} parent=5 // pred_check
        _
      $region46: #{decoder_forward.5} parent=5 // pred_check_branch
        %243 = sbr.rel (%p240) target = $region48
      $region47: #{decoder_forward.5} parent=5 // pred_region
        %s244 = ssub.s32 %s16, 1
        %p245 = scmp.lt.s32.totalorder %s21, 1
        %s246 = scalar_select %p245, %s21, 1
        %s247 = smul.addr %s246, 8
        %s248 = scalar_lea.vmem %s0, %s247
        %p249 = pneg %p42
        %p250 = pneg %p39
        %p251 = pneg %p63
        %p252 = pneg %p60
        %p253 = pneg %p84
        %p254 = pneg %p81
        %p255 = pneg %p105
        %p256 = pneg %p102
        %p257 = pneg %p126
        %p258 = pneg %p123
        %p259 = pneg %p147
        %p260 = pneg %p144
        %p261 = pneg %p168
        %p262 = pneg %p165
        %p263 = pneg %p194
        %p264 = pneg %p191
        %s265 = sand.u32 %s181, 1
        %s266 = scalar_lea.sflag [#allocation3], %s265
        %s267 = sand.u32 %s181, 1
        %s268 = smul.addr %s267, 8
        %s269 = scalar_lea.vmem [#allocation2], %s268
        %p270 = scmp.lt.s32.totalorder %s21, 1
        %s271 = scalar_select %p270, %s21, 1
        %s272 = smul.addr %s271, 8
        %s273 = scalar_lea.vmem %s0, %s272
        %v275 = vld [vmem:[%s273] sm:$0xff]
        %v276 = vpack.c.bf16 %v275, %v275
        %v277 = vld [vmem:[%s1] sm:$0xff]
        %v278 = vld [vmem:[%s1 + $0x8] sm:$0xff]
        %v279 = vld [vmem:[%s1 + $0x10] sm:$0xff]
        %v280 = vld [vmem:[%s1 + $0x18] sm:$0xff]
        %v281 = vld [vmem:[%s1 + $0x20] sm:$0xff]
        %v282 = vld [vmem:[%s1 + $0x28] sm:$0xff]
        %v283 = vld [vmem:[%s1 + $0x30] sm:$0xff]
        %v284 = vld [vmem:[%s1 + $0x38] sm:$0xff]
        %v285 = vld [vmem:[%s1 + $0x40] sm:$0xff]
        %v286 = vld [vmem:[%s1 + $0x48] sm:$0xff]
        %v287 = vld [vmem:[%s1 + $0x50] sm:$0xff]
        %v288 = vld [vmem:[%s1 + $0x58] sm:$0xff]
        %v289 = vld [vmem:[%s1 + $0x60] sm:$0xff]
        %v290 = vld [vmem:[%s1 + $0x68] sm:$0xff]
        %v291 = vld [vmem:[%s1 + $0x70] sm:$0xff]
        %v292 = vld [vmem:[%s1 + $0x78] sm:$0xff]
        %v293 = vld [vmem:[%s1 + $0x80] sm:$0xff]
        %v294 = vld [vmem:[%s1 + $0x88] sm:$0xff]
        %v295 = vld [vmem:[%s1 + $0x90] sm:$0xff]
        %v296 = vld [vmem:[%s1 + $0x98] sm:$0xff]
        %v297 = vld [vmem:[%s1 + $0xa0] sm:$0xff]
        %v298 = vld [vmem:[%s1 + $0xa8] sm:$0xff]
        %v299 = vld [vmem:[%s1 + $0xb0] sm:$0xff]
        %v300 = vld [vmem:[%s1 + $0xb8] sm:$0xff]
        %v301 = vld [vmem:[%s1 + $0xc0] sm:$0xff]
        %v302 = vld [vmem:[%s1 + $0xc8] sm:$0xff]
        %v303 = vld [vmem:[%s1 + $0xd0] sm:$0xff]
        %v304 = vld [vmem:[%s1 + $0xd8] sm:$0xff]
        %v305 = vld [vmem:[%s1 + $0xe0] sm:$0xff]
        %v306 = vld [vmem:[%s1 + $0xe8] sm:$0xff]
        %v307 = vld [vmem:[%s1 + $0xf0] sm:$0xff]
        %v308 = vld [vmem:[%s1 + $0xf8] sm:$0xff]
        %v309 = vld [vmem:[%s2] sm:$0xff]
        %v310 = vld [vmem:[%s2 + $0x8] sm:$0xff]
        %v313 = vlaneseq
        %v314 = vshrl.u32 %v313, 7
        %v315 = vsub.s32 0, %v314
        %v316 = vrot.slane %v309, %v315
        %v317 = vlaneseq
        %v318 = vshrl.u32 %v317, 7
        %v319 = vsub.s32 1, %v318
        %v320 = vrot.slane %v309, %v319
        %v321 = vlaneseq
        %v322 = vshrl.u32 %v321, 7
        %v323 = vsub.s32 2, %v322
        %v324 = vrot.slane %v309, %v323
        %v325 = vlaneseq
        %v326 = vshrl.u32 %v325, 7
        %v327 = vsub.s32 3, %v326
        %v328 = vrot.slane %v309, %v327
        %v329 = vlaneseq
        %v330 = vshrl.u32 %v329, 7
        %v331 = vsub.s32 4, %v330
        %v332 = vrot.slane %v309, %v331
        %v333 = vlaneseq
        %v334 = vshrl.u32 %v333, 7
        %v335 = vsub.s32 5, %v334
        %v336 = vrot.slane %v309, %v335
        %v337 = vlaneseq
        %v338 = vshrl.u32 %v337, 7
        %v339 = vsub.s32 6, %v338
        %v340 = vrot.slane %v309, %v339
        %v341 = vlaneseq
        %v342 = vshrl.u32 %v341, 7
        %v343 = vsub.s32 7, %v342
        %v344 = vrot.slane %v309, %v343
        %v345 = vlaneseq
        %v346 = vshrl.u32 %v345, 7
        %v347 = vsub.s32 0, %v346
        %v348 = vrot.slane %v310, %v347
        %v349 = vlaneseq
        %v350 = vshrl.u32 %v349, 7
        %v351 = vsub.s32 1, %v350
        %v352 = vrot.slane %v310, %v351
        %v353 = vlaneseq
        %v354 = vshrl.u32 %v353, 7
        %v355 = vsub.s32 2, %v354
        %v356 = vrot.slane %v310, %v355
        %v357 = vlaneseq
        %v358 = vshrl.u32 %v357, 7
        %v359 = vsub.s32 3, %v358
        %v360 = vrot.slane %v310, %v359
        %v361 = vlaneseq
        %v362 = vshrl.u32 %v361, 7
        %v363 = vsub.s32 4, %v362
        %v364 = vrot.slane %v310, %v363
        %v365 = vlaneseq
        %v366 = vshrl.u32 %v365, 7
        %v367 = vsub.s32 5, %v366
        %v368 = vrot.slane %v310, %v367
        %v369 = vlaneseq
        %v370 = vshrl.u32 %v369, 7
        %v371 = vsub.s32 6, %v370
        %v372 = vrot.slane %v310, %v371
        %v373 = vlaneseq
        %v374 = vshrl.u32 %v373, 7
        %v375 = vsub.s32 7, %v374
        %v376 = vrot.slane %v310, %v375
        %v425 = vunpack.c.l.b16 %v277
        %v426 = vunpack.c.h.b16 %v277
        %v427 = vunpack.c.l.b16 %v278
        %v428 = vunpack.c.h.b16 %v278
        %v429 = vunpack.c.l.b16 %v279
        %v430 = vunpack.c.h.b16 %v279
        %v431 = vunpack.c.l.b16 %v280
        %v432 = vunpack.c.h.b16 %v280
        %v433 = vunpack.c.l.b16 %v281
        %v434 = vunpack.c.h.b16 %v281
        %v435 = vunpack.c.l.b16 %v282
        %v436 = vunpack.c.h.b16 %v282
        %v437 = vunpack.c.l.b16 %v283
        %v438 = vunpack.c.h.b16 %v283
        %v439 = vunpack.c.l.b16 %v284
        %v440 = vunpack.c.h.b16 %v284
        %v441 = vunpack.c.l.b16 %v285
        %v442 = vunpack.c.h.b16 %v285
        %v443 = vunpack.c.l.b16 %v286
        %v444 = vunpack.c.h.b16 %v286
        %v445 = vunpack.c.l.b16 %v287
        %v446 = vunpack.c.h.b16 %v287
        %v447 = vunpack.c.l.b16 %v288
        %v448 = vunpack.c.h.b16 %v288
        %v449 = vunpack.c.l.b16 %v289
        %v450 = vunpack.c.h.b16 %v289
        %v451 = vunpack.c.l.b16 %v290
        %v452 = vunpack.c.h.b16 %v290
        %v453 = vunpack.c.l.b16 %v291
        %v454 = vunpack.c.h.b16 %v291
        %v455 = vunpack.c.l.b16 %v292
        %v456 = vunpack.c.h.b16 %v292
        %v457 = vunpack.c.l.b16 %v293
        %v458 = vunpack.c.h.b16 %v293
        %v459 = vunpack.c.l.b16 %v294
        %v460 = vunpack.c.h.b16 %v294
        %v461 = vunpack.c.l.b16 %v295
        %v462 = vunpack.c.h.b16 %v295
        %v463 = vunpack.c.l.b16 %v296
        %v464 = vunpack.c.h.b16 %v296
        %v465 = vunpack.c.l.b16 %v297
        %v466 = vunpack.c.h.b16 %v297
        %v467 = vunpack.c.l.b16 %v298
        %v468 = vunpack.c.h.b16 %v298
        %v469 = vunpack.c.l.b16 %v299
        %v470 = vunpack.c.h.b16 %v299
        %v471 = vunpack.c.l.b16 %v300
        %v472 = vunpack.c.h.b16 %v300
        %v473 = vunpack.c.l.b16 %v301
        %v474 = vunpack.c.h.b16 %v301
        %v475 = vunpack.c.l.b16 %v302
        %v476 = vunpack.c.h.b16 %v302
        %v477 = vunpack.c.l.b16 %v303
        %v478 = vunpack.c.h.b16 %v303
        %v479 = vunpack.c.l.b16 %v304
        %v480 = vunpack.c.h.b16 %v304
        %v481 = vunpack.c.l.b16 %v305
        %v482 = vunpack.c.h.b16 %v305
        %v483 = vunpack.c.l.b16 %v306
        %v484 = vunpack.c.h.b16 %v306
        %v485 = vunpack.c.l.b16 %v307
        %v486 = vunpack.c.h.b16 %v307
        %v487 = vunpack.c.l.b16 %v308
        %v488 = vunpack.c.h.b16 %v308
        %v489 = vpack.c.b16 %v441, %v425
        %v490 = vpack.c.b16 %v442, %v426
        %v491 = vpack.c.b16 %v443, %v427
        %v492 = vpack.c.b16 %v444, %v428
        %v493 = vpack.c.b16 %v445, %v429
        %v494 = vpack.c.b16 %v446, %v430
        %v495 = vpack.c.b16 %v447, %v431
        %v496 = vpack.c.b16 %v448, %v432
        %v497 = vpack.c.b16 %v449, %v433
        %v498 = vpack.c.b16 %v450, %v434
        %v499 = vpack.c.b16 %v451, %v435
        %v500 = vpack.c.b16 %v452, %v436
        %v501 = vpack.c.b16 %v453, %v437
        %v502 = vpack.c.b16 %v454, %v438
        %v503 = vpack.c.b16 %v455, %v439
        %v504 = vpack.c.b16 %v456, %v440
        %v505 = vpack.c.b16 %v473, %v457
        %v506 = vpack.c.b16 %v474, %v458
        %v507 = vpack.c.b16 %v475, %v459
        %v508 = vpack.c.b16 %v476, %v460
        %v509 = vpack.c.b16 %v477, %v461
        %v510 = vpack.c.b16 %v478, %v462
        %v511 = vpack.c.b16 %v479, %v463
        %v512 = vpack.c.b16 %v480, %v464
        %v513 = vpack.c.b16 %v481, %v465
        %v514 = vpack.c.b16 %v482, %v466
        %v515 = vpack.c.b16 %v483, %v467
        %v516 = vpack.c.b16 %v484, %v468
        %v517 = vpack.c.b16 %v485, %v469
        %v518 = vpack.c.b16 %v486, %v470
        %v519 = vpack.c.b16 %v487, %v471
        %v520 = vpack.c.b16 %v488, %v472
        %vm553 = vcmask 261120
        %v555 = vsel %vm553, %v276, 0
        %557 = vmatprep.subr.bf16.mxu0 %v490
        %558 = vmatpush1.bf16.msra.mxu0 %v489
        %559 = vmatprep.subr.bf16.mxu0 %v506
        %560 = vmatpush1.bf16.msra.mxu0 %v505
        %561 = vmatprep.subr.bf16.mxu0 0
        %562 = vmatpush1.bf16.msra.mxu0 0
        %563 = vmatprep.subr.bf16.mxu0 0
        %564 = vmatpush1.bf16.msra.mxu0 0
        %565 = vmatprep.subr.bf16.mxu0 0
        %566 = vmatpush1.bf16.msra.mxu0 0
        %567 = vmatprep.subr.bf16.mxu0 0
        %568 = vmatpush1.bf16.msra.mxu0 0
        %569 = vmatprep.subr.bf16.mxu0 0
        %570 = vmatpush1.bf16.msra.mxu0 0
        %571 = vmatprep.subr.bf16.mxu0 0
        %572 = vmatpush1.bf16.msra.mxu0 0
        %573 = vmatprep.subr.bf16.mxu0 0
        %574 = vmatpush1.bf16.msra.mxu0 0
        %575 = vmatprep.subr.bf16.mxu0 0
        %576 = vmatpush1.bf16.msra.mxu0 0
        %577 = vmatprep.subr.bf16.mxu0 0
        %578 = vmatpush1.bf16.msra.mxu0 0
        %579 = vmatprep.subr.bf16.mxu0 0
        %580 = vmatpush1.bf16.msra.mxu0 0
        %581 = vmatprep.subr.bf16.mxu0 0
        %582 = vmatpush1.bf16.msra.mxu0 0
        %583 = vmatprep.subr.bf16.mxu0 0
        %584 = vmatpush1.bf16.msra.mxu0 0
        %585 = vmatprep.subr.bf16.mxu0 0
        %586 = vmatpush1.bf16.msra.mxu0 0
        %587 = vmatprep.subr.bf16.mxu0 0
        %588 = vmatpush1.bf16.msra.mxu0 0
        %589 = vmatprep.mubr.bf16.mxu0 0
        %590 = vmatmul.mubr.bf16.gmra.mrb[0].mxu0 %v555
        %v591 = vpop.f32.mrb[0].mxu0
        %v592 = vadd.f32 %v316, %v591
        %v593 = vpop.f32.mrb[0].mxu0
        %v594 = vadd.f32 %v320, %v593
        %v595 = vpop.f32.mrb[0].mxu0
        %v596 = vpop.f32.mrb[0].mxu0
        %597 = vdwg.mxu0
        %598 = vmatprep.subr.bf16.mxu0 %v492
        %599 = vmatpush1.bf16.msra.mxu0 %v491
        %600 = vmatprep.subr.bf16.mxu0 %v508
        %601 = vmatpush1.bf16.msra.mxu0 %v507
        %602 = vmatprep.subr.bf16.mxu0 0
        %603 = vmatpush1.bf16.msra.mxu0 0
        %604 = vmatprep.subr.bf16.mxu0 0
        %605 = vmatpush1.bf16.msra.mxu0 0
        %606 = vmatprep.subr.bf16.mxu0 0
        %607 = vmatpush1.bf16.msra.mxu0 0
        %608 = vmatprep.subr.bf16.mxu0 0
        %609 = vmatpush1.bf16.msra.mxu0 0
        %610 = vmatprep.subr.bf16.mxu0 0
        %611 = vmatpush1.bf16.msra.mxu0 0
        %612 = vmatprep.subr.bf16.mxu0 0
        %613 = vmatpush1.bf16.msra.mxu0 0
        %614 = vmatprep.subr.bf16.mxu0 0
        %615 = vmatpush1.bf16.msra.mxu0 0
        %616 = vmatprep.subr.bf16.mxu0 0
        %617 = vmatpush1.bf16.msra.mxu0 0
        %618 = vmatprep.subr.bf16.mxu0 0
        %619 = vmatpush1.bf16.msra.mxu0 0
        %620 = vmatprep.subr.bf16.mxu0 0
        %621 = vmatpush1.bf16.msra.mxu0 0
        %622 = vmatprep.subr.bf16.mxu0 0
        %623 = vmatpush1.bf16.msra.mxu0 0
        %624 = vmatprep.subr.bf16.mxu0 0
        %625 = vmatpush1.bf16.msra.mxu0 0
        %626 = vmatprep.subr.bf16.mxu0 0
        %627 = vmatpush1.bf16.msra.mxu0 0
        %628 = vmatprep.subr.bf16.mxu0 0
        %629 = vmatpush1.bf16.msra.mxu0 0
        %630 = vmatprep.mubr.bf16.mxu0 0
        %631 = vmatmul.mubr.bf16.gmra.mrb[0].mxu0 %v555
        %v632 = vpop.f32.mrb[0].mxu0
        %v633 = vadd.f32 %v324, %v632
        %v634 = vpop.f32.mrb[0].mxu0
        %v635 = vadd.f32 %v328, %v634
        %v636 = vpop.f32.mrb[0].mxu0
        %v637 = vpop.f32.mrb[0].mxu0
        %638 = vdwg.mxu0
        %639 = vmatprep.subr.bf16.mxu0 %v494
        %640 = vmatpush1.bf16.msra.mxu0 %v493
        %641 = vmatprep.subr.bf16.mxu0 %v510
        %642 = vmatpush1.bf16.msra.mxu0 %v509
        %643 = vmatprep.subr.bf16.mxu0 0
        %644 = vmatpush1.bf16.msra.mxu0 0
        %645 = vmatprep.subr.bf16.mxu0 0
        %646 = vmatpush1.bf16.msra.mxu0 0
        %647 = vmatprep.subr.bf16.mxu0 0
        %648 = vmatpush1.bf16.msra.mxu0 0
        %649 = vmatprep.subr.bf16.mxu0 0
        %650 = vmatpush1.bf16.msra.mxu0 0
        %651 = vmatprep.subr.bf16.mxu0 0
        %652 = vmatpush1.bf16.msra.mxu0 0
        %653 = vmatprep.subr.bf16.mxu0 0
        %654 = vmatpush1.bf16.msra.mxu0 0
        %655 = vmatprep.subr.bf16.mxu0 0
        %656 = vmatpush1.bf16.msra.mxu0 0
        %657 = vmatprep.subr.bf16.mxu0 0
        %658 = vmatpush1.bf16.msra.mxu0 0
        %659 = vmatprep.subr.bf16.mxu0 0
        %660 = vmatpush1.bf16.msra.mxu0 0
        %661 = vmatprep.subr.bf16.mxu0 0
        %662 = vmatpush1.bf16.msra.mxu0 0
        %663 = vmatprep.subr.bf16.mxu0 0
        %664 = vmatpush1.bf16.msra.mxu0 0
        %665 = vmatprep.subr.bf16.mxu0 0
        %666 = vmatpush1.bf16.msra.mxu0 0
        %667 = vmatprep.subr.bf16.mxu0 0
        %668 = vmatpush1.bf16.msra.mxu0 0
        %669 = vmatprep.subr.bf16.mxu0 0
        %670 = vmatpush1.bf16.msra.mxu0 0
        %671 = vmatprep.mubr.bf16.mxu0 0
        %672 = vmatmul.mubr.bf16.gmra.mrb[0].mxu0 %v555
        %v673 = vpop.f32.mrb[0].mxu0
        %v674 = vadd.f32 %v332, %v673
        %v675 = vpop.f32.mrb[0].mxu0
        %v676 = vadd.f32 %v336, %v675
        %v677 = vpop.f32.mrb[0].mxu0
        %v678 = vpop.f32.mrb[0].mxu0
        %679 = vdwg.mxu0
        %680 = vmatprep.subr.bf16.mxu0 %v496
        %681 = vmatpush1.bf16.msra.mxu0 %v495
        %682 = vmatprep.subr.bf16.mxu0 %v512
        %683 = vmatpush1.bf16.msra.mxu0 %v511
        %684 = vmatprep.subr.bf16.mxu0 0
        %685 = vmatpush1.bf16.msra.mxu0 0
        %686 = vmatprep.subr.bf16.mxu0 0
        %687 = vmatpush1.bf16.msra.mxu0 0
        %688 = vmatprep.subr.bf16.mxu0 0
        %689 = vmatpush1.bf16.msra.mxu0 0
        %690 = vmatprep.subr.bf16.mxu0 0
        %691 = vmatpush1.bf16.msra.mxu0 0
        %692 = vmatprep.subr.bf16.mxu0 0
        %693 = vmatpush1.bf16.msra.mxu0 0
        %694 = vmatprep.subr.bf16.mxu0 0
        %695 = vmatpush1.bf16.msra.mxu0 0
        %696 = vmatprep.subr.bf16.mxu0 0
        %697 = vmatpush1.bf16.msra.mxu0 0
        %698 = vmatprep.subr.bf16.mxu0 0
        %699 = vmatpush1.bf16.msra.mxu0 0
        %700 = vmatprep.subr.bf16.mxu0 0
        %701 = vmatpush1.bf16.msra.mxu0 0
        %702 = vmatprep.subr.bf16.mxu0 0
        %703 = vmatpush1.bf16.msra.mxu0 0
        %704 = vmatprep.subr.bf16.mxu0 0
        %705 = vmatpush1.bf16.msra.mxu0 0
        %706 = vmatprep.subr.bf16.mxu0 0
        %707 = vmatpush1.bf16.msra.mxu0 0
        %708 = vmatprep.subr.bf16.mxu0 0
        %709 = vmatpush1.bf16.msra.mxu0 0
        %710 = vmatprep.subr.bf16.mxu0 0
        %711 = vmatpush1.bf16.msra.mxu0 0
        %712 = vmatprep.mubr.bf16.mxu0 0
        %713 = vmatmul.mubr.bf16.gmra.mrb[0].mxu0 %v555
        %v714 = vpop.f32.mrb[0].mxu0
        %v715 = vadd.f32 %v340, %v714
        %v716 = vpop.f32.mrb[0].mxu0
        %v717 = vadd.f32 %v344, %v716
        %v718 = vpop.f32.mrb[0].mxu0
        %v719 = vpop.f32.mrb[0].mxu0
        %720 = vdwg.mxu0
        %721 = vmatprep.subr.bf16.mxu0 %v498
        %722 = vmatpush1.bf16.msra.mxu0 %v497
        %723 = vmatprep.subr.bf16.mxu0 %v514
        %724 = vmatpush1.bf16.msra.mxu0 %v513
        %725 = vmatprep.subr.bf16.mxu0 0
        %726 = vmatpush1.bf16.msra.mxu0 0
        %727 = vmatprep.subr.bf16.mxu0 0
        %728 = vmatpush1.bf16.msra.mxu0 0
        %729 = vmatprep.subr.bf16.mxu0 0
        %730 = vmatpush1.bf16.msra.mxu0 0
        %731 = vmatprep.subr.bf16.mxu0 0
        %732 = vmatpush1.bf16.msra.mxu0 0
        %733 = vmatprep.subr.bf16.mxu0 0
        %734 = vmatpush1.bf16.msra.mxu0 0
        %735 = vmatprep.subr.bf16.mxu0 0
        %736 = vmatpush1.bf16.msra.mxu0 0
        %737 = vmatprep.subr.bf16.mxu0 0
        %738 = vmatpush1.bf16.msra.mxu0 0
        %739 = vmatprep.subr.bf16.mxu0 0
        %740 = vmatpush1.bf16.msra.mxu0 0
        %741 = vmatprep.subr.bf16.mxu0 0
        %742 = vmatpush1.bf16.msra.mxu0 0
        %743 = vmatprep.subr.bf16.mxu0 0
        %744 = vmatpush1.bf16.msra.mxu0 0
        %745 = vmatprep.subr.bf16.mxu0 0
        %746 = vmatpush1.bf16.msra.mxu0 0
        %747 = vmatprep.subr.bf16.mxu0 0
        %748 = vmatpush1.bf16.msra.mxu0 0
        %749 = vmatprep.subr.bf16.mxu0 0
        %750 = vmatpush1.bf16.msra.mxu0 0
        %751 = vmatprep.subr.bf16.mxu0 0
        %752 = vmatpush1.bf16.msra.mxu0 0
        %753 = vmatprep.mubr.bf16.mxu0 0
        %754 = vmatmul.mubr.bf16.gmra.mrb[0].mxu0 %v555
        %v755 = vpop.f32.mrb[0].mxu0
        %v756 = vadd.f32 %v348, %v755
        %v757 = vpop.f32.mrb[0].mxu0
        %v758 = vadd.f32 %v352, %v757
        %v759 = vpop.f32.mrb[0].mxu0
        %v760 = vpop.f32.mrb[0].mxu0
        %761 = vdwg.mxu0
        %762 = vmatprep.subr.bf16.mxu0 %v500
        %763 = vmatpush1.bf16.msra.mxu0 %v499
        %764 = vmatprep.subr.bf16.mxu0 %v516
        %765 = vmatpush1.bf16.msra.mxu0 %v515
        %766 = vmatprep.subr.bf16.mxu0 0
        %767 = vmatpush1.bf16.msra.mxu0 0
        %768 = vmatprep.subr.bf16.mxu0 0
        %769 = vmatpush1.bf16.msra.mxu0 0
        %770 = vmatprep.subr.bf16.mxu0 0
        %771 = vmatpush1.bf16.msra.mxu0 0
        %772 = vmatprep.subr.bf16.mxu0 0
        %773 = vmatpush1.bf16.msra.mxu0 0
        %774 = vmatprep.subr.bf16.mxu0 0
        %775 = vmatpush1.bf16.msra.mxu0 0
        %776 = vmatprep.subr.bf16.mxu0 0
        %777 = vmatpush1.bf16.msra.mxu0 0
        %778 = vmatprep.subr.bf16.mxu0 0
        %779 = vmatpush1.bf16.msra.mxu0 0
        %780 = vmatprep.subr.bf16.mxu0 0
        %781 = vmatpush1.bf16.msra.mxu0 0
        %782 = vmatprep.subr.bf16.mxu0 0
        %783 = vmatpush1.bf16.msra.mxu0 0
        %784 = vmatprep.subr.bf16.mxu0 0
        %785 = vmatpush1.bf16.msra.mxu0 0
        %786 = vmatprep.subr.bf16.mxu0 0
        %787 = vmatpush1.bf16.msra.mxu0 0
        %788 = vmatprep.subr.bf16.mxu0 0
        %789 = vmatpush1.bf16.msra.mxu0 0
        %790 = vmatprep.subr.bf16.mxu0 0
        %791 = vmatpush1.bf16.msra.mxu0 0
        %792 = vmatprep.subr.bf16.mxu0 0
        %793 = vmatpush1.bf16.msra.mxu0 0
        %794 = vmatprep.mubr.bf16.mxu0 0
        %795 = vmatmul.mubr.bf16.gmra.mrb[0].mxu0 %v555
        %v796 = vpop.f32.mrb[0].mxu0
        %v797 = vadd.f32 %v356, %v796
        %v798 = vpop.f32.mrb[0].mxu0
        %v799 = vadd.f32 %v360, %v798
        %v800 = vpop.f32.mrb[0].mxu0
        %v801 = vpop.f32.mrb[0].mxu0
        %802 = vdwg.mxu0
        %803 = vmatprep.subr.bf16.mxu0 %v502
        %804 = vmatpush1.bf16.msra.mxu0 %v501
        %805 = vmatprep.subr.bf16.mxu0 %v518
        %806 = vmatpush1.bf16.msra.mxu0 %v517
        %807 = vmatprep.subr.bf16.mxu0 0
        %808 = vmatpush1.bf16.msra.mxu0 0
        %809 = vmatprep.subr.bf16.mxu0 0
        %810 = vmatpush1.bf16.msra.mxu0 0
        %811 = vmatprep.subr.bf16.mxu0 0
        %812 = vmatpush1.bf16.msra.mxu0 0
        %813 = vmatprep.subr.bf16.mxu0 0
        %814 = vmatpush1.bf16.msra.mxu0 0
        %815 = vmatprep.subr.bf16.mxu0 0
        %816 = vmatpush1.bf16.msra.mxu0 0
        %817 = vmatprep.subr.bf16.mxu0 0
        %818 = vmatpush1.bf16.msra.mxu0 0
        %819 = vmatprep.subr.bf16.mxu0 0
        %820 = vmatpush1.bf16.msra.mxu0 0
        %821 = vmatprep.subr.bf16.mxu0 0
        %822 = vmatpush1.bf16.msra.mxu0 0
        %823 = vmatprep.subr.bf16.mxu0 0
        %824 = vmatpush1.bf16.msra.mxu0 0
        %825 = vmatprep.subr.bf16.mxu0 0
        %826 = vmatpush1.bf16.msra.mxu0 0
        %827 = vmatprep.subr.bf16.mxu0 0
        %828 = vmatpush1.bf16.msra.mxu0 0
        %829 = vmatprep.subr.bf16.mxu0 0
        %830 = vmatpush1.bf16.msra.mxu0 0
        %831 = vmatprep.subr.bf16.mxu0 0
        %832 = vmatpush1.bf16.msra.mxu0 0
        %833 = vmatprep.subr.bf16.mxu0 0
        %834 = vmatpush1.bf16.msra.mxu0 0
        %835 = vmatprep.mubr.bf16.mxu0 0
        %836 = vmatmul.mubr.bf16.gmra.mrb[0].mxu0 %v555
        %v837 = vpop.f32.mrb[0].mxu0
        %v838 = vadd.f32 %v364, %v837
        %v839 = vpop.f32.mrb[0].mxu0
        %v840 = vadd.f32 %v368, %v839
        %v841 = vpop.f32.mrb[0].mxu0
        %v842 = vpop.f32.mrb[0].mxu0
        %843 = vdwg.mxu0
        %844 = vmatprep.subr.bf16.mxu0 %v504
        %845 = vmatpush1.bf16.msra.mxu0 %v503
        %846 = vmatprep.subr.bf16.mxu0 %v520
        %847 = vmatpush1.bf16.msra.mxu0 %v519
        %848 = vmatprep.subr.bf16.mxu0 0
        %849 = vmatpush1.bf16.msra.mxu0 0
        %850 = vmatprep.subr.bf16.mxu0 0
        %851 = vmatpush1.bf16.msra.mxu0 0
        %852 = vmatprep.subr.bf16.mxu0 0
        %853 = vmatpush1.bf16.msra.mxu0 0
        %854 = vmatprep.subr.bf16.mxu0 0
        %855 = vmatpush1.bf16.msra.mxu0 0
        %856 = vmatprep.subr.bf16.mxu0 0
        %857 = vmatpush1.bf16.msra.mxu0 0
        %858 = vmatprep.subr.bf16.mxu0 0
        %859 = vmatpush1.bf16.msra.mxu0 0
        %860 = vmatprep.subr.bf16.mxu0 0
        %861 = vmatpush1.bf16.msra.mxu0 0
        %862 = vmatprep.subr.bf16.mxu0 0
        %863 = vmatpush1.bf16.msra.mxu0 0
        %864 = vmatprep.subr.bf16.mxu0 0
        %865 = vmatpush1.bf16.msra.mxu0 0
        %866 = vmatprep.subr.bf16.mxu0 0
        %867 = vmatpush1.bf16.msra.mxu0 0
        %868 = vmatprep.subr.bf16.mxu0 0
        %869 = vmatpush1.bf16.msra.mxu0 0
        %870 = vmatprep.subr.bf16.mxu0 0
        %871 = vmatpush1.bf16.msra.mxu0 0
        %872 = vmatprep.subr.bf16.mxu0 0
        %873 = vmatpush1.bf16.msra.mxu0 0
        %874 = vmatprep.subr.bf16.mxu0 0
        %875 = vmatpush1.bf16.msra.mxu0 0
        %876 = vmatprep.mubr.bf16.mxu0 0
        %877 = vmatmul.mubr.bf16.gmra.mrb[0].mxu0 %v555
        %v878 = vpop.f32.mrb[0].mxu0
        %v879 = vadd.f32 %v372, %v878
        %v880 = vpop.f32.mrb[0].mxu0
        %v881 = vadd.f32 %v376, %v880
        %v882 = vpop.f32.mrb[0].mxu0
        %v883 = vpop.f32.mrb[0].mxu0
        %884 = vdwg.mxu0
        %v885 = vmax.f32 %v592, 0.0
        %v886 = vmax.f32 %v594, 0.0
        %v887 = vmax.f32 %v633, 0.0
        %v888 = vmax.f32 %v635, 0.0
        %v889 = vmax.f32 %v674, 0.0
        %v890 = vmax.f32 %v676, 0.0
        %v891 = vmax.f32 %v715, 0.0
        %v892 = vmax.f32 %v717, 0.0
        %v893 = vmax.f32 %v756, 0.0
        %v894 = vmax.f32 %v758, 0.0
        %v895 = vmax.f32 %v797, 0.0
        %v896 = vmax.f32 %v799, 0.0
        %v897 = vmax.f32 %v838, 0.0
        %v898 = vmax.f32 %v840, 0.0
        %v899 = vmax.f32 %v879, 0.0
        %v900 = vmax.f32 %v881, 0.0
        %v901 = vpack.c.bf16 %v885, %v885
        %v902 = vpack.c.bf16 %v886, %v886
        %v903 = vpack.c.bf16 %v887, %v887
        %v904 = vpack.c.bf16 %v888, %v888
        %v905 = vpack.c.bf16 %v889, %v889
        %v906 = vpack.c.bf16 %v890, %v890
        %v907 = vpack.c.bf16 %v891, %v891
        %v908 = vpack.c.bf16 %v892, %v892
        %v909 = vpack.c.bf16 %v893, %v893
        %v910 = vpack.c.bf16 %v894, %v894
        %v911 = vpack.c.bf16 %v895, %v895
        %v912 = vpack.c.bf16 %v896, %v896
        %v913 = vpack.c.bf16 %v897, %v897
        %v914 = vpack.c.bf16 %v898, %v898
        %v915 = vpack.c.bf16 %v899, %v899
        %v916 = vpack.c.bf16 %v900, %v900
        %v917 = vld [vmem:[%s3] sm:$0xf]
        %v918 = vld [vmem:[%s3 + $0x4] sm:$0xf]
        %v919 = vld [vmem:[%s3 + $0x8] sm:$0xf]
        %v920 = vld [vmem:[%s3 + $0xc] sm:$0xf]
        %v921 = vld [vmem:[%s3 + $0x10] sm:$0xf]
        %v922 = vld [vmem:[%s3 + $0x14] sm:$0xf]
        %v923 = vld [vmem:[%s3 + $0x18] sm:$0xf]
        %v924 = vld [vmem:[%s3 + $0x1c] sm:$0xf]
        %v925 = vld [vmem:[%s3 + $0x20] sm:$0xf]
        %v926 = vld [vmem:[%s3 + $0x24] sm:$0xf]
        %v927 = vld [vmem:[%s3 + $0x28] sm:$0xf]
        %v928 = vld [vmem:[%s3 + $0x2c] sm:$0xf]
        %v929 = vld [vmem:[%s3 + $0x30] sm:$0xf]
        %v930 = vld [vmem:[%s3 + $0x34] sm:$0xf]
        %v931 = vld [vmem:[%s3 + $0x38] sm:$0xf]
        %v932 = vld [vmem:[%s3 + $0x3c] sm:$0xf]
        %v933 = vld [vmem:[%s3 + $0x40] sm:$0xf]
        %v934 = vld [vmem:[%s3 + $0x44] sm:$0xf]
        %v935 = vld [vmem:[%s3 + $0x48] sm:$0xf]
        %v936 = vld [vmem:[%s3 + $0x4c] sm:$0xf]
        %v937 = vld [vmem:[%s3 + $0x50] sm:$0xf]
        %v938 = vld [vmem:[%s3 + $0x54] sm:$0xf]
        %v939 = vld [vmem:[%s3 + $0x58] sm:$0xf]
        %v940 = vld [vmem:[%s3 + $0x5c] sm:$0xf]
        %v941 = vld [vmem:[%s3 + $0x60] sm:$0xf]
        %v942 = vld [vmem:[%s3 + $0x64] sm:$0xf]
        %v943 = vld [vmem:[%s3 + $0x68] sm:$0xf]
        %v944 = vld [vmem:[%s3 + $0x6c] sm:$0xf]
        %v945 = vld [vmem:[%s3 + $0x70] sm:$0xf]
        %v946 = vld [vmem:[%s3 + $0x74] sm:$0xf]
        %v947 = vld [vmem:[%s3 + $0x78] sm:$0xf]
        %v948 = vld [vmem:[%s3 + $0x7c] sm:$0xf]
        %v949 = vld [vmem:[%s3 + $0x80] sm:$0xf]
        %v950 = vld [vmem:[%s3 + $0x84] sm:$0xf]
        %v951 = vld [vmem:[%s3 + $0x88] sm:$0xf]
        %v952 = vld [vmem:[%s3 + $0x8c] sm:$0xf]
        %v953 = vld [vmem:[%s3 + $0x90] sm:$0xf]
        %v954 = vld [vmem:[%s3 + $0x94] sm:$0xf]
        %v955 = vld [vmem:[%s3 + $0x98] sm:$0xf]
        %v956 = vld [vmem:[%s3 + $0x9c] sm:$0xf]
        %v957 = vld [vmem:[%s3 + $0xa0] sm:$0xf]
        %v958 = vld [vmem:[%s3 + $0xa4] sm:$0xf]
        %v959 = vld [vmem:[%s3 + $0xa8] sm:$0xf]
        %v960 = vld [vmem:[%s3 + $0xac] sm:$0xf]
        %v961 = vld [vmem:[%s3 + $0xb0] sm:$0xf]
        %v962 = vld [vmem:[%s3 + $0xb4] sm:$0xf]
        %v963 = vld [vmem:[%s3 + $0xb8] sm:$0xf]
        %v964 = vld [vmem:[%s3 + $0xbc] sm:$0xf]
        %v965 = vld [vmem:[%s3 + $0xc0] sm:$0xf]
        %v966 = vld [vmem:[%s3 + $0xc4] sm:$0xf]
        %v967 = vld [vmem:[%s3 + $0xc8] sm:$0xf]
        %v968 = vld [vmem:[%s3 + $0xcc] sm:$0xf]
        %v969 = vld [vmem:[%s3 + $0xd0] sm:$0xf]
        %v970 = vld [vmem:[%s3 + $0xd4] sm:$0xf]
        %v971 = vld [vmem:[%s3 + $0xd8] sm:$0xf]
        %v972 = vld [vmem:[%s3 + $0xdc] sm:$0xf]
        %v973 = vld [vmem:[%s3 + $0xe0] sm:$0xf]
        %v974 = vld [vmem:[%s3 + $0xe4] sm:$0xf]
        %v975 = vld [vmem:[%s3 + $0xe8] sm:$0xf]
        %v976 = vld [vmem:[%s3 + $0xec] sm:$0xf]
        %v977 = vld [vmem:[%s3 + $0xf0] sm:$0xf]
        %v978 = vld [vmem:[%s3 + $0xf4] sm:$0xf]
        %v979 = vld [vmem:[%s3 + $0xf8] sm:$0xf]
        %v980 = vld [vmem:[%s3 + $0xfc] sm:$0xf]
        %v981 = vld [vmem:[%s3 + $0x100] sm:$0xf]
        %v982 = vld [vmem:[%s3 + $0x104] sm:$0xf]
        %v983 = vld [vmem:[%s3 + $0x108] sm:$0xf]
        %v984 = vld [vmem:[%s3 + $0x10c] sm:$0xf]
        %v985 = vld [vmem:[%s3 + $0x110] sm:$0xf]
        %v986 = vld [vmem:[%s3 + $0x114] sm:$0xf]
        %v987 = vld [vmem:[%s3 + $0x118] sm:$0xf]
        %v988 = vld [vmem:[%s3 + $0x11c] sm:$0xf]
        %v989 = vld [vmem:[%s3 + $0x120] sm:$0xf]
        %v990 = vld [vmem:[%s3 + $0x124] sm:$0xf]
        %v991 = vld [vmem:[%s3 + $0x128] sm:$0xf]
        %v992 = vld [vmem:[%s3 + $0x12c] sm:$0xf]
        %v993 = vld [vmem:[%s3 + $0x130] sm:$0xf]
        %v994 = vld [vmem:[%s3 + $0x134] sm:$0xf]
        %v995 = vld [vmem:[%s3 + $0x138] sm:$0xf]
        %v996 = vld [vmem:[%s3 + $0x13c] sm:$0xf]
        %v997 = vld [vmem:[%s3 + $0x140] sm:$0xf]
        %v998 = vld [vmem:[%s3 + $0x144] sm:$0xf]
        %v999 = vld [vmem:[%s3 + $0x148] sm:$0xf]
        %v1000 = vld [vmem:[%s3 + $0x14c] sm:$0xf]
        %v1001 = vld [vmem:[%s3 + $0x150] sm:$0xf]
        %v1002 = vld [vmem:[%s3 + $0x154] sm:$0xf]
        %v1003 = vld [vmem:[%s3 + $0x158] sm:$0xf]
        %v1004 = vld [vmem:[%s3 + $0x15c] sm:$0xf]
        %v1005 = vld [vmem:[%s3 + $0x160] sm:$0xf]
        %v1006 = vld [vmem:[%s3 + $0x164] sm:$0xf]
        %v1007 = vld [vmem:[%s3 + $0x168] sm:$0xf]
        %v1008 = vld [vmem:[%s3 + $0x16c] sm:$0xf]
        %v1009 = vld [vmem:[%s3 + $0x170] sm:$0xf]
        %v1010 = vld [vmem:[%s3 + $0x174] sm:$0xf]
        %v1011 = vld [vmem:[%s3 + $0x178] sm:$0xf]
        %v1012 = vld [vmem:[%s3 + $0x17c] sm:$0xf]
        %v1013 = vld [vmem:[%s3 + $0x180] sm:$0xf]
        %v1014 = vld [vmem:[%s3 + $0x184] sm:$0xf]
        %v1015 = vld [vmem:[%s3 + $0x188] sm:$0xf]
        %v1016 = vld [vmem:[%s3 + $0x18c] sm:$0xf]
        %v1017 = vld [vmem:[%s3 + $0x190] sm:$0xf]
        %v1018 = vld [vmem:[%s3 + $0x194] sm:$0xf]
        %v1019 = vld [vmem:[%s3 + $0x198] sm:$0xf]
        %v1020 = vld [vmem:[%s3 + $0x19c] sm:$0xf]
        %v1021 = vld [vmem:[%s3 + $0x1a0] sm:$0xf]
        %v1022 = vld [vmem:[%s3 + $0x1a4] sm:$0xf]
        %v1023 = vld [vmem:[%s3 + $0x1a8] sm:$0xf]
        %v1024 = vld [vmem:[%s3 + $0x1ac] sm:$0xf]
        %v1025 = vld [vmem:[%s3 + $0x1b0] sm:$0xf]
        %v1026 = vld [vmem:[%s3 + $0x1b4] sm:$0xf]
        %v1027 = vld [vmem:[%s3 + $0x1b8] sm:$0xf]
        %v1028 = vld [vmem:[%s3 + $0x1bc] sm:$0xf]
        %v1029 = vld [vmem:[%s3 + $0x1c0] sm:$0xf]
        %v1030 = vld [vmem:[%s3 + $0x1c4] sm:$0xf]
        %v1031 = vld [vmem:[%s3 + $0x1c8] sm:$0xf]
        %v1032 = vld [vmem:[%s3 + $0x1cc] sm:$0xf]
        %v1033 = vld [vmem:[%s3 + $0x1d0] sm:$0xf]
        %v1034 = vld [vmem:[%s3 + $0x1d4] sm:$0xf]
        %v1035 = vld [vmem:[%s3 + $0x1d8] sm:$0xf]
        %v1036 = vld [vmem:[%s3 + $0x1dc] sm:$0xf]
        %v1037 = vld [vmem:[%s3 + $0x1e0] sm:$0xf]
        %v1038 = vld [vmem:[%s3 + $0x1e4] sm:$0xf]
        %v1039 = vld [vmem:[%s3 + $0x1e8] sm:$0xf]
        %v1040 = vld [vmem:[%s3 + $0x1ec] sm:$0xf]
        %v1041 = vld [vmem:[%s3 + $0x1f0] sm:$0xf]
        %v1042 = vld [vmem:[%s3 + $0x1f4] sm:$0xf]
        %v1043 = vld [vmem:[%s3 + $0x1f8] sm:$0xf]
        %v1044 = vld [vmem:[%s3 + $0x1fc] sm:$0xf]
        %v1045 = vld [vmem:[%s3 + $0x200] sm:$0xf]
        %v1046 = vld [vmem:[%s3 + $0x204] sm:$0xf]
        %v1047 = vld [vmem:[%s3 + $0x208] sm:$0xf]
        %v1048 = vld [vmem:[%s3 + $0x20c] sm:$0xf]
        %v1049 = vld [vmem:[%s3 + $0x210] sm:$0xf]
        %v1050 = vld [vmem:[%s3 + $0x214] sm:$0xf]
        %v1051 = vld [vmem:[%s3 + $0x218] sm:$0xf]
        %v1052 = vld [vmem:[%s3 + $0x21c] sm:$0xf]
        %v1053 = vld [vmem:[%s3 + $0x220] sm:$0xf]
        %v1054 = vld [vmem:[%s3 + $0x224] sm:$0xf]
        %v1055 = vld [vmem:[%s3 + $0x228] sm:$0xf]
        %v1056 = vld [vmem:[%s3 + $0x22c] sm:$0xf]
        %v1057 = vld [vmem:[%s3 + $0x230] sm:$0xf]
        %v1058 = vld [vmem:[%s3 + $0x234] sm:$0xf]
        %v1059 = vld [vmem:[%s3 + $0x238] sm:$0xf]
        %v1060 = vld [vmem:[%s3 + $0x23c] sm:$0xf]
        %v1061 = vld [vmem:[%s3 + $0x240] sm:$0xf]
        %v1062 = vld [vmem:[%s3 + $0x244] sm:$0xf]
        %v1063 = vld [vmem:[%s3 + $0x248] sm:$0xf]
        %v1064 = vld [vmem:[%s3 + $0x24c] sm:$0xf]
        %v1065 = vld [vmem:[%s3 + $0x250] sm:$0xf]
        %v1066 = vld [vmem:[%s3 + $0x254] sm:$0xf]
        %v1067 = vld [vmem:[%s3 + $0x258] sm:$0xf]
        %v1068 = vld [vmem:[%s3 + $0x25c] sm:$0xf]
        %v1069 = vld [vmem:[%s3 + $0x260] sm:$0xf]
        %v1070 = vld [vmem:[%s3 + $0x264] sm:$0xf]
        %v1071 = vld [vmem:[%s3 + $0x268] sm:$0xf]
        %v1072 = vld [vmem:[%s3 + $0x26c] sm:$0xf]
        %v1073 = vld [vmem:[%s3 + $0x270] sm:$0xf]
        %v1074 = vld [vmem:[%s3 + $0x274] sm:$0xf]
        %v1075 = vld [vmem:[%s3 + $0x278] sm:$0xf]
        %v1076 = vld [vmem:[%s3 + $0x27c] sm:$0xf]
        %v1077 = vld [vmem:[%s3 + $0x280] sm:$0xf]
        %v1078 = vld [vmem:[%s3 + $0x284] sm:$0xf]
        %v1079 = vld [vmem:[%s3 + $0x288] sm:$0xf]
        %v1080 = vld [vmem:[%s3 + $0x28c] sm:$0xf]
        %v1081 = vld [vmem:[%s3 + $0x290] sm:$0xf]
        %v1082 = vld [vmem:[%s3 + $0x294] sm:$0xf]
        %v1083 = vld [vmem:[%s3 + $0x298] sm:$0xf]
        %v1084 = vld [vmem:[%s3 + $0x29c] sm:$0xf]
        %v1085 = vld [vmem:[%s3 + $0x2a0] sm:$0xf]
        %v1086 = vld [vmem:[%s3 + $0x2a4] sm:$0xf]
        %v1087 = vld [vmem:[%s3 + $0x2a8] sm:$0xf]
        %v1088 = vld [vmem:[%s3 + $0x2ac] sm:$0xf]
        %v1089 = vld [vmem:[%s3 + $0x2b0] sm:$0xf]
        %v1090 = vld [vmem:[%s3 + $0x2b4] sm:$0xf]
        %v1091 = vld [vmem:[%s3 + $0x2b8] sm:$0xf]
        %v1092 = vld [vmem:[%s3 + $0x2bc] sm:$0xf]
        %v1093 = vld [vmem:[%s3 + $0x2c0] sm:$0xf]
        %v1094 = vld [vmem:[%s3 + $0x2c4] sm:$0xf]
        %v1095 = vld [vmem:[%s3 + $0x2c8] sm:$0xf]
        %v1096 = vld [vmem:[%s3 + $0x2cc] sm:$0xf]
        %v1097 = vld [vmem:[%s3 + $0x2d0] sm:$0xf]
        %v1098 = vld [vmem:[%s3 + $0x2d4] sm:$0xf]
        %v1099 = vld [vmem:[%s3 + $0x2d8] sm:$0xf]
        %v1100 = vld [vmem:[%s3 + $0x2dc] sm:$0xf]
        %v1101 = vld [vmem:[%s3 + $0x2e0] sm:$0xf]
        %v1102 = vld [vmem:[%s3 + $0x2e4] sm:$0xf]
        %v1103 = vld [vmem:[%s3 + $0x2e8] sm:$0xf]
        %v1104 = vld [vmem:[%s3 + $0x2ec] sm:$0xf]
        %v1105 = vld [vmem:[%s3 + $0x2f0] sm:$0xf]
        %v1106 = vld [vmem:[%s3 + $0x2f4] sm:$0xf]
        %v1107 = vld [vmem:[%s3 + $0x2f8] sm:$0xf]
        %v1108 = vld [vmem:[%s3 + $0x2fc] sm:$0xf]
        %v1109 = vld [vmem:[%s3 + $0x300] sm:$0xf]
        %v1110 = vld [vmem:[%s3 + $0x304] sm:$0xf]
        %v1111 = vld [vmem:[%s3 + $0x308] sm:$0xf]
        %v1112 = vld [vmem:[%s3 + $0x30c] sm:$0xf]
        %v1113 = vld [vmem:[%s3 + $0x310] sm:$0xf]
        %v1114 = vld [vmem:[%s3 + $0x314] sm:$0xf]
        %v1115 = vld [vmem:[%s3 + $0x318] sm:$0xf]
        %v1116 = vld [vmem:[%s3 + $0x31c] sm:$0xf]
        %v1117 = vld [vmem:[%s3 + $0x320] sm:$0xf]
        %v1118 = vld [vmem:[%s3 + $0x324] sm:$0xf]
        %v1119 = vld [vmem:[%s3 + $0x328] sm:$0xf]
        %v1120 = vld [vmem:[%s3 + $0x32c] sm:$0xf]
        %v1121 = vld [vmem:[%s3 + $0x330] sm:$0xf]
        %v1122 = vld [vmem:[%s3 + $0x334] sm:$0xf]
        %v1123 = vld [vmem:[%s3 + $0x338] sm:$0xf]
        %v1124 = vld [vmem:[%s3 + $0x33c] sm:$0xf]
        %v1125 = vld [vmem:[%s3 + $0x340] sm:$0xf]
        %v1126 = vld [vmem:[%s3 + $0x344] sm:$0xf]
        %v1127 = vld [vmem:[%s3 + $0x348] sm:$0xf]
        %v1128 = vld [vmem:[%s3 + $0x34c] sm:$0xf]
        %v1129 = vld [vmem:[%s3 + $0x350] sm:$0xf]
        %v1130 = vld [vmem:[%s3 + $0x354] sm:$0xf]
        %v1131 = vld [vmem:[%s3 + $0x358] sm:$0xf]
        %v1132 = vld [vmem:[%s3 + $0x35c] sm:$0xf]
        %v1133 = vld [vmem:[%s3 + $0x360] sm:$0xf]
        %v1134 = vld [vmem:[%s3 + $0x364] sm:$0xf]
        %v1135 = vld [vmem:[%s3 + $0x368] sm:$0xf]
        %v1136 = vld [vmem:[%s3 + $0x36c] sm:$0xf]
        %v1137 = vld [vmem:[%s3 + $0x370] sm:$0xf]
        %v1138 = vld [vmem:[%s3 + $0x374] sm:$0xf]
        %v1139 = vld [vmem:[%s3 + $0x378] sm:$0xf]
        %v1140 = vld [vmem:[%s3 + $0x37c] sm:$0xf]
        %v1141 = vld [vmem:[%s3 + $0x380] sm:$0xf]
        %v1142 = vld [vmem:[%s3 + $0x384] sm:$0xf]
        %v1143 = vld [vmem:[%s3 + $0x388] sm:$0xf]
        %v1144 = vld [vmem:[%s3 + $0x38c] sm:$0xf]
        %v1145 = vld [vmem:[%s3 + $0x390] sm:$0xf]
        %v1146 = vld [vmem:[%s3 + $0x394] sm:$0xf]
        %v1147 = vld [vmem:[%s3 + $0x398] sm:$0xf]
        %v1148 = vld [vmem:[%s3 + $0x39c] sm:$0xf]
        %v1149 = vld [vmem:[%s3 + $0x3a0] sm:$0xf]
        %v1150 = vld [vmem:[%s3 + $0x3a4] sm:$0xf]
        %v1151 = vld [vmem:[%s3 + $0x3a8] sm:$0xf]
        %v1152 = vld [vmem:[%s3 + $0x3ac] sm:$0xf]
        %v1153 = vld [vmem:[%s3 + $0x3b0] sm:$0xf]
        %v1154 = vld [vmem:[%s3 + $0x3b4] sm:$0xf]
        %v1155 = vld [vmem:[%s3 + $0x3b8] sm:$0xf]
        %v1156 = vld [vmem:[%s3 + $0x3bc] sm:$0xf]
        %v1157 = vld [vmem:[%s3 + $0x3c0] sm:$0xf]
        %v1158 = vld [vmem:[%s3 + $0x3c4] sm:$0xf]
        %v1159 = vld [vmem:[%s3 + $0x3c8] sm:$0xf]
        %v1160 = vld [vmem:[%s3 + $0x3cc] sm:$0xf]
        %v1161 = vld [vmem:[%s3 + $0x3d0] sm:$0xf]
        %v1162 = vld [vmem:[%s3 + $0x3d4] sm:$0xf]
        %v1163 = vld [vmem:[%s3 + $0x3d8] sm:$0xf]
        %v1164 = vld [vmem:[%s3 + $0x3dc] sm:$0xf]
        %v1165 = vld [vmem:[%s3 + $0x3e0] sm:$0xf]
        %v1166 = vld [vmem:[%s3 + $0x3e4] sm:$0xf]
        %v1167 = vld [vmem:[%s3 + $0x3e8] sm:$0xf]
        %v1168 = vld [vmem:[%s3 + $0x3ec] sm:$0xf]
        %v1169 = vld [vmem:[%s3 + $0x3f0] sm:$0xf]
        %v1170 = vld [vmem:[%s3 + $0x3f4] sm:$0xf]
        %v1171 = vld [vmem:[%s3 + $0x3f8] sm:$0xf]
        %v1172 = vld [vmem:[%s3 + $0x3fc] sm:$0xf]
        %v1173 = vld [vmem:[%s4] sm:$0x1]
        %v1175 = vlaneseq
        %v1176 = vshrl.u32 %v1175, 7
        %v1177 = vsub.s32 0, %v1176
        %v1178 = vrot.slane %v1173, %v1177
        %v1436 = vunpack.c.l.b16 %v917
        %v1437 = vunpack.c.l.b16 %v918
        %v1438 = vunpack.c.l.b16 %v919
        %v1439 = vunpack.c.l.b16 %v920
        %v1440 = vunpack.c.l.b16 %v921
        %v1441 = vunpack.c.l.b16 %v922
        %v1442 = vunpack.c.l.b16 %v923
        %v1443 = vunpack.c.l.b16 %v924
        %v1444 = vunpack.c.l.b16 %v925
        %v1445 = vunpack.c.l.b16 %v926
        %v1446 = vunpack.c.l.b16 %v927
        %v1447 = vunpack.c.l.b16 %v928
        %v1448 = vunpack.c.l.b16 %v929
        %v1449 = vunpack.c.l.b16 %v930
        %v1450 = vunpack.c.l.b16 %v931
        %v1451 = vunpack.c.l.b16 %v932
        %v1452 = vunpack.c.l.b16 %v933
        %v1453 = vunpack.c.l.b16 %v934
        %v1454 = vunpack.c.l.b16 %v935
        %v1455 = vunpack.c.l.b16 %v936
        %v1456 = vunpack.c.l.b16 %v937
        %v1457 = vunpack.c.l.b16 %v938
        %v1458 = vunpack.c.l.b16 %v939
        %v1459 = vunpack.c.l.b16 %v940
        %v1460 = vunpack.c.l.b16 %v941
        %v1461 = vunpack.c.l.b16 %v942
        %v1462 = vunpack.c.l.b16 %v943
        %v1463 = vunpack.c.l.b16 %v944
        %v1464 = vunpack.c.l.b16 %v945
        %v1465 = vunpack.c.l.b16 %v946
        %v1466 = vunpack.c.l.b16 %v947
        %v1467 = vunpack.c.l.b16 %v948
        %v1468 = vunpack.c.l.b16 %v949
        %v1469 = vunpack.c.l.b16 %v950
        %v1470 = vunpack.c.l.b16 %v951
        %v1471 = vunpack.c.l.b16 %v952
        %v1472 = vunpack.c.l.b16 %v953
        %v1473 = vunpack.c.l.b16 %v954
        %v1474 = vunpack.c.l.b16 %v955
        %v1475 = vunpack.c.l.b16 %v956
        %v1476 = vunpack.c.l.b16 %v957
        %v1477 = vunpack.c.l.b16 %v958
        %v1478 = vunpack.c.l.b16 %v959
        %v1479 = vunpack.c.l.b16 %v960
        %v1480 = vunpack.c.l.b16 %v961
        %v1481 = vunpack.c.l.b16 %v962
        %v1482 = vunpack.c.l.b16 %v963
        %v1483 = vunpack.c.l.b16 %v964
        %v1484 = vunpack.c.l.b16 %v965
        %v1485 = vunpack.c.l.b16 %v966
        %v1486 = vunpack.c.l.b16 %v967
        %v1487 = vunpack.c.l.b16 %v968
        %v1488 = vunpack.c.l.b16 %v969
        %v1489 = vunpack.c.l.b16 %v970
        %v1490 = vunpack.c.l.b16 %v971
        %v1491 = vunpack.c.l.b16 %v972
        %v1492 = vunpack.c.l.b16 %v973
        %v1493 = vunpack.c.l.b16 %v974
        %v1494 = vunpack.c.l.b16 %v975
        %v1495 = vunpack.c.l.b16 %v976
        %v1496 = vunpack.c.l.b16 %v977
        %v1497 = vunpack.c.l.b16 %v978
        %v1498 = vunpack.c.l.b16 %v979
        %v1499 = vunpack.c.l.b16 %v980
        %v1500 = vunpack.c.l.b16 %v981
        %v1501 = vunpack.c.l.b16 %v982
        %v1502 = vunpack.c.l.b16 %v983
        %v1503 = vunpack.c.l.b16 %v984
        %v1504 = vunpack.c.l.b16 %v985
        %v1505 = vunpack.c.l.b16 %v986
        %v1506 = vunpack.c.l.b16 %v987
        %v1507 = vunpack.c.l.b16 %v988
        %v1508 = vunpack.c.l.b16 %v989
        %v1509 = vunpack.c.l.b16 %v990
        %v1510 = vunpack.c.l.b16 %v991
        %v1511 = vunpack.c.l.b16 %v992
        %v1512 = vunpack.c.l.b16 %v993
        %v1513 = vunpack.c.l.b16 %v994
        %v1514 = vunpack.c.l.b16 %v995
        %v1515 = vunpack.c.l.b16 %v996
        %v1516 = vunpack.c.l.b16 %v997
        %v1517 = vunpack.c.l.b16 %v998
        %v1518 = vunpack.c.l.b16 %v999
        %v1519 = vunpack.c.l.b16 %v1000
        %v1520 = vunpack.c.l.b16 %v1001
        %v1521 = vunpack.c.l.b16 %v1002
        %v1522 = vunpack.c.l.b16 %v1003
        %v1523 = vunpack.c.l.b16 %v1004
        %v1524 = vunpack.c.l.b16 %v1005
        %v1525 = vunpack.c.l.b16 %v1006
        %v1526 = vunpack.c.l.b16 %v1007
        %v1527 = vunpack.c.l.b16 %v1008
        %v1528 = vunpack.c.l.b16 %v1009
        %v1529 = vunpack.c.l.b16 %v1010
        %v1530 = vunpack.c.l.b16 %v1011
        %v1531 = vunpack.c.l.b16 %v1012
        %v1532 = vunpack.c.l.b16 %v1013
        %v1533 = vunpack.c.l.b16 %v1014
        %v1534 = vunpack.c.l.b16 %v1015
        %v1535 = vunpack.c.l.b16 %v1016
        %v1536 = vunpack.c.l.b16 %v1017
        %v1537 = vunpack.c.l.b16 %v1018
        %v1538 = vunpack.c.l.b16 %v1019
        %v1539 = vunpack.c.l.b16 %v1020
        %v1540 = vunpack.c.l.b16 %v1021
        %v1541 = vunpack.c.l.b16 %v1022
        %v1542 = vunpack.c.l.b16 %v1023
        %v1543 = vunpack.c.l.b16 %v1024
        %v1544 = vunpack.c.l.b16 %v1025
        %v1545 = vunpack.c.l.b16 %v1026
        %v1546 = vunpack.c.l.b16 %v1027
        %v1547 = vunpack.c.l.b16 %v1028
        %v1548 = vunpack.c.l.b16 %v1029
        %v1549 = vunpack.c.l.b16 %v1030
        %v1550 = vunpack.c.l.b16 %v1031
        %v1551 = vunpack.c.l.b16 %v1032
        %v1552 = vunpack.c.l.b16 %v1033
        %v1553 = vunpack.c.l.b16 %v1034
        %v1554 = vunpack.c.l.b16 %v1035
        %v1555 = vunpack.c.l.b16 %v1036
        %v1556 = vunpack.c.l.b16 %v1037
        %v1557 = vunpack.c.l.b16 %v1038
        %v1558 = vunpack.c.l.b16 %v1039
        %v1559 = vunpack.c.l.b16 %v1040
        %v1560 = vunpack.c.l.b16 %v1041
        %v1561 = vunpack.c.l.b16 %v1042
        %v1562 = vunpack.c.l.b16 %v1043
        %v1563 = vunpack.c.l.b16 %v1044
        %v1564 = vunpack.c.l.b16 %v1045
        %v1565 = vunpack.c.l.b16 %v1046
        %v1566 = vunpack.c.l.b16 %v1047
        %v1567 = vunpack.c.l.b16 %v1048
        %v1568 = vunpack.c.l.b16 %v1049
        %v1569 = vunpack.c.l.b16 %v1050
        %v1570 = vunpack.c.l.b16 %v1051
        %v1571 = vunpack.c.l.b16 %v1052
        %v1572 = vunpack.c.l.b16 %v1053
        %v1573 = vunpack.c.l.b16 %v1054
        %v1574 = vunpack.c.l.b16 %v1055
        %v1575 = vunpack.c.l.b16 %v1056
        %v1576 = vunpack.c.l.b16 %v1057
        %v1577 = vunpack.c.l.b16 %v1058
        %v1578 = vunpack.c.l.b16 %v1059
        %v1579 = vunpack.c.l.b16 %v1060
        %v1580 = vunpack.c.l.b16 %v1061
        %v1581 = vunpack.c.l.b16 %v1062
        %v1582 = vunpack.c.l.b16 %v1063
        %v1583 = vunpack.c.l.b16 %v1064
        %v1584 = vunpack.c.l.b16 %v1065
        %v1585 = vunpack.c.l.b16 %v1066
        %v1586 = vunpack.c.l.b16 %v1067
        %v1587 = vunpack.c.l.b16 %v1068
        %v1588 = vunpack.c.l.b16 %v1069
        %v1589 = vunpack.c.l.b16 %v1070
        %v1590 = vunpack.c.l.b16 %v1071
        %v1591 = vunpack.c.l.b16 %v1072
        %v1592 = vunpack.c.l.b16 %v1073
        %v1593 = vunpack.c.l.b16 %v1074
        %v1594 = vunpack.c.l.b16 %v1075
        %v1595 = vunpack.c.l.b16 %v1076
        %v1596 = vunpack.c.l.b16 %v1077
        %v1597 = vunpack.c.l.b16 %v1078
        %v1598 = vunpack.c.l.b16 %v1079
        %v1599 = vunpack.c.l.b16 %v1080
        %v1600 = vunpack.c.l.b16 %v1081
        %v1601 = vunpack.c.l.b16 %v1082
        %v1602 = vunpack.c.l.b16 %v1083
        %v1603 = vunpack.c.l.b16 %v1084
        %v1604 = vunpack.c.l.b16 %v1085
        %v1605 = vunpack.c.l.b16 %v1086
        %v1606 = vunpack.c.l.b16 %v1087
        %v1607 = vunpack.c.l.b16 %v1088
        %v1608 = vunpack.c.l.b16 %v1089
        %v1609 = vunpack.c.l.b16 %v1090
        %v1610 = vunpack.c.l.b16 %v1091
        %v1611 = vunpack.c.l.b16 %v1092
        %v1612 = vunpack.c.l.b16 %v1093
        %v1613 = vunpack.c.l.b16 %v1094
        %v1614 = vunpack.c.l.b16 %v1095
        %v1615 = vunpack.c.l.b16 %v1096
        %v1616 = vunpack.c.l.b16 %v1097
        %v1617 = vunpack.c.l.b16 %v1098
        %v1618 = vunpack.c.l.b16 %v1099
        %v1619 = vunpack.c.l.b16 %v1100
        %v1620 = vunpack.c.l.b16 %v1101
        %v1621 = vunpack.c.l.b16 %v1102
        %v1622 = vunpack.c.l.b16 %v1103
        %v1623 = vunpack.c.l.b16 %v1104
        %v1624 = vunpack.c.l.b16 %v1105
        %v1625 = vunpack.c.l.b16 %v1106
        %v1626 = vunpack.c.l.b16 %v1107
        %v1627 = vunpack.c.l.b16 %v1108
        %v1628 = vunpack.c.l.b16 %v1109
        %v1629 = vunpack.c.l.b16 %v1110
        %v1630 = vunpack.c.l.b16 %v1111
        %v1631 = vunpack.c.l.b16 %v1112
        %v1632 = vunpack.c.l.b16 %v1113
        %v1633 = vunpack.c.l.b16 %v1114
        %v1634 = vunpack.c.l.b16 %v1115
        %v1635 = vunpack.c.l.b16 %v1116
        %v1636 = vunpack.c.l.b16 %v1117
        %v1637 = vunpack.c.l.b16 %v1118
        %v1638 = vunpack.c.l.b16 %v1119
        %v1639 = vunpack.c.l.b16 %v1120
        %v1640 = vunpack.c.l.b16 %v1121
        %v1641 = vunpack.c.l.b16 %v1122
        %v1642 = vunpack.c.l.b16 %v1123
        %v1643 = vunpack.c.l.b16 %v1124
        %v1644 = vunpack.c.l.b16 %v1125
        %v1645 = vunpack.c.l.b16 %v1126
        %v1646 = vunpack.c.l.b16 %v1127
        %v1647 = vunpack.c.l.b16 %v1128
        %v1648 = vunpack.c.l.b16 %v1129
        %v1649 = vunpack.c.l.b16 %v1130
        %v1650 = vunpack.c.l.b16 %v1131
        %v1651 = vunpack.c.l.b16 %v1132
        %v1652 = vunpack.c.l.b16 %v1133
        %v1653 = vunpack.c.l.b16 %v1134
        %v1654 = vunpack.c.l.b16 %v1135
        %v1655 = vunpack.c.l.b16 %v1136
        %v1656 = vunpack.c.l.b16 %v1137
        %v1657 = vunpack.c.l.b16 %v1138
        %v1658 = vunpack.c.l.b16 %v1139
        %v1659 = vunpack.c.l.b16 %v1140
        %v1660 = vunpack.c.l.b16 %v1141
        %v1661 = vunpack.c.l.b16 %v1142
        %v1662 = vunpack.c.l.b16 %v1143
        %v1663 = vunpack.c.l.b16 %v1144
        %v1664 = vunpack.c.l.b16 %v1145
        %v1665 = vunpack.c.l.b16 %v1146
        %v1666 = vunpack.c.l.b16 %v1147
        %v1667 = vunpack.c.l.b16 %v1148
        %v1668 = vunpack.c.l.b16 %v1149
        %v1669 = vunpack.c.l.b16 %v1150
        %v1670 = vunpack.c.l.b16 %v1151
        %v1671 = vunpack.c.l.b16 %v1152
        %v1672 = vunpack.c.l.b16 %v1153
        %v1673 = vunpack.c.l.b16 %v1154
        %v1674 = vunpack.c.l.b16 %v1155
        %v1675 = vunpack.c.l.b16 %v1156
        %v1676 = vunpack.c.l.b16 %v1157
        %v1677 = vunpack.c.l.b16 %v1158
        %v1678 = vunpack.c.l.b16 %v1159
        %v1679 = vunpack.c.l.b16 %v1160
        %v1680 = vunpack.c.l.b16 %v1161
        %v1681 = vunpack.c.l.b16 %v1162
        %v1682 = vunpack.c.l.b16 %v1163
        %v1683 = vunpack.c.l.b16 %v1164
        %v1684 = vunpack.c.l.b16 %v1165
        %v1685 = vunpack.c.l.b16 %v1166
        %v1686 = vunpack.c.l.b16 %v1167
        %v1687 = vunpack.c.l.b16 %v1168
        %v1688 = vunpack.c.l.b16 %v1169
        %v1689 = vunpack.c.l.b16 %v1170
        %v1690 = vunpack.c.l.b16 %v1171
        %v1691 = vunpack.c.l.b16 %v1172
        %v1692 = vpack.c.b16 %v1437, %v1436
        %v1693 = vpack.c.b16 %v1439, %v1438
        %v1694 = vpack.c.b16 %v1441, %v1440
        %v1695 = vpack.c.b16 %v1443, %v1442
        %v1696 = vpack.c.b16 %v1445, %v1444
        %v1697 = vpack.c.b16 %v1447, %v1446
        %v1698 = vpack.c.b16 %v1449, %v1448
        %v1699 = vpack.c.b16 %v1451, %v1450
        %v1700 = vpack.c.b16 %v1453, %v1452
        %v1701 = vpack.c.b16 %v1455, %v1454
        %v1702 = vpack.c.b16 %v1457, %v1456
        %v1703 = vpack.c.b16 %v1459, %v1458
        %v1704 = vpack.c.b16 %v1461, %v1460
        %v1705 = vpack.c.b16 %v1463, %v1462
        %v1706 = vpack.c.b16 %v1465, %v1464
        %v1707 = vpack.c.b16 %v1467, %v1466
        %v1708 = vpack.c.b16 %v1469, %v1468
        %v1709 = vpack.c.b16 %v1471, %v1470
        %v1710 = vpack.c.b16 %v1473, %v1472
        %v1711 = vpack.c.b16 %v1475, %v1474
        %v1712 = vpack.c.b16 %v1477, %v1476
        %v1713 = vpack.c.b16 %v1479, %v1478
        %v1714 = vpack.c.b16 %v1481, %v1480
        %v1715 = vpack.c.b16 %v1483, %v1482
        %v1716 = vpack.c.b16 %v1485, %v1484
        %v1717 = vpack.c.b16 %v1487, %v1486
        %v1718 = vpack.c.b16 %v1489, %v1488
        %v1719 = vpack.c.b16 %v1491, %v1490
        %v1720 = vpack.c.b16 %v1493, %v1492
        %v1721 = vpack.c.b16 %v1495, %v1494
        %v1722 = vpack.c.b16 %v1497, %v1496
        %v1723 = vpack.c.b16 %v1499, %v1498
        %v1724 = vpack.c.b16 %v1501, %v1500
        %v1725 = vpack.c.b16 %v1503, %v1502
        %v1726 = vpack.c.b16 %v1505, %v1504
        %v1727 = vpack.c.b16 %v1507, %v1506
        %v1728 = vpack.c.b16 %v1509, %v1508
        %v1729 = vpack.c.b16 %v1511, %v1510
        %v1730 = vpack.c.b16 %v1513, %v1512
        %v1731 = vpack.c.b16 %v1515, %v1514
        %v1732 = vpack.c.b16 %v1517, %v1516
        %v1733 = vpack.c.b16 %v1519, %v1518
        %v1734 = vpack.c.b16 %v1521, %v1520
        %v1735 = vpack.c.b16 %v1523, %v1522
        %v1736 = vpack.c.b16 %v1525, %v1524
        %v1737 = vpack.c.b16 %v1527, %v1526
        %v1738 = vpack.c.b16 %v1529, %v1528
        %v1739 = vpack.c.b16 %v1531, %v1530
        %v1740 = vpack.c.b16 %v1533, %v1532
        %v1741 = vpack.c.b16 %v1535, %v1534
        %v1742 = vpack.c.b16 %v1537, %v1536
        %v1743 = vpack.c.b16 %v1539, %v1538
        %v1744 = vpack.c.b16 %v1541, %v1540
        %v1745 = vpack.c.b16 %v1543, %v1542
        %v1746 = vpack.c.b16 %v1545, %v1544
        %v1747 = vpack.c.b16 %v1547, %v1546
        %v1748 = vpack.c.b16 %v1549, %v1548
        %v1749 = vpack.c.b16 %v1551, %v1550
        %v1750 = vpack.c.b16 %v1553, %v1552
        %v1751 = vpack.c.b16 %v1555, %v1554
        %v1752 = vpack.c.b16 %v1557, %v1556
        %v1753 = vpack.c.b16 %v1559, %v1558
        %v1754 = vpack.c.b16 %v1561, %v1560
        %v1755 = vpack.c.b16 %v1563, %v1562
        %v1756 = vpack.c.b16 %v1565, %v1564
        %v1757 = vpack.c.b16 %v1567, %v1566
        %v1758 = vpack.c.b16 %v1569, %v1568
        %v1759 = vpack.c.b16 %v1571, %v1570
        %v1760 = vpack.c.b16 %v1573, %v1572
        %v1761 = vpack.c.b16 %v1575, %v1574
        %v1762 = vpack.c.b16 %v1577, %v1576
        %v1763 = vpack.c.b16 %v1579, %v1578
        %v1764 = vpack.c.b16 %v1581, %v1580
        %v1765 = vpack.c.b16 %v1583, %v1582
        %v1766 = vpack.c.b16 %v1585, %v1584
        %v1767 = vpack.c.b16 %v1587, %v1586
        %v1768 = vpack.c.b16 %v1589, %v1588
        %v1769 = vpack.c.b16 %v1591, %v1590
        %v1770 = vpack.c.b16 %v1593, %v1592
        %v1771 = vpack.c.b16 %v1595, %v1594
        %v1772 = vpack.c.b16 %v1597, %v1596
        %v1773 = vpack.c.b16 %v1599, %v1598
        %v1774 = vpack.c.b16 %v1601, %v1600
        %v1775 = vpack.c.b16 %v1603, %v1602
        %v1776 = vpack.c.b16 %v1605, %v1604
        %v1777 = vpack.c.b16 %v1607, %v1606
        %v1778 = vpack.c.b16 %v1609, %v1608
        %v1779 = vpack.c.b16 %v1611, %v1610
        %v1780 = vpack.c.b16 %v1613, %v1612
        %v1781 = vpack.c.b16 %v1615, %v1614
        %v1782 = vpack.c.b16 %v1617, %v1616
        %v1783 = vpack.c.b16 %v1619, %v1618
        %v1784 = vpack.c.b16 %v1621, %v1620
        %v1785 = vpack.c.b16 %v1623, %v1622
        %v1786 = vpack.c.b16 %v1625, %v1624
        %v1787 = vpack.c.b16 %v1627, %v1626
        %v1788 = vpack.c.b16 %v1629, %v1628
        %v1789 = vpack.c.b16 %v1631, %v1630
        %v1790 = vpack.c.b16 %v1633, %v1632
        %v1791 = vpack.c.b16 %v1635, %v1634
        %v1792 = vpack.c.b16 %v1637, %v1636
        %v1793 = vpack.c.b16 %v1639, %v1638
        %v1794 = vpack.c.b16 %v1641, %v1640
        %v1795 = vpack.c.b16 %v1643, %v1642
        %v1796 = vpack.c.b16 %v1645, %v1644
        %v1797 = vpack.c.b16 %v1647, %v1646
        %v1798 = vpack.c.b16 %v1649, %v1648
        %v1799 = vpack.c.b16 %v1651, %v1650
        %v1800 = vpack.c.b16 %v1653, %v1652
        %v1801 = vpack.c.b16 %v1655, %v1654
        %v1802 = vpack.c.b16 %v1657, %v1656
        %v1803 = vpack.c.b16 %v1659, %v1658
        %v1804 = vpack.c.b16 %v1661, %v1660
        %v1805 = vpack.c.b16 %v1663, %v1662
        %v1806 = vpack.c.b16 %v1665, %v1664
        %v1807 = vpack.c.b16 %v1667, %v1666
        %v1808 = vpack.c.b16 %v1669, %v1668
        %v1809 = vpack.c.b16 %v1671, %v1670
        %v1810 = vpack.c.b16 %v1673, %v1672
        %v1811 = vpack.c.b16 %v1675, %v1674
        %v1812 = vpack.c.b16 %v1677, %v1676
        %v1813 = vpack.c.b16 %v1679, %v1678
        %v1814 = vpack.c.b16 %v1681, %v1680
        %v1815 = vpack.c.b16 %v1683, %v1682
        %v1816 = vpack.c.b16 %v1685, %v1684
        %v1817 = vpack.c.b16 %v1687, %v1686
        %v1818 = vpack.c.b16 %v1689, %v1688
        %v1819 = vpack.c.b16 %v1691, %v1690
        %1948 = vmatprep.subr.bf16.mxu0 0
        %1949 = vmatpush1.bf16.msra.mxu0 %v1692
        %1950 = vmatprep.subr.bf16.mxu0 0
        %1951 = vmatpush1.bf16.msra.mxu0 %v1693
        %1952 = vmatprep.subr.bf16.mxu0 0
        %1953 = vmatpush1.bf16.msra.mxu0 %v1694
        %1954 = vmatprep.subr.bf16.mxu0 0
        %1955 = vmatpush1.bf16.msra.mxu0 %v1695
        %1956 = vmatprep.subr.bf16.mxu0 0
        %1957 = vmatpush1.bf16.msra.mxu0 %v1696
        %1958 = vmatprep.subr.bf16.mxu0 0
        %1959 = vmatpush1.bf16.msra.mxu0 %v1697
        %1960 = vmatprep.subr.bf16.mxu0 0
        %1961 = vmatpush1.bf16.msra.mxu0 %v1698
        %1962 = vmatprep.subr.bf16.mxu0 0
        %1963 = vmatpush1.bf16.msra.mxu0 %v1699
        %1964 = vmatprep.subr.bf16.mxu0 0
        %1965 = vmatpush1.bf16.msra.mxu0 %v1700
        %1966 = vmatprep.subr.bf16.mxu0 0
        %1967 = vmatpush1.bf16.msra.mxu0 %v1701
        %1968 = vmatprep.subr.bf16.mxu0 0
        %1969 = vmatpush1.bf16.msra.mxu0 %v1702
        %1970 = vmatprep.subr.bf16.mxu0 0
        %1971 = vmatpush1.bf16.msra.mxu0 %v1703
        %1972 = vmatprep.subr.bf16.mxu0 0
        %1973 = vmatpush1.bf16.msra.mxu0 %v1704
        %1974 = vmatprep.subr.bf16.mxu0 0
        %1975 = vmatpush1.bf16.msra.mxu0 %v1705
        %1976 = vmatprep.subr.bf16.mxu0 0
        %1977 = vmatpush1.bf16.msra.mxu0 %v1706
        %1978 = vmatprep.subr.bf16.mxu0 0
        %1979 = vmatpush1.bf16.msra.mxu0 %v1707
        %1980 = vmatprep.mubr.bf16.mxu0 %v902
        %1981 = vmatmul.mubr.bf16.gmra.mrb[0].mxu0 %v901
        %v1982 = vpop.f32.mrb[0].mxu0
        %v1983 = vadd.f32 %v1178, %v1982
        %v1984 = vpop.f32.mrb[0].mxu0
        %v1985 = vpop.f32.mrb[0].mxu0
        %v1986 = vpop.f32.mrb[0].mxu0
        %1987 = vdwg.mxu0
        %1988 = vmatprep.subr.bf16.mxu0 0
        %1989 = vmatpush1.bf16.msra.mxu0 %v1708
        %1990 = vmatprep.subr.bf16.mxu0 0
        %1991 = vmatpush1.bf16.msra.mxu0 %v1709
        %1992 = vmatprep.subr.bf16.mxu0 0
        %1993 = vmatpush1.bf16.msra.mxu0 %v1710
        %1994 = vmatprep.subr.bf16.mxu0 0
        %1995 = vmatpush1.bf16.msra.mxu0 %v1711
        %1996 = vmatprep.subr.bf16.mxu0 0
        %1997 = vmatpush1.bf16.msra.mxu0 %v1712
        %1998 = vmatprep.subr.bf16.mxu0 0
        %1999 = vmatpush1.bf16.msra.mxu0 %v1713
        %2000 = vmatprep.subr.bf16.mxu0 0
        %2001 = vmatpush1.bf16.msra.mxu0 %v1714
        %2002 = vmatprep.subr.bf16.mxu0 0
        %2003 = vmatpush1.bf16.msra.mxu0 %v1715
        %2004 = vmatprep.subr.bf16.mxu0 0
        %2005 = vmatpush1.bf16.msra.mxu0 %v1716
        %2006 = vmatprep.subr.bf16.mxu0 0
        %2007 = vmatpush1.bf16.msra.mxu0 %v1717
        %2008 = vmatprep.subr.bf16.mxu0 0
        %2009 = vmatpush1.bf16.msra.mxu0 %v1718
        %2010 = vmatprep.subr.bf16.mxu0 0
        %2011 = vmatpush1.bf16.msra.mxu0 %v1719
        %2012 = vmatprep.subr.bf16.mxu0 0
        %2013 = vmatpush1.bf16.msra.mxu0 %v1720
        %2014 = vmatprep.subr.bf16.mxu0 0
        %2015 = vmatpush1.bf16.msra.mxu0 %v1721
        %2016 = vmatprep.subr.bf16.mxu0 0
        %2017 = vmatpush1.bf16.msra.mxu0 %v1722
        %2018 = vmatprep.subr.bf16.mxu0 0
        %2019 = vmatpush1.bf16.msra.mxu0 %v1723
        %2020 = vmatprep.mubr.bf16.mxu0 %v904
        %2021 = vmatmul.mubr.bf16.gmra.mrb[0].mxu0 %v903
        %v2022 = vpop.f32.mrb[0].mxu0
        %v2023 = vadd.f32 %v1983, %v2022
        %v2024 = vpop.f32.mrb[0].mxu0
        %v2025 = vpop.f32.mrb[0].mxu0
        %v2026 = vpop.f32.mrb[0].mxu0
        %2027 = vdwg.mxu0
        %2028 = vmatprep.subr.bf16.mxu0 0
        %2029 = vmatpush1.bf16.msra.mxu0 %v1724
        %2030 = vmatprep.subr.bf16.mxu0 0
        %2031 = vmatpush1.bf16.msra.mxu0 %v1725
        %2032 = vmatprep.subr.bf16.mxu0 0
        %2033 = vmatpush1.bf16.msra.mxu0 %v1726
        %2034 = vmatprep.subr.bf16.mxu0 0
        %2035 = vmatpush1.bf16.msra.mxu0 %v1727
        %2036 = vmatprep.subr.bf16.mxu0 0
        %2037 = vmatpush1.bf16.msra.mxu0 %v1728
        %2038 = vmatprep.subr.bf16.mxu0 0
        %2039 = vmatpush1.bf16.msra.mxu0 %v1729
        %2040 = vmatprep.subr.bf16.mxu0 0
        %2041 = vmatpush1.bf16.msra.mxu0 %v1730
        %2042 = vmatprep.subr.bf16.mxu0 0
        %2043 = vmatpush1.bf16.msra.mxu0 %v1731
        %2044 = vmatprep.subr.bf16.mxu0 0
        %2045 = vmatpush1.bf16.msra.mxu0 %v1732
        %2046 = vmatprep.subr.bf16.mxu0 0
        %2047 = vmatpush1.bf16.msra.mxu0 %v1733
        %2048 = vmatprep.subr.bf16.mxu0 0
        %2049 = vmatpush1.bf16.msra.mxu0 %v1734
        %2050 = vmatprep.subr.bf16.mxu0 0
        %2051 = vmatpush1.bf16.msra.mxu0 %v1735
        %2052 = vmatprep.subr.bf16.mxu0 0
        %2053 = vmatpush1.bf16.msra.mxu0 %v1736
        %2054 = vmatprep.subr.bf16.mxu0 0
        %2055 = vmatpush1.bf16.msra.mxu0 %v1737
        %2056 = vmatprep.subr.bf16.mxu0 0
        %2057 = vmatpush1.bf16.msra.mxu0 %v1738
        %2058 = vmatprep.subr.bf16.mxu0 0
        %2059 = vmatpush1.bf16.msra.mxu0 %v1739
        %2060 = vmatprep.mubr.bf16.mxu0 %v906
        %2061 = vmatmul.mubr.bf16.gmra.mrb[0].mxu0 %v905
        %v2062 = vpop.f32.mrb[0].mxu0
        %v2063 = vadd.f32 %v2023, %v2062
        %v2064 = vpop.f32.mrb[0].mxu0
        %v2065 = vpop.f32.mrb[0].mxu0
        %v2066 = vpop.f32.mrb[0].mxu0
        %2067 = vdwg.mxu0
        %2068 = vmatprep.subr.bf16.mxu0 0
        %2069 = vmatpush1.bf16.msra.mxu0 %v1740
        %2070 = vmatprep.subr.bf16.mxu0 0
        %2071 = vmatpush1.bf16.msra.mxu0 %v1741
        %2072 = vmatprep.subr.bf16.mxu0 0
        %2073 = vmatpush1.bf16.msra.mxu0 %v1742
        %2074 = vmatprep.subr.bf16.mxu0 0
        %2075 = vmatpush1.bf16.msra.mxu0 %v1743
        %2076 = vmatprep.subr.bf16.mxu0 0
        %2077 = vmatpush1.bf16.msra.mxu0 %v1744
        %2078 = vmatprep.subr.bf16.mxu0 0
        %2079 = vmatpush1.bf16.msra.mxu0 %v1745
        %2080 = vmatprep.subr.bf16.mxu0 0
        %2081 = vmatpush1.bf16.msra.mxu0 %v1746
        %2082 = vmatprep.subr.bf16.mxu0 0
        %2083 = vmatpush1.bf16.msra.mxu0 %v1747
        %2084 = vmatprep.subr.bf16.mxu0 0
        %2085 = vmatpush1.bf16.msra.mxu0 %v1748
        %2086 = vmatprep.subr.bf16.mxu0 0
        %2087 = vmatpush1.bf16.msra.mxu0 %v1749
        %2088 = vmatprep.subr.bf16.mxu0 0
        %2089 = vmatpush1.bf16.msra.mxu0 %v1750
        %2090 = vmatprep.subr.bf16.mxu0 0
        %2091 = vmatpush1.bf16.msra.mxu0 %v1751
        %2092 = vmatprep.subr.bf16.mxu0 0
        %2093 = vmatpush1.bf16.msra.mxu0 %v1752
        %2094 = vmatprep.subr.bf16.mxu0 0
        %2095 = vmatpush1.bf16.msra.mxu0 %v1753
        %2096 = vmatprep.subr.bf16.mxu0 0
        %2097 = vmatpush1.bf16.msra.mxu0 %v1754
        %2098 = vmatprep.subr.bf16.mxu0 0
        %2099 = vmatpush1.bf16.msra.mxu0 %v1755
        %2100 = vmatprep.mubr.bf16.mxu0 %v908
        %2101 = vmatmul.mubr.bf16.gmra.mrb[0].mxu0 %v907
        %v2102 = vpop.f32.mrb[0].mxu0
        %v2103 = vadd.f32 %v2063, %v2102
        %v2104 = vpop.f32.mrb[0].mxu0
        %v2105 = vpop.f32.mrb[0].mxu0
        %v2106 = vpop.f32.mrb[0].mxu0
        %2107 = vdwg.mxu0
        %2108 = vmatprep.subr.bf16.mxu0 0
        %2109 = vmatpush1.bf16.msra.mxu0 %v1756
        %2110 = vmatprep.subr.bf16.mxu0 0
        %2111 = vmatpush1.bf16.msra.mxu0 %v1757
        %2112 = vmatprep.subr.bf16.mxu0 0
        %2113 = vmatpush1.bf16.msra.mxu0 %v1758
        %2114 = vmatprep.subr.bf16.mxu0 0
        %2115 = vmatpush1.bf16.msra.mxu0 %v1759
        %2116 = vmatprep.subr.bf16.mxu0 0
        %2117 = vmatpush1.bf16.msra.mxu0 %v1760
        %2118 = vmatprep.subr.bf16.mxu0 0
        %2119 = vmatpush1.bf16.msra.mxu0 %v1761
        %2120 = vmatprep.subr.bf16.mxu0 0
        %2121 = vmatpush1.bf16.msra.mxu0 %v1762
        %2122 = vmatprep.subr.bf16.mxu0 0
        %2123 = vmatpush1.bf16.msra.mxu0 %v1763
        %2124 = vmatprep.subr.bf16.mxu0 0
        %2125 = vmatpush1.bf16.msra.mxu0 %v1764
        %2126 = vmatprep.subr.bf16.mxu0 0
        %2127 = vmatpush1.bf16.msra.mxu0 %v1765
        %2128 = vmatprep.subr.bf16.mxu0 0
        %2129 = vmatpush1.bf16.msra.mxu0 %v1766
        %2130 = vmatprep.subr.bf16.mxu0 0
        %2131 = vmatpush1.bf16.msra.mxu0 %v1767
        %2132 = vmatprep.subr.bf16.mxu0 0
        %2133 = vmatpush1.bf16.msra.mxu0 %v1768
        %2134 = vmatprep.subr.bf16.mxu0 0
        %2135 = vmatpush1.bf16.msra.mxu0 %v1769
        %2136 = vmatprep.subr.bf16.mxu0 0
        %2137 = vmatpush1.bf16.msra.mxu0 %v1770
        %2138 = vmatprep.subr.bf16.mxu0 0
        %2139 = vmatpush1.bf16.msra.mxu0 %v1771
        %2140 = vmatprep.mubr.bf16.mxu0 %v910
        %2141 = vmatmul.mubr.bf16.gmra.mrb[0].mxu0 %v909
        %v2142 = vpop.f32.mrb[0].mxu0
        %v2143 = vadd.f32 %v2103, %v2142
        %v2144 = vpop.f32.mrb[0].mxu0
        %v2145 = vpop.f32.mrb[0].mxu0
        %v2146 = vpop.f32.mrb[0].mxu0
        %2147 = vdwg.mxu0
        %2148 = vmatprep.subr.bf16.mxu0 0
        %2149 = vmatpush1.bf16.msra.mxu0 %v1772
        %2150 = vmatprep.subr.bf16.mxu0 0
        %2151 = vmatpush1.bf16.msra.mxu0 %v1773
        %2152 = vmatprep.subr.bf16.mxu0 0
        %2153 = vmatpush1.bf16.msra.mxu0 %v1774
        %2154 = vmatprep.subr.bf16.mxu0 0
        %2155 = vmatpush1.bf16.msra.mxu0 %v1775
        %2156 = vmatprep.subr.bf16.mxu0 0
        %2157 = vmatpush1.bf16.msra.mxu0 %v1776
        %2158 = vmatprep.subr.bf16.mxu0 0
        %2159 = vmatpush1.bf16.msra.mxu0 %v1777
        %2160 = vmatprep.subr.bf16.mxu0 0
        %2161 = vmatpush1.bf16.msra.mxu0 %v1778
        %2162 = vmatprep.subr.bf16.mxu0 0
        %2163 = vmatpush1.bf16.msra.mxu0 %v1779
        %2164 = vmatprep.subr.bf16.mxu0 0
        %2165 = vmatpush1.bf16.msra.mxu0 %v1780
        %2166 = vmatprep.subr.bf16.mxu0 0
        %2167 = vmatpush1.bf16.msra.mxu0 %v1781
        %2168 = vmatprep.subr.bf16.mxu0 0
        %2169 = vmatpush1.bf16.msra.mxu0 %v1782
        %2170 = vmatprep.subr.bf16.mxu0 0
        %2171 = vmatpush1.bf16.msra.mxu0 %v1783
        %2172 = vmatprep.subr.bf16.mxu0 0
        %2173 = vmatpush1.bf16.msra.mxu0 %v1784
        %2174 = vmatprep.subr.bf16.mxu0 0
        %2175 = vmatpush1.bf16.msra.mxu0 %v1785
        %2176 = vmatprep.subr.bf16.mxu0 0
        %2177 = vmatpush1.bf16.msra.mxu0 %v1786
        %2178 = vmatprep.subr.bf16.mxu0 0
        %2179 = vmatpush1.bf16.msra.mxu0 %v1787
        %2180 = vmatprep.mubr.bf16.mxu0 %v912
        %2181 = vmatmul.mubr.bf16.gmra.mrb[0].mxu0 %v911
        %v2182 = vpop.f32.mrb[0].mxu0
        %v2183 = vadd.f32 %v2143, %v2182
        %v2184 = vpop.f32.mrb[0].mxu0
        %v2185 = vpop.f32.mrb[0].mxu0
        %v2186 = vpop.f32.mrb[0].mxu0
        %2187 = vdwg.mxu0
        %2188 = vmatprep.subr.bf16.mxu0 0
        %2189 = vmatpush1.bf16.msra.mxu0 %v1788
        %2190 = vmatprep.subr.bf16.mxu0 0
        %2191 = vmatpush1.bf16.msra.mxu0 %v1789
        %2192 = vmatprep.subr.bf16.mxu0 0
        %2193 = vmatpush1.bf16.msra.mxu0 %v1790
        %2194 = vmatprep.subr.bf16.mxu0 0
        %2195 = vmatpush1.bf16.msra.mxu0 %v1791
        %2196 = vmatprep.subr.bf16.mxu0 0
        %2197 = vmatpush1.bf16.msra.mxu0 %v1792
        %2198 = vmatprep.subr.bf16.mxu0 0
        %2199 = vmatpush1.bf16.msra.mxu0 %v1793
        %2200 = vmatprep.subr.bf16.mxu0 0
        %2201 = vmatpush1.bf16.msra.mxu0 %v1794
        %2202 = vmatprep.subr.bf16.mxu0 0
        %2203 = vmatpush1.bf16.msra.mxu0 %v1795
        %2204 = vmatprep.subr.bf16.mxu0 0
        %2205 = vmatpush1.bf16.msra.mxu0 %v1796
        %2206 = vmatprep.subr.bf16.mxu0 0
        %2207 = vmatpush1.bf16.msra.mxu0 %v1797
        %2208 = vmatprep.subr.bf16.mxu0 0
        %2209 = vmatpush1.bf16.msra.mxu0 %v1798
        %2210 = vmatprep.subr.bf16.mxu0 0
        %2211 = vmatpush1.bf16.msra.mxu0 %v1799
        %2212 = vmatprep.subr.bf16.mxu0 0
        %2213 = vmatpush1.bf16.msra.mxu0 %v1800
        %2214 = vmatprep.subr.bf16.mxu0 0
        %2215 = vmatpush1.bf16.msra.mxu0 %v1801
        %2216 = vmatprep.subr.bf16.mxu0 0
        %2217 = vmatpush1.bf16.msra.mxu0 %v1802
        %2218 = vmatprep.subr.bf16.mxu0 0
        %2219 = vmatpush1.bf16.msra.mxu0 %v1803
        %2220 = vmatprep.mubr.bf16.mxu0 %v914
        %2221 = vmatmul.mubr.bf16.gmra.mrb[0].mxu0 %v913
        %v2222 = vpop.f32.mrb[0].mxu0
        %v2223 = vadd.f32 %v2183, %v2222
        %v2224 = vpop.f32.mrb[0].mxu0
        %v2225 = vpop.f32.mrb[0].mxu0
        %v2226 = vpop.f32.mrb[0].mxu0
        %2227 = vdwg.mxu0
        %2228 = vmatprep.subr.bf16.mxu0 0
        %2229 = vmatpush1.bf16.msra.mxu0 %v1804
        %2230 = vmatprep.subr.bf16.mxu0 0
        %2231 = vmatpush1.bf16.msra.mxu0 %v1805
        %2232 = vmatprep.subr.bf16.mxu0 0
        %2233 = vmatpush1.bf16.msra.mxu0 %v1806
        %2234 = vmatprep.subr.bf16.mxu0 0
        %2235 = vmatpush1.bf16.msra.mxu0 %v1807
        %2236 = vmatprep.subr.bf16.mxu0 0
        %2237 = vmatpush1.bf16.msra.mxu0 %v1808
        %2238 = vmatprep.subr.bf16.mxu0 0
        %2239 = vmatpush1.bf16.msra.mxu0 %v1809
        %2240 = vmatprep.subr.bf16.mxu0 0
        %2241 = vmatpush1.bf16.msra.mxu0 %v1810
        %2242 = vmatprep.subr.bf16.mxu0 0
        %2243 = vmatpush1.bf16.msra.mxu0 %v1811
        %2244 = vmatprep.subr.bf16.mxu0 0
        %2245 = vmatpush1.bf16.msra.mxu0 %v1812
        %2246 = vmatprep.subr.bf16.mxu0 0
        %2247 = vmatpush1.bf16.msra.mxu0 %v1813
        %2248 = vmatprep.subr.bf16.mxu0 0
        %2249 = vmatpush1.bf16.msra.mxu0 %v1814
        %2250 = vmatprep.subr.bf16.mxu0 0
        %2251 = vmatpush1.bf16.msra.mxu0 %v1815
        %2252 = vmatprep.subr.bf16.mxu0 0
        %2253 = vmatpush1.bf16.msra.mxu0 %v1816
        %2254 = vmatprep.subr.bf16.mxu0 0
        %2255 = vmatpush1.bf16.msra.mxu0 %v1817
        %2256 = vmatprep.subr.bf16.mxu0 0
        %2257 = vmatpush1.bf16.msra.mxu0 %v1818
        %2258 = vmatprep.subr.bf16.mxu0 0
        %2259 = vmatpush1.bf16.msra.mxu0 %v1819
        %2260 = vmatprep.mubr.bf16.mxu0 %v916
        %2261 = vmatmul.mubr.bf16.gmra.mrb[0].mxu0 %v915
        %v2262 = vpop.f32.mrb[0].mxu0
        %v2263 = vadd.f32 %v2223, %v2262
        %v2264 = vpop.f32.mrb[0].mxu0
        %v2265 = vpop.f32.mrb[0].mxu0
        %v2266 = vpop.f32.mrb[0].mxu0
        %2267 = vdwg.mxu0
        %v2268 = vadd.f32 %v2263, %v275
        %v2269 = vsel %vm553, %v2268, 0.0
        %2270 = vadd.xlane.f32.xlu0 %v2269
        %v2271 = vpop.xlane.xlu0 %2270
        %v2272 = vrcp.pop 32.0
        %v2273 = vmul.f32 %v2271, %v2272
        %v2274 = vsub.f32 %v2268, %v2273
        %v2275 = vmul.f32 %v2274, %v2274
        %v2276 = vsel %vm553, %v2275, 0.0
        %2277 = vadd.xlane.f32.xlu0 %v2276
        %v2278 = vpop.xlane.xlu0 %2277
        %v2279 = vmul.f32 %v2278, %v2272
        %v2280 = vadd.f32 %v2279, 1e-05
        %v2281 = vrsqrt.pop %v2280
        %v2282 = vmul.f32 %v2274, %v2281
        %v2283 = vld [vmem:[%s5] sm:$0x1]
        %v2285 = vlaneseq
        %v2286 = vshrl.u32 %v2285, 7
        %v2287 = vsub.s32 0, %v2286
        %v2288 = vrot.slane %v2283, %v2287
        %v2290 = vmul.f32 %v2282, %v2288
        %v2291 = vld [vmem:[%s6] sm:$0x1]
        %v2293 = vlaneseq
        %v2294 = vshrl.u32 %v2293, 7
        %v2295 = vsub.s32 0, %v2294
        %v2296 = vrot.slane %v2291, %v2295
        %v2298 = vadd.f32 %v2290, %v2296
        %2299 = vst.msk [vmem:[%s269] sm:$0xff] %vm553, %v2298
        %s2300 = sand.u32 %s181, 1
        %s2301 = scalar_lea.sflag [#allocation3], %s2300
        %s2302 = sand.u32 %s181, 1
        %s2303 = smul.addr %s2302, 8
        %s2304 = scalar_lea.vmem [#allocation2], %s2303
        // Predicated region
        $region49: #{decoder_forward.5} parent=47 // pred_check
          %p2305 = pneg %p191
        $region50: #{decoder_forward.5} parent=47 // pred_check_branch
          %2307 = sbr.rel (%p2305) target = $region52
        $region51: #{decoder_forward.5} parent=47 // pred_region
          %s2309 = ssub.s32 128, 128
          %2310 = vsyncadd %s2301, %s2309
          %s2311 = smul.addr %s21, 128
          %s2312 = scalar_lea.hbm %s7, %s2311
          %s2314 = sshll.u32 %s2304, 4
          %s2315 = int_to_ptr.vmem [resolvable:$true] %s2314
          %2317 = dma.vmem_to_hbm [thread:$0]  %s2315, 128, %s2312, %s2301
        $region52: #{decoder_forward.5} parent=47 // pred_fallthru
          _
      $region48: #{decoder_forward.5} parent=5 // pred_fallthru
        _
      %p2318 = scmp.le.s32.totalorder 2, %s16
      // Predicated region
      $region53: #{decoder_forward.5} parent=5 // pred_check
        %p2319 = pneg %p2318
      $region54: #{decoder_forward.5} parent=5 // pred_check_branch
        %2321 = sbr.rel (%p2319) target = $region56
      $region55: #{decoder_forward.5} parent=5 // pred_region
        %s2322 = ssub.s32 %s16, 2
        // Predicated region
        $region57: #{decoder_forward.5} parent=55 // pred_check
          %p2323 = pneg %p197
        $region58: #{decoder_forward.5} parent=55 // pred_check_branch
          %2325 = sbr.rel (%p2323) target = $region60
        $region59: #{decoder_forward.5} parent=55 // pred_region
          %s2326 = sand.u32 %s182, 1
          %s2327 = scalar_lea.sflag [#allocation3], %s2326
          %s2328 = sand.u32 %s182, 1
          %s2329 = smul.addr %s2328, 8
          %s2330 = scalar_lea.vmem [#allocation2], %s2329
          %2331 = dma.done %s2327, 128
        $region60: #{decoder_forward.5} parent=55 // pred_fallthru
          _
      $region56: #{decoder_forward.5} parent=5 // pred_fallthru
        _
    $region6: #{decoder_forward.5} parent=1 // loop_footer
      %s20 = sadd.s32 1, %s16
    $region7: #{decoder_forward.5} parent=1 // loop_footer_branch
      %15 = sbr.rel target = $region3
    $region8: #{decoder_forward.5} parent=1 // loop_exit
      _
    %2332 = vsyncpa [#allocation3], 1
    %s2333 = scalar_lea.sflag [#allocation3], 1
    %2334 = vsyncpa %s2333, 1

</llo_original>
